<compile_context>
chip_gen: v7x
topology: tpu7x:2x2x1
jax: 0.10.0
libtpu: 0.0.40
codegen_flags: <defaults>
</compile_context>

<pallas_src>
import math

import jax
import jax.numpy as jnp
from jax.experimental import pallas as pl
from jax.experimental.pallas import tpu as pltpu

# ---------------- configuration (small shapes consistent with the module) ---
B = 2          # batch
S = 8          # sequence length
EMBED = 32     # embed_size
NHEAD = 4
DH = EMBED // NHEAD
NHID = 64
NLAYERS = 2
NUM_POI = 24
NUM_CAT = 8
DEC_OUT = NUM_POI + 1 + NUM_CAT   # fused decoder output width (= 33)
MAX_LEN = 500
EPS = 1e-5

# packed-slab layout constants
W_ATTN_Q, W_ATTN_K, W_ATTN_V, W_ATTN_O = 0, 1, 2, 3
BQ, BK, BV, BO, LN1G, LN1B, LN2G, LN2B, B1, B2 = range(10)
BIAS_ROWS_PER_LAYER = 10
MLP_ROWS_PER_LAYER = EMBED + NHID      # w1^T rows + w2^T rows = 96

VMEM = pltpu.MemorySpace.VMEM


def _vspec():
    # whole array resident in VMEM (no grid -> full-array block)
    return pl.BlockSpec(memory_space=VMEM)


# ---------------------------------------------------------------------------
# Single fused kernel: scale + PE + NLAYERS encoder layers + fused decoders
# ---------------------------------------------------------------------------
def fused_forward_kernel(src_ref, pe_ref, mask_ref,
                         w_attn_ref, w_mlp_ref, bias_ref,
                         out_ref):
    # ---- src * sqrt(E) + positional encoding (pe slice is (B,1,E), PyTorch quirk)
    x = src_ref[...] * math.sqrt(EMBED) + pe_ref[...]         # (B, S, E)
    x2 = x.reshape(B * S, EMBED)                               # flatten for 2-D matmuls
    # hoisted: single broadcast of the additive causal mask (reused 8x below)
    mask_b = jnp.broadcast_to(mask_ref[...], (B, S, S))

    def bvec(row, width=EMBED):
        # static (1, width) view into the packed bias/LN slab
        return bias_ref[row:row + 1, 0:width]

    def layernorm(h, g, b):
        mu = jnp.mean(h, axis=-1, keepdims=True)
        var = jnp.mean((h - mu) ** 2, axis=-1, keepdims=True)
        return (h - mu) * jax.lax.rsqrt(var + EPS) * g + b

    for l in range(NLAYERS):                                   # static layer loop
        rb = l * BIAS_ROWS_PER_LAYER
        mb = l * MLP_ROWS_PER_LAYER

        # ---- full-width Q/K/V projections (1/sqrt(Dh) pre-folded into wq/bq) ----
        q = jnp.dot(x2, w_attn_ref[l, W_ATTN_Q],
                    preferred_element_type=jnp.float32) + bvec(rb + BQ)    # (B*S, E)
        k = jnp.dot(x2, w_attn_ref[l, W_ATTN_K],
                    preferred_element_type=jnp.float32) + bvec(rb + BK)
        v = jnp.dot(x2, w_attn_ref[l, W_ATTN_V],
                    preferred_element_type=jnp.float32) + bvec(rb + BV)

        # ---- per-head attention (single-batch-dim einsums, static head loop) ----
        ctx_heads = []
        for h in range(NHEAD):
            lo, hi = h * DH, (h + 1) * DH
            qh = q[:, lo:hi].reshape(B, S, DH)
            kh = k[:, lo:hi].reshape(B, S, DH)
            vh = v[:, lo:hi].reshape(B, S, DH)

            scores = jnp.einsum('bqd,bkd->bqk', qh, kh,
                                preferred_element_type=jnp.float32) + mask_b
            m = jnp.max(scores, axis=-1, keepdims=True)
            p = jnp.exp(scores - m)
            attn = p * pl.reciprocal(jnp.sum(p, axis=-1, keepdims=True), approx=True)
            ctx_h = jnp.einsum('bqk,bkd->bqd', attn, vh,
                               preferred_element_type=jnp.float32)          # (B, S, Dh)
            ctx_heads.append(ctx_h.reshape(B * S, DH))

        # assemble (B*S, H*Dh) context, then a single full-width output projection
        ctx = jnp.concatenate(ctx_heads, axis=-1)                           # (B*S, E)
        attn_out = jnp.dot(ctx, w_attn_ref[l, W_ATTN_O],
                           preferred_element_type=jnp.float32) + bvec(rb + BO)

        # ---- residual + LayerNorm 1 (post-norm) ----
        h1 = layernorm(x2 + attn_out, bvec(rb + LN1G), bvec(rb + LN1B))

        # ---- feed-forward: relu(h1 @ W1 + b1) @ W2 + b2 (static slab views) ----
        w1 = w_mlp_ref[mb:mb + EMBED, :]                                    # (E, NHID)
        w2 = w_mlp_ref[mb + EMBED:mb + EMBED + NHID, 0:EMBED]               # (NHID, E)
        f = jnp.maximum(jnp.dot(h1, w1, preferred_element_type=jnp.float32)
                        + bvec(rb + B1, NHID), 0.0)
        f = jnp.dot(f, w2, preferred_element_type=jnp.float32) + bvec(rb + B2)

        # ---- residual + LayerNorm 2 ----
        x2 = layernorm(h1 + f, bvec(rb + LN2G), bvec(rb + LN2B))

    # ---- fused decoder heads: one matmul, one flat lane-dense store ----
    wdec = w_mlp_ref[NLAYERS * MLP_ROWS_PER_LAYER:
                     NLAYERS * MLP_ROWS_PER_LAYER + EMBED, 0:DEC_OUT]       # (E, 33)
    bdec = bvec(NLAYERS * BIAS_ROWS_PER_LAYER, DEC_OUT)                     # (1, 33)
    out_ref[...] = jnp.dot(x2, wdec, preferred_element_type=jnp.float32) + bdec


def transformer_forward(src, src_mask, pe, kparams):
    pe_b = pe[:src.shape[0]]                        # (B, 1, E) — PyTorch quirk
    args = (src, pe_b, src_mask,
            kparams['w_attn'], kparams['w_mlp'], kparams['bias'])
    out = pl.pallas_call(
        fused_forward_kernel,
        out_shape=jax.ShapeDtypeStruct((B * S, DEC_OUT), jnp.float32),
        in_specs=[_vspec() for _ in args],
        out_specs=_vspec(),
    )(*args)
    out = out.reshape(B, S, DEC_OUT)                # layout handled by XLA in wrapper
    out_poi = out[..., :NUM_POI]
    out_time = out[..., NUM_POI:NUM_POI + 1]
    out_cat = out[..., NUM_POI + 1:]
    return out_poi, out_time, out_cat


# ---------------------------------------------------------------------------
# Parameter construction (PyTorch-layout, deterministic, in-script)
# ---------------------------------------------------------------------------
def make_positional_encoding():
    pos = jnp.arange(MAX_LEN, dtype=jnp.float32)[:, None]
    div = jnp.exp(jnp.arange(0, EMBED, 2, dtype=jnp.float32)
                  * (-math.log(10000.0) / EMBED))
    pe = jnp.zeros((MAX_LEN, EMBED), jnp.float32)
    pe = pe.at[:, 0::2].set(jnp.sin(pos * div))
    pe = pe.at[:, 1::2].set(jnp.cos(pos * div))
    return pe[:, None, :]                                     # (max_len, 1, E)


def make_params(key):
    def nrm(k, shape, scale=0.05):
        return scale * jax.random.normal(k, shape, jnp.float32)

    keys = jax.random.split(key, NLAYERS + 4)
    layers = []
    for l in range(NLAYERS):
        ks = jax.random.split(keys[l], 6)
        layers.append(dict(
            wqkv=nrm(ks[0], (3 * EMBED, EMBED)),              # PyTorch (out, in)
            bqkv=jnp.zeros((3 * EMBED,), jnp.float32),
            wo=nrm(ks[1], (EMBED, EMBED)),
            bo=jnp.zeros((EMBED,), jnp.float32),
            ln1g=jnp.ones((EMBED,), jnp.float32),
            ln1b=jnp.zeros((EMBED,), jnp.float32),
            ln2g=jnp.ones((EMBED,), jnp.float32),
            ln2b=jnp.zeros((EMBED,), jnp.float32),
            w1=nrm(ks[2], (NHID, EMBED)),
            b1=jnp.zeros((NHID,), jnp.float32),
            w2=nrm(ks[3], (EMBED, NHID)),
            b2=jnp.zeros((EMBED,), jnp.float32),
        ))
    # decoder_poi: weight ~ U(-0.1, 0.1), bias zero (as in init_weights)
    dec = dict(
        wp=jax.random.uniform(keys[NLAYERS], (NUM_POI, EMBED),
                              jnp.float32, -0.1, 0.1),
        bp=jnp.zeros((1, NUM_POI), jnp.float32),
        wt=nrm(keys[NLAYERS + 1], (1, EMBED)),
        bt=jnp.zeros((1, 1), jnp.float32),
        wc=nrm(keys[NLAYERS + 2], (NUM_CAT, EMBED)),
        bc=jnp.zeros((1, NUM_CAT), jnp.float32),
    )
    return layers, dec


def prep_params(layer_params, dec_params):
    """Convert PyTorch-layout params into three packed VMEM slabs:
       w_attn (NLAYERS,4,E,E): [wq*scale | wk | wv | wo], each pre-transposed to (in,out)
       w_mlp  (NLAYERS*(E+NHID)+E, NHID): per layer [w1^T ; w2^T (zero-padded cols)],
                                          then fused decoder weight (zero-padded cols)
       bias   (NLAYERS*10+1, NHID): per layer [bq*scale,bk,bv,bo,ln1g,ln1b,ln2g,ln2b,b1,b2],
                                    then fused decoder bias (all zero-padded to width 64)."""
    scale = 1.0 / math.sqrt(DH)

    def pad_row(v, width=NHID):
        return jnp.zeros((width,), jnp.float32).at[:v.shape[0]].set(v)

    w_attn_layers, w_mlp_rows, bias_rows = [], [], []
    for p in layer_params:
        wqkv, bqkv = p['wqkv'], p['bqkv']
        wq_t = wqkv[0:EMBED].T * scale            # x @ wq_t == (x @ Wq^T) / sqrt(Dh)
        wk_t = wqkv[EMBED:2 * EMBED].T
        wv_t = wqkv[2 * EMBED:3 * EMBED].T
        wo_t = p['wo'].T
        w_attn_layers.append(jnp.stack([wq_t, wk_t, wv_t, wo_t], axis=0))   # (4, E, E)

        w1_t = p['w1'].T                                                    # (E, NHID)
        w2_t = p['w2'].T                                                    # (NHID, E)
        w2_pad = jnp.zeros((NHID, NHID), jnp.float32).at[:, :EMBED].set(w2_t)
        w_mlp_rows.append(jnp.concatenate([w1_t, w2_pad], axis=0))          # (E+NHID, NHID)

        bias_rows.extend([
            pad_row(bqkv[0:EMBED] * scale),                # BQ (scale folded)
            pad_row(bqkv[EMBED:2 * EMBED]),                # BK
            pad_row(bqkv[2 * EMBED:3 * EMBED]),            # BV
            pad_row(p['bo']),                              # BO
            pad_row(p['ln1g']), pad_row(p['ln1b']),        # LN1
            pad_row(p['ln2g']), pad_row(p['ln2b']),        # LN2
            pad_row(p['b1']),                              # B1 (width NHID)
            pad_row(p['b2']),                              # B2
        ])

    # fused decoder: [Wp^T | Wt^T | Wc^T] -> (E, 33), biases -> (33,)
    wdec = jnp.concatenate(
        [dec_params['wp'].T, dec_params['wt'].T, dec_params['wc'].T], axis=1)
    w_mlp_rows.append(jnp.zeros((EMBED, NHID), jnp.float32).at[:, :DEC_OUT].set(wdec))
    bdec = jnp.concatenate(
        [dec_params['bp'], dec_params['bt'], dec_params['bc']], axis=1)[0]
    bias_rows.append(pad_row(bdec))

    return dict(
        w_attn=jnp.stack(w_attn_layers, axis=0),            # (NLAYERS, 4, E, E)
        w_mlp=jnp.concatenate(w_mlp_rows, axis=0),           # (NLAYERS*96+32, 64)
        bias=jnp.stack(bias_rows, axis=0),                   # (NLAYERS*10+1, 64)
    )


def generate_square_subsequent_mask(sz):
    # lower-triangular allowed (0.0), strictly-upper masked (-inf)
    allowed = jnp.tril(jnp.ones((sz, sz), dtype=bool))
    return jnp.where(allowed, 0.0, -jnp.inf).astype(jnp.float32)


# ---------------------------------------------------------------------------
if __name__ == "__main__":
    key = jax.random.PRNGKey(0)
    k_src, k_par = jax.random.split(key)

    src = jax.random.normal(k_src, (B, S, EMBED), jnp.float32)
    src_mask = generate_square_subsequent_mask(S)
    pe = make_positional_encoding()
    layer_params, dec_params = make_params(k_par)
    kparams = prep_params(layer_params, dec_params)

    out_poi, out_time, out_cat = transformer_forward(src, src_mask, pe, kparams)
    jax.block_until_ready((out_poi, out_time, out_cat))

    assert out_poi.shape == (B, S, NUM_POI)
    assert out_time.shape == (B, S, 1)
    assert out_cat.shape == (B, S, NUM_CAT)
    assert bool(jnp.all(jnp.isfinite(out_poi)))
    assert bool(jnp.all(jnp.isfinite(out_time)))
    assert bool(jnp.all(jnp.isfinite(out_cat)))
    print("KERNEL_OK")
</pallas_src>

<mosaic_0001>
module attributes {stable_mosaic.version = 11 : i64} {
  func.func @fused_forward_kernel(%arg0: memref<2x8x32xf32, #tpu.memory_space<vmem>>, %arg1: memref<2x1x32xf32, #tpu.memory_space<vmem>>, %arg2: memref<8x8xf32, #tpu.memory_space<vmem>>, %arg3: memref<2x4x32x32xf32, #tpu.memory_space<vmem>>, %arg4: memref<224x64xf32, #tpu.memory_space<vmem>>, %arg5: memref<21x64xf32, #tpu.memory_space<vmem>>, %arg6: memref<16x33xf32, #tpu.memory_space<vmem>>) attributes {dimension_semantics = [], scalar_prefetch = 0 : i64, scratch_operands = 0 : i64, tpu.core_type = #tpu.core_type<tc>} {
    %c0 = arith.constant 0 : index
    %c0_0 = arith.constant 0 : index
    %c0_1 = arith.constant 0 : index
    %0 = vector.load %arg0[%c0, %c0_0, %c0_1] : memref<2x8x32xf32, #tpu.memory_space<vmem>>, vector<2x8x32xf32>
    %cst = arith.constant 5.65685415 : f32
    %1 = vector.broadcast %cst : f32 to vector<2x8x32xf32>
    %2 = arith.mulf %0, %1 : vector<2x8x32xf32>
    %c0_2 = arith.constant 0 : index
    %c0_3 = arith.constant 0 : index
    %c0_4 = arith.constant 0 : index
    %3 = vector.load %arg1[%c0_2, %c0_3, %c0_4] : memref<2x1x32xf32, #tpu.memory_space<vmem>>, vector<2x1x32xf32>
    %4 = vector.broadcast %3 : vector<2x1x32xf32> to vector<2x8x32xf32>
    %5 = arith.addf %2, %4 : vector<2x8x32xf32>
    %6 = vector.shape_cast %5 : vector<2x8x32xf32> to vector<16x32xf32>
    %c0_5 = arith.constant 0 : index
    %c0_6 = arith.constant 0 : index
    %7 = vector.load %arg2[%c0_5, %c0_6] : memref<8x8xf32, #tpu.memory_space<vmem>>, vector<8x8xf32>
    %8 = vector.shape_cast %7 : vector<8x8xf32> to vector<1x8x8xf32>
    %9 = vector.broadcast %8 : vector<1x8x8xf32> to vector<2x8x8xf32>
    %c0_7 = arith.constant 0 : index
    %c0_8 = arith.constant 0 : index
    %c0_9 = arith.constant 0 : index
    %c0_10 = arith.constant 0 : index
    %10 = vector.load %arg3[%c0_7, %c0_8, %c0_9, %c0_10] : memref<2x4x32x32xf32, #tpu.memory_space<vmem>>, vector<1x1x32x32xf32>
    %11 = vector.shape_cast %10 : vector<1x1x32x32xf32> to vector<32x32xf32>
    %cst_11 = arith.constant dense<0.000000e+00> : vector<16x32xf32>
    %12 = tpu.matmul %6, %11, %cst_11 {dimension_numbers = #tpu.dot_dimension_numbers<[1], [0], [0], [1], [0, 0, 1, 1], [], []>} : vector<16x32xf32>, vector<32x32xf32>, vector<16x32xf32> -> vector<16x32xf32>
    %c0_12 = arith.constant 0 : index
    %c0_13 = arith.constant 0 : index
    %13 = vector.load %arg5[%c0_12, %c0_13] : memref<21x64xf32, #tpu.memory_space<vmem>>, vector<1x32xf32>
    %14 = vector.broadcast %13 : vector<1x32xf32> to vector<16x32xf32>
    %15 = arith.addf %12, %14 : vector<16x32xf32>
    %c0_14 = arith.constant 0 : index
    %c1 = arith.constant 1 : index
    %c0_15 = arith.constant 0 : index
    %c0_16 = arith.constant 0 : index
    %16 = vector.load %arg3[%c0_14, %c1, %c0_15, %c0_16] : memref<2x4x32x32xf32, #tpu.memory_space<vmem>>, vector<1x1x32x32xf32>
    %17 = vector.shape_cast %16 : vector<1x1x32x32xf32> to vector<32x32xf32>
    %cst_17 = arith.constant dense<0.000000e+00> : vector<16x32xf32>
    %18 = tpu.matmul %6, %17, %cst_17 {dimension_numbers = #tpu.dot_dimension_numbers<[1], [0], [0], [1], [0, 0, 1, 1], [], []>} : vector<16x32xf32>, vector<32x32xf32>, vector<16x32xf32> -> vector<16x32xf32>
    %c1_18 = arith.constant 1 : index
    %c0_19 = arith.constant 0 : index
    %19 = vector.load %arg5[%c1_18, %c0_19] : memref<21x64xf32, #tpu.memory_space<vmem>>, vector<1x32xf32>
    %20 = vector.broadcast %19 : vector<1x32xf32> to vector<16x32xf32>
    %21 = arith.addf %18, %20 : vector<16x32xf32>
    %c0_20 = arith.constant 0 : index
    %c2 = arith.constant 2 : index
    %c0_21 = arith.constant 0 : index
    %c0_22 = arith.constant 0 : index
    %22 = vector.load %arg3[%c0_20, %c2, %c0_21, %c0_22] : memref<2x4x32x32xf32, #tpu.memory_space<vmem>>, vector<1x1x32x32xf32>
    %23 = vector.shape_cast %22 : vector<1x1x32x32xf32> to vector<32x32xf32>
    %cst_23 = arith.constant dense<0.000000e+00> : vector<16x32xf32>
    %24 = tpu.matmul %6, %23, %cst_23 {dimension_numbers = #tpu.dot_dimension_numbers<[1], [0], [0], [1], [0, 0, 1, 1], [], []>} : vector<16x32xf32>, vector<32x32xf32>, vector<16x32xf32> -> vector<16x32xf32>
    %c2_24 = arith.constant 2 : index
    %c0_25 = arith.constant 0 : index
    %25 = vector.load %arg5[%c2_24, %c0_25] : memref<21x64xf32, #tpu.memory_space<vmem>>, vector<1x32xf32>
    %26 = vector.broadcast %25 : vector<1x32xf32> to vector<16x32xf32>
    %27 = arith.addf %24, %26 : vector<16x32xf32>
    %28 = vector.extract_strided_slice %15 {offsets = [0, 0], sizes = [16, 8], strides = [1, 1]} : vector<16x32xf32> to vector<16x8xf32>
    %29 = vector.shape_cast %28 : vector<16x8xf32> to vector<2x8x8xf32>
    %30 = vector.extract_strided_slice %21 {offsets = [0, 0], sizes = [16, 8], strides = [1, 1]} : vector<16x32xf32> to vector<16x8xf32>
    %31 = vector.shape_cast %30 : vector<16x8xf32> to vector<2x8x8xf32>
    %32 = vector.extract_strided_slice %27 {offsets = [0, 0], sizes = [16, 8], strides = [1, 1]} : vector<16x32xf32> to vector<16x8xf32>
    %33 = vector.shape_cast %32 : vector<16x8xf32> to vector<2x8x8xf32>
    "tpu.trace_start"() <{level = 10 : i32, message = "bqd,bkd->bqk"}> : () -> ()
    %cst_26 = arith.constant dense<0.000000e+00> : vector<2x8x8xf32>
    %34 = tpu.matmul %29, %31, %cst_26 {dimension_numbers = #tpu.dot_dimension_numbers<[2], [2], [1], [1], [0, 0, 0, 1, 1, 1], [0], [0]>} : vector<2x8x8xf32>, vector<2x8x8xf32>, vector<2x8x8xf32> -> vector<2x8x8xf32>
    "tpu.trace_stop"() : () -> ()
    %35 = arith.addf %34, %9 : vector<2x8x8xf32>
    %cst_27 = arith.constant dense<0xFF800000> : vector<2x8xf32>
    %36 = vector.multi_reduction <maximumf>, %35, %cst_27 [2] : vector<2x8x8xf32> to vector<2x8xf32>
    %37 = vector.shape_cast %36 : vector<2x8xf32> to vector<2x8x1xf32>
    %38 = vector.broadcast %37 : vector<2x8x1xf32> to vector<2x8x8xf32>
    %39 = arith.subf %35, %38 : vector<2x8x8xf32>
    %40 = math.exp %39 : vector<2x8x8xf32>
    %cst_28 = arith.constant dense<0.000000e+00> : vector<2x8xf32>
    %41 = vector.multi_reduction <add>, %40, %cst_28 [2] : vector<2x8x8xf32> to vector<2x8xf32>
    %42 = vector.shape_cast %41 : vector<2x8xf32> to vector<2x8x1xf32>
    %43 = tpu.reciprocal %42 {approx = true} : vector<2x8x1xf32> -> vector<2x8x1xf32>
    %44 = vector.broadcast %43 : vector<2x8x1xf32> to vector<2x8x8xf32>
    %45 = arith.mulf %40, %44 : vector<2x8x8xf32>
    "tpu.trace_start"() <{level = 10 : i32, message = "bqk,bkd->bqd"}> : () -> ()
    %cst_29 = arith.constant dense<0.000000e+00> : vector<2x8x8xf32>
    %46 = tpu.matmul %45, %33, %cst_29 {dimension_numbers = #tpu.dot_dimension_numbers<[2], [1], [1], [2], [0, 0, 0, 1, 1, 2], [0], [0]>} : vector<2x8x8xf32>, vector<2x8x8xf32>, vector<2x8x8xf32> -> vector<2x8x8xf32>
    "tpu.trace_stop"() : () -> ()
    %47 = vector.shape_cast %46 : vector<2x8x8xf32> to vector<16x8xf32>
    %48 = vector.extract_strided_slice %15 {offsets = [0, 8], sizes = [16, 8], strides = [1, 1]} : vector<16x32xf32> to vector<16x8xf32>
    %49 = vector.shape_cast %48 : vector<16x8xf32> to vector<2x8x8xf32>
    %50 = vector.extract_strided_slice %21 {offsets = [0, 8], sizes = [16, 8], strides = [1, 1]} : vector<16x32xf32> to vector<16x8xf32>
    %51 = vector.shape_cast %50 : vector<16x8xf32> to vector<2x8x8xf32>
    %52 = vector.extract_strided_slice %27 {offsets = [0, 8], sizes = [16, 8], strides = [1, 1]} : vector<16x32xf32> to vector<16x8xf32>
    %53 = vector.shape_cast %52 : vector<16x8xf32> to vector<2x8x8xf32>
    "tpu.trace_start"() <{level = 10 : i32, message = "bqd,bkd->bqk"}> : () -> ()
    %cst_30 = arith.constant dense<0.000000e+00> : vector<2x8x8xf32>
    %54 = tpu.matmul %49, %51, %cst_30 {dimension_numbers = #tpu.dot_dimension_numbers<[2], [2], [1], [1], [0, 0, 0, 1, 1, 1], [0], [0]>} : vector<2x8x8xf32>, vector<2x8x8xf32>, vector<2x8x8xf32> -> vector<2x8x8xf32>
    "tpu.trace_stop"() : () -> ()
    %55 = arith.addf %54, %9 : vector<2x8x8xf32>
    %cst_31 = arith.constant dense<0xFF800000> : vector<2x8xf32>
    %56 = vector.multi_reduction <maximumf>, %55, %cst_31 [2] : vector<2x8x8xf32> to vector<2x8xf32>
    %57 = vector.shape_cast %56 : vector<2x8xf32> to vector<2x8x1xf32>
    %58 = vector.broadcast %57 : vector<2x8x1xf32> to vector<2x8x8xf32>
    %59 = arith.subf %55, %58 : vector<2x8x8xf32>
    %60 = math.exp %59 : vector<2x8x8xf32>
    %cst_32 = arith.constant dense<0.000000e+00> : vector<2x8xf32>
    %61 = vector.multi_reduction <add>, %60, %cst_32 [2] : vector<2x8x8xf32> to vector<2x8xf32>
    %62 = vector.shape_cast %61 : vector<2x8xf32> to vector<2x8x1xf32>
    %63 = tpu.reciprocal %62 {approx = true} : vector<2x8x1xf32> -> vector<2x8x1xf32>
    %64 = vector.broadcast %63 : vector<2x8x1xf32> to vector<2x8x8xf32>
    %65 = arith.mulf %60, %64 : vector<2x8x8xf32>
    "tpu.trace_start"() <{level = 10 : i32, message = "bqk,bkd->bqd"}> : () -> ()
    %cst_33 = arith.constant dense<0.000000e+00> : vector<2x8x8xf32>
    %66 = tpu.matmul %65, %53, %cst_33 {dimension_numbers = #tpu.dot_dimension_numbers<[2], [1], [1], [2], [0, 0, 0, 1, 1, 2], [0], [0]>} : vector<2x8x8xf32>, vector<2x8x8xf32>, vector<2x8x8xf32> -> vector<2x8x8xf32>
    "tpu.trace_stop"() : () -> ()
    %67 = vector.shape_cast %66 : vector<2x8x8xf32> to vector<16x8xf32>
    %68 = vector.extract_strided_slice %15 {offsets = [0, 16], sizes = [16, 8], strides = [1, 1]} : vector<16x32xf32> to vector<16x8xf32>
    %69 = vector.shape_cast %68 : vector<16x8xf32> to vector<2x8x8xf32>
    %70 = vector.extract_strided_slice %21 {offsets = [0, 16], sizes = [16, 8], strides = [1, 1]} : vector<16x32xf32> to vector<16x8xf32>
    %71 = vector.shape_cast %70 : vector<16x8xf32> to vector<2x8x8xf32>
    %72 = vector.extract_strided_slice %27 {offsets = [0, 16], sizes = [16, 8], strides = [1, 1]} : vector<16x32xf32> to vector<16x8xf32>
    %73 = vector.shape_cast %72 : vector<16x8xf32> to vector<2x8x8xf32>
    "tpu.trace_start"() <{level = 10 : i32, message = "bqd,bkd->bqk"}> : () -> ()
    %cst_34 = arith.constant dense<0.000000e+00> : vector<2x8x8xf32>
    %74 = tpu.matmul %69, %71, %cst_34 {dimension_numbers = #tpu.dot_dimension_numbers<[2], [2], [1], [1], [0, 0, 0, 1, 1, 1], [0], [0]>} : vector<2x8x8xf32>, vector<2x8x8xf32>, vector<2x8x8xf32> -> vector<2x8x8xf32>
    "tpu.trace_stop"() : () -> ()
    %75 = arith.addf %74, %9 : vector<2x8x8xf32>
    %cst_35 = arith.constant dense<0xFF800000> : vector<2x8xf32>
    %76 = vector.multi_reduction <maximumf>, %75, %cst_35 [2] : vector<2x8x8xf32> to vector<2x8xf32>
    %77 = vector.shape_cast %76 : vector<2x8xf32> to vector<2x8x1xf32>
    %78 = vector.broadcast %77 : vector<2x8x1xf32> to vector<2x8x8xf32>
    %79 = arith.subf %75, %78 : vector<2x8x8xf32>
    %80 = math.exp %79 : vector<2x8x8xf32>
    %cst_36 = arith.constant dense<0.000000e+00> : vector<2x8xf32>
    %81 = vector.multi_reduction <add>, %80, %cst_36 [2] : vector<2x8x8xf32> to vector<2x8xf32>
    %82 = vector.shape_cast %81 : vector<2x8xf32> to vector<2x8x1xf32>
    %83 = tpu.reciprocal %82 {approx = true} : vector<2x8x1xf32> -> vector<2x8x1xf32>
    %84 = vector.broadcast %83 : vector<2x8x1xf32> to vector<2x8x8xf32>
    %85 = arith.mulf %80, %84 : vector<2x8x8xf32>
    "tpu.trace_start"() <{level = 10 : i32, message = "bqk,bkd->bqd"}> : () -> ()
    %cst_37 = arith.constant dense<0.000000e+00> : vector<2x8x8xf32>
    %86 = tpu.matmul %85, %73, %cst_37 {dimension_numbers = #tpu.dot_dimension_numbers<[2], [1], [1], [2], [0, 0, 0, 1, 1, 2], [0], [0]>} : vector<2x8x8xf32>, vector<2x8x8xf32>, vector<2x8x8xf32> -> vector<2x8x8xf32>
    "tpu.trace_stop"() : () -> ()
    %87 = vector.shape_cast %86 : vector<2x8x8xf32> to vector<16x8xf32>
    %88 = vector.extract_strided_slice %15 {offsets = [0, 24], sizes = [16, 8], strides = [1, 1]} : vector<16x32xf32> to vector<16x8xf32>
    %89 = vector.shape_cast %88 : vector<16x8xf32> to vector<2x8x8xf32>
    %90 = vector.extract_strided_slice %21 {offsets = [0, 24], sizes = [16, 8], strides = [1, 1]} : vector<16x32xf32> to vector<16x8xf32>
    %91 = vector.shape_cast %90 : vector<16x8xf32> to vector<2x8x8xf32>
    %92 = vector.extract_strided_slice %27 {offsets = [0, 24], sizes = [16, 8], strides = [1, 1]} : vector<16x32xf32> to vector<16x8xf32>
    %93 = vector.shape_cast %92 : vector<16x8xf32> to vector<2x8x8xf32>
    "tpu.trace_start"() <{level = 10 : i32, message = "bqd,bkd->bqk"}> : () -> ()
    %cst_38 = arith.constant dense<0.000000e+00> : vector<2x8x8xf32>
    %94 = tpu.matmul %89, %91, %cst_38 {dimension_numbers = #tpu.dot_dimension_numbers<[2], [2], [1], [1], [0, 0, 0, 1, 1, 1], [0], [0]>} : vector<2x8x8xf32>, vector<2x8x8xf32>, vector<2x8x8xf32> -> vector<2x8x8xf32>
    "tpu.trace_stop"() : () -> ()
    %95 = arith.addf %94, %9 : vector<2x8x8xf32>
    %cst_39 = arith.constant dense<0xFF800000> : vector<2x8xf32>
    %96 = vector.multi_reduction <maximumf>, %95, %cst_39 [2] : vector<2x8x8xf32> to vector<2x8xf32>
    %97 = vector.shape_cast %96 : vector<2x8xf32> to vector<2x8x1xf32>
    %98 = vector.broadcast %97 : vector<2x8x1xf32> to vector<2x8x8xf32>
    %99 = arith.subf %95, %98 : vector<2x8x8xf32>
    %100 = math.exp %99 : vector<2x8x8xf32>
    %cst_40 = arith.constant dense<0.000000e+00> : vector<2x8xf32>
    %101 = vector.multi_reduction <add>, %100, %cst_40 [2] : vector<2x8x8xf32> to vector<2x8xf32>
    %102 = vector.shape_cast %101 : vector<2x8xf32> to vector<2x8x1xf32>
    %103 = tpu.reciprocal %102 {approx = true} : vector<2x8x1xf32> -> vector<2x8x1xf32>
    %104 = vector.broadcast %103 : vector<2x8x1xf32> to vector<2x8x8xf32>
    %105 = arith.mulf %100, %104 : vector<2x8x8xf32>
    "tpu.trace_start"() <{level = 10 : i32, message = "bqk,bkd->bqd"}> : () -> ()
    %cst_41 = arith.constant dense<0.000000e+00> : vector<2x8x8xf32>
    %106 = tpu.matmul %105, %93, %cst_41 {dimension_numbers = #tpu.dot_dimension_numbers<[2], [1], [1], [2], [0, 0, 0, 1, 1, 2], [0], [0]>} : vector<2x8x8xf32>, vector<2x8x8xf32>, vector<2x8x8xf32> -> vector<2x8x8xf32>
    "tpu.trace_stop"() : () -> ()
    %107 = vector.shape_cast %106 : vector<2x8x8xf32> to vector<16x8xf32>
    %108 = tpu.concatenate %47, %67, %87, %107 in 1 : vector<16x8xf32>, vector<16x8xf32>, vector<16x8xf32>, vector<16x8xf32> -> vector<16x32xf32>
    %c0_42 = arith.constant 0 : index
    %c3 = arith.constant 3 : index
    %c0_43 = arith.constant 0 : index
    %c0_44 = arith.constant 0 : index
    %109 = vector.load %arg3[%c0_42, %c3, %c0_43, %c0_44] : memref<2x4x32x32xf32, #tpu.memory_space<vmem>>, vector<1x1x32x32xf32>
    %110 = vector.shape_cast %109 : vector<1x1x32x32xf32> to vector<32x32xf32>
    %cst_45 = arith.constant dense<0.000000e+00> : vector<16x32xf32>
    %111 = tpu.matmul %108, %110, %cst_45 {dimension_numbers = #tpu.dot_dimension_numbers<[1], [0], [0], [1], [0, 0, 1, 1], [], []>} : vector<16x32xf32>, vector<32x32xf32>, vector<16x32xf32> -> vector<16x32xf32>
    %c3_46 = arith.constant 3 : index
    %c0_47 = arith.constant 0 : index
    %112 = vector.load %arg5[%c3_46, %c0_47] : memref<21x64xf32, #tpu.memory_space<vmem>>, vector<1x32xf32>
    %113 = vector.broadcast %112 : vector<1x32xf32> to vector<16x32xf32>
    %114 = arith.addf %111, %113 : vector<16x32xf32>
    %115 = arith.addf %6, %114 : vector<16x32xf32>
    %c4 = arith.constant 4 : index
    %c0_48 = arith.constant 0 : index
    %116 = vector.load %arg5[%c4, %c0_48] : memref<21x64xf32, #tpu.memory_space<vmem>>, vector<1x32xf32>
    %c5 = arith.constant 5 : index
    %c0_49 = arith.constant 0 : index
    %117 = vector.load %arg5[%c5, %c0_49] : memref<21x64xf32, #tpu.memory_space<vmem>>, vector<1x32xf32>
    %cst_50 = arith.constant dense<0.000000e+00> : vector<16xf32>
    %118 = vector.multi_reduction <add>, %115, %cst_50 [1] : vector<16x32xf32> to vector<16xf32>
    %119 = vector.shape_cast %118 : vector<16xf32> to vector<16x1xf32>
    %cst_51 = arith.constant 3.200000e+01 : f32
    %120 = vector.broadcast %cst_51 : f32 to vector<16x1xf32>
    %121 = arith.divf %119, %120 : vector<16x1xf32>
    %122 = vector.broadcast %121 : vector<16x1xf32> to vector<16x32xf32>
    %123 = arith.subf %115, %122 : vector<16x32xf32>
    %124 = arith.mulf %123, %123 : vector<16x32xf32>
    %cst_52 = arith.constant dense<0.000000e+00> : vector<16xf32>
    %125 = vector.multi_reduction <add>, %124, %cst_52 [1] : vector<16x32xf32> to vector<16xf32>
    %126 = vector.shape_cast %125 : vector<16xf32> to vector<16x1xf32>
    %cst_53 = arith.constant 3.200000e+01 : f32
    %127 = vector.broadcast %cst_53 : f32 to vector<16x1xf32>
    %128 = arith.divf %126, %127 : vector<16x1xf32>
    %129 = vector.broadcast %121 : vector<16x1xf32> to vector<16x32xf32>
    %130 = arith.subf %115, %129 : vector<16x32xf32>
    %cst_54 = arith.constant 9.99999974E-6 : f32
    %131 = vector.broadcast %cst_54 : f32 to vector<16x1xf32>
    %132 = arith.addf %128, %131 : vector<16x1xf32>
    %133 = math.rsqrt %132 : vector<16x1xf32>
    %134 = vector.broadcast %133 : vector<16x1xf32> to vector<16x32xf32>
    %135 = arith.mulf %130, %134 : vector<16x32xf32>
    %136 = vector.broadcast %116 : vector<1x32xf32> to vector<16x32xf32>
    %137 = arith.mulf %135, %136 : vector<16x32xf32>
    %138 = vector.broadcast %117 : vector<1x32xf32> to vector<16x32xf32>
    %139 = arith.addf %137, %138 : vector<16x32xf32>
    %c0_55 = arith.constant 0 : index
    %c0_56 = arith.constant 0 : index
    %140 = vector.load %arg4[%c0_55, %c0_56] : memref<224x64xf32, #tpu.memory_space<vmem>>, vector<32x64xf32>
    %c32 = arith.constant 32 : index
    %c0_57 = arith.constant 0 : index
    %141 = vector.load %arg4[%c32, %c0_57] : memref<224x64xf32, #tpu.memory_space<vmem>>, vector<64x32xf32>
    %cst_58 = arith.constant dense<0.000000e+00> : vector<16x64xf32>
    %142 = tpu.matmul %139, %140, %cst_58 {dimension_numbers = #tpu.dot_dimension_numbers<[1], [0], [0], [1], [0, 0, 1, 1], [], []>} : vector<16x32xf32>, vector<32x64xf32>, vector<16x64xf32> -> vector<16x64xf32>
    %c8 = arith.constant 8 : index
    %c0_59 = arith.constant 0 : index
    %143 = vector.load %arg5[%c8, %c0_59] : memref<21x64xf32, #tpu.memory_space<vmem>>, vector<1x64xf32>
    %144 = vector.broadcast %143 : vector<1x64xf32> to vector<16x64xf32>
    %145 = arith.addf %142, %144 : vector<16x64xf32>
    %cst_60 = arith.constant 0.000000e+00 : f32
    %146 = vector.broadcast %cst_60 : f32 to vector<16x64xf32>
    %147 = arith.maximumf %145, %146 : vector<16x64xf32>
    %cst_61 = arith.constant dense<0.000000e+00> : vector<16x32xf32>
    %148 = tpu.matmul %147, %141, %cst_61 {dimension_numbers = #tpu.dot_dimension_numbers<[1], [0], [0], [1], [0, 0, 1, 1], [], []>} : vector<16x64xf32>, vector<64x32xf32>, vector<16x32xf32> -> vector<16x32xf32>
    %c9 = arith.constant 9 : index
    %c0_62 = arith.constant 0 : index
    %149 = vector.load %arg5[%c9, %c0_62] : memref<21x64xf32, #tpu.memory_space<vmem>>, vector<1x32xf32>
    %150 = vector.broadcast %149 : vector<1x32xf32> to vector<16x32xf32>
    %151 = arith.addf %148, %150 : vector<16x32xf32>
    %152 = arith.addf %139, %151 : vector<16x32xf32>
    %c6 = arith.constant 6 : index
    %c0_63 = arith.constant 0 : index
    %153 = vector.load %arg5[%c6, %c0_63] : memref<21x64xf32, #tpu.memory_space<vmem>>, vector<1x32xf32>
    %c7 = arith.constant 7 : index
    %c0_64 = arith.constant 0 : index
    %154 = vector.load %arg5[%c7, %c0_64] : memref<21x64xf32, #tpu.memory_space<vmem>>, vector<1x32xf32>
    %cst_65 = arith.constant dense<0.000000e+00> : vector<16xf32>
    %155 = vector.multi_reduction <add>, %152, %cst_65 [1] : vector<16x32xf32> to vector<16xf32>
    %156 = vector.shape_cast %155 : vector<16xf32> to vector<16x1xf32>
    %cst_66 = arith.constant 3.200000e+01 : f32
    %157 = vector.broadcast %cst_66 : f32 to vector<16x1xf32>
    %158 = arith.divf %156, %157 : vector<16x1xf32>
    %159 = vector.broadcast %158 : vector<16x1xf32> to vector<16x32xf32>
    %160 = arith.subf %152, %159 : vector<16x32xf32>
    %161 = arith.mulf %160, %160 : vector<16x32xf32>
    %cst_67 = arith.constant dense<0.000000e+00> : vector<16xf32>
    %162 = vector.multi_reduction <add>, %161, %cst_67 [1] : vector<16x32xf32> to vector<16xf32>
    %163 = vector.shape_cast %162 : vector<16xf32> to vector<16x1xf32>
    %cst_68 = arith.constant 3.200000e+01 : f32
    %164 = vector.broadcast %cst_68 : f32 to vector<16x1xf32>
    %165 = arith.divf %163, %164 : vector<16x1xf32>
    %166 = vector.broadcast %158 : vector<16x1xf32> to vector<16x32xf32>
    %167 = arith.subf %152, %166 : vector<16x32xf32>
    %cst_69 = arith.constant 9.99999974E-6 : f32
    %168 = vector.broadcast %cst_69 : f32 to vector<16x1xf32>
    %169 = arith.addf %165, %168 : vector<16x1xf32>
    %170 = math.rsqrt %169 : vector<16x1xf32>
    %171 = vector.broadcast %170 : vector<16x1xf32> to vector<16x32xf32>
    %172 = arith.mulf %167, %171 : vector<16x32xf32>
    %173 = vector.broadcast %153 : vector<1x32xf32> to vector<16x32xf32>
    %174 = arith.mulf %172, %173 : vector<16x32xf32>
    %175 = vector.broadcast %154 : vector<1x32xf32> to vector<16x32xf32>
    %176 = arith.addf %174, %175 : vector<16x32xf32>
    %c1_70 = arith.constant 1 : index
    %c0_71 = arith.constant 0 : index
    %c0_72 = arith.constant 0 : index
    %c0_73 = arith.constant 0 : index
    %177 = vector.load %arg3[%c1_70, %c0_71, %c0_72, %c0_73] : memref<2x4x32x32xf32, #tpu.memory_space<vmem>>, vector<1x1x32x32xf32>
    %178 = vector.shape_cast %177 : vector<1x1x32x32xf32> to vector<32x32xf32>
    %cst_74 = arith.constant dense<0.000000e+00> : vector<16x32xf32>
    %179 = tpu.matmul %176, %178, %cst_74 {dimension_numbers = #tpu.dot_dimension_numbers<[1], [0], [0], [1], [0, 0, 1, 1], [], []>} : vector<16x32xf32>, vector<32x32xf32>, vector<16x32xf32> -> vector<16x32xf32>
    %c10 = arith.constant 10 : index
    %c0_75 = arith.constant 0 : index
    %180 = vector.load %arg5[%c10, %c0_75] : memref<21x64xf32, #tpu.memory_space<vmem>>, vector<1x32xf32>
    %181 = vector.broadcast %180 : vector<1x32xf32> to vector<16x32xf32>
    %182 = arith.addf %179, %181 : vector<16x32xf32>
    %c1_76 = arith.constant 1 : index
    %c1_77 = arith.constant 1 : index
    %c0_78 = arith.constant 0 : index
    %c0_79 = arith.constant 0 : index
    %183 = vector.load %arg3[%c1_76, %c1_77, %c0_78, %c0_79] : memref<2x4x32x32xf32, #tpu.memory_space<vmem>>, vector<1x1x32x32xf32>
    %184 = vector.shape_cast %183 : vector<1x1x32x32xf32> to vector<32x32xf32>
    %cst_80 = arith.constant dense<0.000000e+00> : vector<16x32xf32>
    %185 = tpu.matmul %176, %184, %cst_80 {dimension_numbers = #tpu.dot_dimension_numbers<[1], [0], [0], [1], [0, 0, 1, 1], [], []>} : vector<16x32xf32>, vector<32x32xf32>, vector<16x32xf32> -> vector<16x32xf32>
    %c11 = arith.constant 11 : index
    %c0_81 = arith.constant 0 : index
    %186 = vector.load %arg5[%c11, %c0_81] : memref<21x64xf32, #tpu.memory_space<vmem>>, vector<1x32xf32>
    %187 = vector.broadcast %186 : vector<1x32xf32> to vector<16x32xf32>
    %188 = arith.addf %185, %187 : vector<16x32xf32>
    %c1_82 = arith.constant 1 : index
    %c2_83 = arith.constant 2 : index
    %c0_84 = arith.constant 0 : index
    %c0_85 = arith.constant 0 : index
    %189 = vector.load %arg3[%c1_82, %c2_83, %c0_84, %c0_85] : memref<2x4x32x32xf32, #tpu.memory_space<vmem>>, vector<1x1x32x32xf32>
    %190 = vector.shape_cast %189 : vector<1x1x32x32xf32> to vector<32x32xf32>
    %cst_86 = arith.constant dense<0.000000e+00> : vector<16x32xf32>
    %191 = tpu.matmul %176, %190, %cst_86 {dimension_numbers = #tpu.dot_dimension_numbers<[1], [0], [0], [1], [0, 0, 1, 1], [], []>} : vector<16x32xf32>, vector<32x32xf32>, vector<16x32xf32> -> vector<16x32xf32>
    %c12 = arith.constant 12 : index
    %c0_87 = arith.constant 0 : index
    %192 = vector.load %arg5[%c12, %c0_87] : memref<21x64xf32, #tpu.memory_space<vmem>>, vector<1x32xf32>
    %193 = vector.broadcast %192 : vector<1x32xf32> to vector<16x32xf32>
    %194 = arith.addf %191, %193 : vector<16x32xf32>
    %195 = vector.extract_strided_slice %182 {offsets = [0, 0], sizes = [16, 8], strides = [1, 1]} : vector<16x32xf32> to vector<16x8xf32>
    %196 = vector.shape_cast %195 : vector<16x8xf32> to vector<2x8x8xf32>
    %197 = vector.extract_strided_slice %188 {offsets = [0, 0], sizes = [16, 8], strides = [1, 1]} : vector<16x32xf32> to vector<16x8xf32>
    %198 = vector.shape_cast %197 : vector<16x8xf32> to vector<2x8x8xf32>
    %199 = vector.extract_strided_slice %194 {offsets = [0, 0], sizes = [16, 8], strides = [1, 1]} : vector<16x32xf32> to vector<16x8xf32>
    %200 = vector.shape_cast %199 : vector<16x8xf32> to vector<2x8x8xf32>
    "tpu.trace_start"() <{level = 10 : i32, message = "bqd,bkd->bqk"}> : () -> ()
    %cst_88 = arith.constant dense<0.000000e+00> : vector<2x8x8xf32>
    %201 = tpu.matmul %196, %198, %cst_88 {dimension_numbers = #tpu.dot_dimension_numbers<[2], [2], [1], [1], [0, 0, 0, 1, 1, 1], [0], [0]>} : vector<2x8x8xf32>, vector<2x8x8xf32>, vector<2x8x8xf32> -> vector<2x8x8xf32>
    "tpu.trace_stop"() : () -> ()
    %202 = arith.addf %201, %9 : vector<2x8x8xf32>
    %cst_89 = arith.constant dense<0xFF800000> : vector<2x8xf32>
    %203 = vector.multi_reduction <maximumf>, %202, %cst_89 [2] : vector<2x8x8xf32> to vector<2x8xf32>
    %204 = vector.shape_cast %203 : vector<2x8xf32> to vector<2x8x1xf32>
    %205 = vector.broadcast %204 : vector<2x8x1xf32> to vector<2x8x8xf32>
    %206 = arith.subf %202, %205 : vector<2x8x8xf32>
    %207 = math.exp %206 : vector<2x8x8xf32>
    %cst_90 = arith.constant dense<0.000000e+00> : vector<2x8xf32>
    %208 = vector.multi_reduction <add>, %207, %cst_90 [2] : vector<2x8x8xf32> to vector<2x8xf32>
    %209 = vector.shape_cast %208 : vector<2x8xf32> to vector<2x8x1xf32>
    %210 = tpu.reciprocal %209 {approx = true} : vector<2x8x1xf32> -> vector<2x8x1xf32>
    %211 = vector.broadcast %210 : vector<2x8x1xf32> to vector<2x8x8xf32>
    %212 = arith.mulf %207, %211 : vector<2x8x8xf32>
    "tpu.trace_start"() <{level = 10 : i32, message = "bqk,bkd->bqd"}> : () -> ()
    %cst_91 = arith.constant dense<0.000000e+00> : vector<2x8x8xf32>
    %213 = tpu.matmul %212, %200, %cst_91 {dimension_numbers = #tpu.dot_dimension_numbers<[2], [1], [1], [2], [0, 0, 0, 1, 1, 2], [0], [0]>} : vector<2x8x8xf32>, vector<2x8x8xf32>, vector<2x8x8xf32> -> vector<2x8x8xf32>
    "tpu.trace_stop"() : () -> ()
    %214 = vector.shape_cast %213 : vector<2x8x8xf32> to vector<16x8xf32>
    %215 = vector.extract_strided_slice %182 {offsets = [0, 8], sizes = [16, 8], strides = [1, 1]} : vector<16x32xf32> to vector<16x8xf32>
    %216 = vector.shape_cast %215 : vector<16x8xf32> to vector<2x8x8xf32>
    %217 = vector.extract_strided_slice %188 {offsets = [0, 8], sizes = [16, 8], strides = [1, 1]} : vector<16x32xf32> to vector<16x8xf32>
    %218 = vector.shape_cast %217 : vector<16x8xf32> to vector<2x8x8xf32>
    %219 = vector.extract_strided_slice %194 {offsets = [0, 8], sizes = [16, 8], strides = [1, 1]} : vector<16x32xf32> to vector<16x8xf32>
    %220 = vector.shape_cast %219 : vector<16x8xf32> to vector<2x8x8xf32>
    "tpu.trace_start"() <{level = 10 : i32, message = "bqd,bkd->bqk"}> : () -> ()
    %cst_92 = arith.constant dense<0.000000e+00> : vector<2x8x8xf32>
    %221 = tpu.matmul %216, %218, %cst_92 {dimension_numbers = #tpu.dot_dimension_numbers<[2], [2], [1], [1], [0, 0, 0, 1, 1, 1], [0], [0]>} : vector<2x8x8xf32>, vector<2x8x8xf32>, vector<2x8x8xf32> -> vector<2x8x8xf32>
    "tpu.trace_stop"() : () -> ()
    %222 = arith.addf %221, %9 : vector<2x8x8xf32>
    %cst_93 = arith.constant dense<0xFF800000> : vector<2x8xf32>
    %223 = vector.multi_reduction <maximumf>, %222, %cst_93 [2] : vector<2x8x8xf32> to vector<2x8xf32>
    %224 = vector.shape_cast %223 : vector<2x8xf32> to vector<2x8x1xf32>
    %225 = vector.broadcast %224 : vector<2x8x1xf32> to vector<2x8x8xf32>
    %226 = arith.subf %222, %225 : vector<2x8x8xf32>
    %227 = math.exp %226 : vector<2x8x8xf32>
    %cst_94 = arith.constant dense<0.000000e+00> : vector<2x8xf32>
    %228 = vector.multi_reduction <add>, %227, %cst_94 [2] : vector<2x8x8xf32> to vector<2x8xf32>
    %229 = vector.shape_cast %228 : vector<2x8xf32> to vector<2x8x1xf32>
    %230 = tpu.reciprocal %229 {approx = true} : vector<2x8x1xf32> -> vector<2x8x1xf32>
    %231 = vector.broadcast %230 : vector<2x8x1xf32> to vector<2x8x8xf32>
    %232 = arith.mulf %227, %231 : vector<2x8x8xf32>
    "tpu.trace_start"() <{level = 10 : i32, message = "bqk,bkd->bqd"}> : () -> ()
    %cst_95 = arith.constant dense<0.000000e+00> : vector<2x8x8xf32>
    %233 = tpu.matmul %232, %220, %cst_95 {dimension_numbers = #tpu.dot_dimension_numbers<[2], [1], [1], [2], [0, 0, 0, 1, 1, 2], [0], [0]>} : vector<2x8x8xf32>, vector<2x8x8xf32>, vector<2x8x8xf32> -> vector<2x8x8xf32>
    "tpu.trace_stop"() : () -> ()
    %234 = vector.shape_cast %233 : vector<2x8x8xf32> to vector<16x8xf32>
    %235 = vector.extract_strided_slice %182 {offsets = [0, 16], sizes = [16, 8], strides = [1, 1]} : vector<16x32xf32> to vector<16x8xf32>
    %236 = vector.shape_cast %235 : vector<16x8xf32> to vector<2x8x8xf32>
    %237 = vector.extract_strided_slice %188 {offsets = [0, 16], sizes = [16, 8], strides = [1, 1]} : vector<16x32xf32> to vector<16x8xf32>
    %238 = vector.shape_cast %237 : vector<16x8xf32> to vector<2x8x8xf32>
    %239 = vector.extract_strided_slice %194 {offsets = [0, 16], sizes = [16, 8], strides = [1, 1]} : vector<16x32xf32> to vector<16x8xf32>
    %240 = vector.shape_cast %239 : vector<16x8xf32> to vector<2x8x8xf32>
    "tpu.trace_start"() <{level = 10 : i32, message = "bqd,bkd->bqk"}> : () -> ()
    %cst_96 = arith.constant dense<0.000000e+00> : vector<2x8x8xf32>
    %241 = tpu.matmul %236, %238, %cst_96 {dimension_numbers = #tpu.dot_dimension_numbers<[2], [2], [1], [1], [0, 0, 0, 1, 1, 1], [0], [0]>} : vector<2x8x8xf32>, vector<2x8x8xf32>, vector<2x8x8xf32> -> vector<2x8x8xf32>
    "tpu.trace_stop"() : () -> ()
    %242 = arith.addf %241, %9 : vector<2x8x8xf32>
    %cst_97 = arith.constant dense<0xFF800000> : vector<2x8xf32>
    %243 = vector.multi_reduction <maximumf>, %242, %cst_97 [2] : vector<2x8x8xf32> to vector<2x8xf32>
    %244 = vector.shape_cast %243 : vector<2x8xf32> to vector<2x8x1xf32>
    %245 = vector.broadcast %244 : vector<2x8x1xf32> to vector<2x8x8xf32>
    %246 = arith.subf %242, %245 : vector<2x8x8xf32>
    %247 = math.exp %246 : vector<2x8x8xf32>
    %cst_98 = arith.constant dense<0.000000e+00> : vector<2x8xf32>
    %248 = vector.multi_reduction <add>, %247, %cst_98 [2] : vector<2x8x8xf32> to vector<2x8xf32>
    %249 = vector.shape_cast %248 : vector<2x8xf32> to vector<2x8x1xf32>
    %250 = tpu.reciprocal %249 {approx = true} : vector<2x8x1xf32> -> vector<2x8x1xf32>
    %251 = vector.broadcast %250 : vector<2x8x1xf32> to vector<2x8x8xf32>
    %252 = arith.mulf %247, %251 : vector<2x8x8xf32>
    "tpu.trace_start"() <{level = 10 : i32, message = "bqk,bkd->bqd"}> : () -> ()
    %cst_99 = arith.constant dense<0.000000e+00> : vector<2x8x8xf32>
    %253 = tpu.matmul %252, %240, %cst_99 {dimension_numbers = #tpu.dot_dimension_numbers<[2], [1], [1], [2], [0, 0, 0, 1, 1, 2], [0], [0]>} : vector<2x8x8xf32>, vector<2x8x8xf32>, vector<2x8x8xf32> -> vector<2x8x8xf32>
    "tpu.trace_stop"() : () -> ()
    %254 = vector.shape_cast %253 : vector<2x8x8xf32> to vector<16x8xf32>
    %255 = vector.extract_strided_slice %182 {offsets = [0, 24], sizes = [16, 8], strides = [1, 1]} : vector<16x32xf32> to vector<16x8xf32>
    %256 = vector.shape_cast %255 : vector<16x8xf32> to vector<2x8x8xf32>
    %257 = vector.extract_strided_slice %188 {offsets = [0, 24], sizes = [16, 8], strides = [1, 1]} : vector<16x32xf32> to vector<16x8xf32>
    %258 = vector.shape_cast %257 : vector<16x8xf32> to vector<2x8x8xf32>
    %259 = vector.extract_strided_slice %194 {offsets = [0, 24], sizes = [16, 8], strides = [1, 1]} : vector<16x32xf32> to vector<16x8xf32>
    %260 = vector.shape_cast %259 : vector<16x8xf32> to vector<2x8x8xf32>
    "tpu.trace_start"() <{level = 10 : i32, message = "bqd,bkd->bqk"}> : () -> ()
    %cst_100 = arith.constant dense<0.000000e+00> : vector<2x8x8xf32>
    %261 = tpu.matmul %256, %258, %cst_100 {dimension_numbers = #tpu.dot_dimension_numbers<[2], [2], [1], [1], [0, 0, 0, 1, 1, 1], [0], [0]>} : vector<2x8x8xf32>, vector<2x8x8xf32>, vector<2x8x8xf32> -> vector<2x8x8xf32>
    "tpu.trace_stop"() : () -> ()
    %262 = arith.addf %261, %9 : vector<2x8x8xf32>
    %cst_101 = arith.constant dense<0xFF800000> : vector<2x8xf32>
    %263 = vector.multi_reduction <maximumf>, %262, %cst_101 [2] : vector<2x8x8xf32> to vector<2x8xf32>
    %264 = vector.shape_cast %263 : vector<2x8xf32> to vector<2x8x1xf32>
    %265 = vector.broadcast %264 : vector<2x8x1xf32> to vector<2x8x8xf32>
    %266 = arith.subf %262, %265 : vector<2x8x8xf32>
    %267 = math.exp %266 : vector<2x8x8xf32>
    %cst_102 = arith.constant dense<0.000000e+00> : vector<2x8xf32>
    %268 = vector.multi_reduction <add>, %267, %cst_102 [2] : vector<2x8x8xf32> to vector<2x8xf32>
    %269 = vector.shape_cast %268 : vector<2x8xf32> to vector<2x8x1xf32>
    %270 = tpu.reciprocal %269 {approx = true} : vector<2x8x1xf32> -> vector<2x8x1xf32>
    %271 = vector.broadcast %270 : vector<2x8x1xf32> to vector<2x8x8xf32>
    %272 = arith.mulf %267, %271 : vector<2x8x8xf32>
    "tpu.trace_start"() <{level = 10 : i32, message = "bqk,bkd->bqd"}> : () -> ()
    %cst_103 = arith.constant dense<0.000000e+00> : vector<2x8x8xf32>
    %273 = tpu.matmul %272, %260, %cst_103 {dimension_numbers = #tpu.dot_dimension_numbers<[2], [1], [1], [2], [0, 0, 0, 1, 1, 2], [0], [0]>} : vector<2x8x8xf32>, vector<2x8x8xf32>, vector<2x8x8xf32> -> vector<2x8x8xf32>
    "tpu.trace_stop"() : () -> ()
    %274 = vector.shape_cast %273 : vector<2x8x8xf32> to vector<16x8xf32>
    %275 = tpu.concatenate %214, %234, %254, %274 in 1 : vector<16x8xf32>, vector<16x8xf32>, vector<16x8xf32>, vector<16x8xf32> -> vector<16x32xf32>
    %c1_104 = arith.constant 1 : index
    %c3_105 = arith.constant 3 : index
    %c0_106 = arith.constant 0 : index
    %c0_107 = arith.constant 0 : index
    %276 = vector.load %arg3[%c1_104, %c3_105, %c0_106, %c0_107] : memref<2x4x32x32xf32, #tpu.memory_space<vmem>>, vector<1x1x32x32xf32>
    %277 = vector.shape_cast %276 : vector<1x1x32x32xf32> to vector<32x32xf32>
    %cst_108 = arith.constant dense<0.000000e+00> : vector<16x32xf32>
    %278 = tpu.matmul %275, %277, %cst_108 {dimension_numbers = #tpu.dot_dimension_numbers<[1], [0], [0], [1], [0, 0, 1, 1], [], []>} : vector<16x32xf32>, vector<32x32xf32>, vector<16x32xf32> -> vector<16x32xf32>
    %c13 = arith.constant 13 : index
    %c0_109 = arith.constant 0 : index
    %279 = vector.load %arg5[%c13, %c0_109] : memref<21x64xf32, #tpu.memory_space<vmem>>, vector<1x32xf32>
    %280 = vector.broadcast %279 : vector<1x32xf32> to vector<16x32xf32>
    %281 = arith.addf %278, %280 : vector<16x32xf32>
    %282 = arith.addf %176, %281 : vector<16x32xf32>
    %c14 = arith.constant 14 : index
    %c0_110 = arith.constant 0 : index
    %283 = vector.load %arg5[%c14, %c0_110] : memref<21x64xf32, #tpu.memory_space<vmem>>, vector<1x32xf32>
    %c15 = arith.constant 15 : index
    %c0_111 = arith.constant 0 : index
    %284 = vector.load %arg5[%c15, %c0_111] : memref<21x64xf32, #tpu.memory_space<vmem>>, vector<1x32xf32>
    %cst_112 = arith.constant dense<0.000000e+00> : vector<16xf32>
    %285 = vector.multi_reduction <add>, %282, %cst_112 [1] : vector<16x32xf32> to vector<16xf32>
    %286 = vector.shape_cast %285 : vector<16xf32> to vector<16x1xf32>
    %cst_113 = arith.constant 3.200000e+01 : f32
    %287 = vector.broadcast %cst_113 : f32 to vector<16x1xf32>
    %288 = arith.divf %286, %287 : vector<16x1xf32>
    %289 = vector.broadcast %288 : vector<16x1xf32> to vector<16x32xf32>
    %290 = arith.subf %282, %289 : vector<16x32xf32>
    %291 = arith.mulf %290, %290 : vector<16x32xf32>
    %cst_114 = arith.constant dense<0.000000e+00> : vector<16xf32>
    %292 = vector.multi_reduction <add>, %291, %cst_114 [1] : vector<16x32xf32> to vector<16xf32>
    %293 = vector.shape_cast %292 : vector<16xf32> to vector<16x1xf32>
    %cst_115 = arith.constant 3.200000e+01 : f32
    %294 = vector.broadcast %cst_115 : f32 to vector<16x1xf32>
    %295 = arith.divf %293, %294 : vector<16x1xf32>
    %296 = vector.broadcast %288 : vector<16x1xf32> to vector<16x32xf32>
    %297 = arith.subf %282, %296 : vector<16x32xf32>
    %cst_116 = arith.constant 9.99999974E-6 : f32
    %298 = vector.broadcast %cst_116 : f32 to vector<16x1xf32>
    %299 = arith.addf %295, %298 : vector<16x1xf32>
    %300 = math.rsqrt %299 : vector<16x1xf32>
    %301 = vector.broadcast %300 : vector<16x1xf32> to vector<16x32xf32>
    %302 = arith.mulf %297, %301 : vector<16x32xf32>
    %303 = vector.broadcast %283 : vector<1x32xf32> to vector<16x32xf32>
    %304 = arith.mulf %302, %303 : vector<16x32xf32>
    %305 = vector.broadcast %284 : vector<1x32xf32> to vector<16x32xf32>
    %306 = arith.addf %304, %305 : vector<16x32xf32>
    %c96 = arith.constant 96 : index
    %c0_117 = arith.constant 0 : index
    %307 = vector.load %arg4[%c96, %c0_117] : memref<224x64xf32, #tpu.memory_space<vmem>>, vector<32x64xf32>
    %c128 = arith.constant 128 : index
    %c0_118 = arith.constant 0 : index
    %308 = vector.load %arg4[%c128, %c0_118] : memref<224x64xf32, #tpu.memory_space<vmem>>, vector<64x32xf32>
    %cst_119 = arith.constant dense<0.000000e+00> : vector<16x64xf32>
    %309 = tpu.matmul %306, %307, %cst_119 {dimension_numbers = #tpu.dot_dimension_numbers<[1], [0], [0], [1], [0, 0, 1, 1], [], []>} : vector<16x32xf32>, vector<32x64xf32>, vector<16x64xf32> -> vector<16x64xf32>
    %c18 = arith.constant 18 : index
    %c0_120 = arith.constant 0 : index
    %310 = vector.load %arg5[%c18, %c0_120] : memref<21x64xf32, #tpu.memory_space<vmem>>, vector<1x64xf32>
    %311 = vector.broadcast %310 : vector<1x64xf32> to vector<16x64xf32>
    %312 = arith.addf %309, %311 : vector<16x64xf32>
    %cst_121 = arith.constant 0.000000e+00 : f32
    %313 = vector.broadcast %cst_121 : f32 to vector<16x64xf32>
    %314 = arith.maximumf %312, %313 : vector<16x64xf32>
    %cst_122 = arith.constant dense<0.000000e+00> : vector<16x32xf32>
    %315 = tpu.matmul %314, %308, %cst_122 {dimension_numbers = #tpu.dot_dimension_numbers<[1], [0], [0], [1], [0, 0, 1, 1], [], []>} : vector<16x64xf32>, vector<64x32xf32>, vector<16x32xf32> -> vector<16x32xf32>
    %c19 = arith.constant 19 : index
    %c0_123 = arith.constant 0 : index
    %316 = vector.load %arg5[%c19, %c0_123] : memref<21x64xf32, #tpu.memory_space<vmem>>, vector<1x32xf32>
    %317 = vector.broadcast %316 : vector<1x32xf32> to vector<16x32xf32>
    %318 = arith.addf %315, %317 : vector<16x32xf32>
    %319 = arith.addf %306, %318 : vector<16x32xf32>
    %c16 = arith.constant 16 : index
    %c0_124 = arith.constant 0 : index
    %320 = vector.load %arg5[%c16, %c0_124] : memref<21x64xf32, #tpu.memory_space<vmem>>, vector<1x32xf32>
    %c17 = arith.constant 17 : index
    %c0_125 = arith.constant 0 : index
    %321 = vector.load %arg5[%c17, %c0_125] : memref<21x64xf32, #tpu.memory_space<vmem>>, vector<1x32xf32>
    %cst_126 = arith.constant dense<0.000000e+00> : vector<16xf32>
    %322 = vector.multi_reduction <add>, %319, %cst_126 [1] : vector<16x32xf32> to vector<16xf32>
    %323 = vector.shape_cast %322 : vector<16xf32> to vector<16x1xf32>
    %cst_127 = arith.constant 3.200000e+01 : f32
    %324 = vector.broadcast %cst_127 : f32 to vector<16x1xf32>
    %325 = arith.divf %323, %324 : vector<16x1xf32>
    %326 = vector.broadcast %325 : vector<16x1xf32> to vector<16x32xf32>
    %327 = arith.subf %319, %326 : vector<16x32xf32>
    %328 = arith.mulf %327, %327 : vector<16x32xf32>
    %cst_128 = arith.constant dense<0.000000e+00> : vector<16xf32>
    %329 = vector.multi_reduction <add>, %328, %cst_128 [1] : vector<16x32xf32> to vector<16xf32>
    %330 = vector.shape_cast %329 : vector<16xf32> to vector<16x1xf32>
    %cst_129 = arith.constant 3.200000e+01 : f32
    %331 = vector.broadcast %cst_129 : f32 to vector<16x1xf32>
    %332 = arith.divf %330, %331 : vector<16x1xf32>
    %333 = vector.broadcast %325 : vector<16x1xf32> to vector<16x32xf32>
    %334 = arith.subf %319, %333 : vector<16x32xf32>
    %cst_130 = arith.constant 9.99999974E-6 : f32
    %335 = vector.broadcast %cst_130 : f32 to vector<16x1xf32>
    %336 = arith.addf %332, %335 : vector<16x1xf32>
    %337 = math.rsqrt %336 : vector<16x1xf32>
    %338 = vector.broadcast %337 : vector<16x1xf32> to vector<16x32xf32>
    %339 = arith.mulf %334, %338 : vector<16x32xf32>
    %340 = vector.broadcast %320 : vector<1x32xf32> to vector<16x32xf32>
    %341 = arith.mulf %339, %340 : vector<16x32xf32>
    %342 = vector.broadcast %321 : vector<1x32xf32> to vector<16x32xf32>
    %343 = arith.addf %341, %342 : vector<16x32xf32>
    %c192 = arith.constant 192 : index
    %c0_131 = arith.constant 0 : index
    %344 = vector.load %arg4[%c192, %c0_131] : memref<224x64xf32, #tpu.memory_space<vmem>>, vector<32x33xf32>
    %c20 = arith.constant 20 : index
    %c0_132 = arith.constant 0 : index
    %345 = vector.load %arg5[%c20, %c0_132] : memref<21x64xf32, #tpu.memory_space<vmem>>, vector<1x33xf32>
    %cst_133 = arith.constant dense<0.000000e+00> : vector<16x33xf32>
    %346 = tpu.matmul %343, %344, %cst_133 {dimension_numbers = #tpu.dot_dimension_numbers<[1], [0], [0], [1], [0, 0, 1, 1], [], []>} : vector<16x32xf32>, vector<32x33xf32>, vector<16x33xf32> -> vector<16x33xf32>
    %347 = vector.broadcast %345 : vector<1x33xf32> to vector<16x33xf32>
    %348 = arith.addf %346, %347 : vector<16x33xf32>
    %c0_134 = arith.constant 0 : index
    %c0_135 = arith.constant 0 : index
    %349 = vector.load %arg6[%c0_134, %c0_135] : memref<16x33xf32, #tpu.memory_space<vmem>>, vector<16x33xf32>
    tpu.vector_store %arg6[%c0_134, %c0_135], %348 {strides = array<i32>} : memref<16x33xf32, #tpu.memory_space<vmem>>, vector<16x33xf32>,
    return
  }
}

</mosaic_0001>

<llo_original>
// kernel: tpu_custom_call.1
$region0: #{tpu_custom_call.1}
  #allocation0 [shape = 'u32[]', space=smem, size = 0x4, offset = 0x4, fixed_abs, tag = 'smem constant byte address 0x4 - core index']
  #allocation1 [shape = 'u32[144,128]{1,0:T(1,128)}', space=vmem, size = 0x12000, scoped, tag = 'internal scratch']
  %s0 = inlined_call_operand.vmem [shape: f32[2,8,32], index: 0, kind: input, shape index: {}]
  %s1 = inlined_call_operand.vmem [shape: f32[2,1,32], index: 1, kind: input, shape index: {}]
  %s2 = inlined_call_operand.vmem [shape: f32[8,8], index: 2, kind: input, shape index: {}]
  %s3 = inlined_call_operand.vmem [shape: f32[2,4,32,32], index: 3, kind: input, shape index: {}]
  %s4 = inlined_call_operand.vmem [shape: f32[224,64], index: 4, kind: input, shape index: {}]
  %s5 = inlined_call_operand.vmem [shape: f32[21,64], index: 5, kind: input, shape index: {}]
  %s6 = inlined_call_operand.hbm [shape: f32[16,33], index: 6, kind: output, shape index: {}]
  %s7 = sld [smem:[#allocation0]]
  $region34: #{tpu_custom_call.1} parent=0
    _
  %s9 = ssub.s32 1, %s7
  %s10 = scalar_select 0, %s9, %s7
  $region1: #{tpu_custom_call.1} parent=0
    #allocation2 [shape = 'u8[8192]{0}', space=vmem, size = 0x2000, scoped, tag = 'output window, operand 0, single buffered']
    #allocation3 [shape = 's32[1]{0}', space=sflag, size = 0x4, scoped, tag = 'scoped memory for tpu_custom_call.1']
    %11 = vsyncpa [#allocation3], 0
    // Predicated region
    $region2: #{tpu_custom_call.1} parent=1 // pred_check
      _
    $region3: #{tpu_custom_call.1} parent=1 // pred_check_branch
      %13 = sbr.rel (0) target = $region5
    $region4: #{tpu_custom_call.1} parent=1 // pred_region
      _
    $region5: #{tpu_custom_call.1} parent=1 // pred_fallthru
      _
    // Predicated region
    $region6: #{tpu_custom_call.1} parent=1 // pred_check
      _
    $region7: #{tpu_custom_call.1} parent=1 // pred_check_branch
      %15 = sbr.rel (0) target = $region9
    $region8: #{tpu_custom_call.1} parent=1 // pred_region
      _
    $region9: #{tpu_custom_call.1} parent=1 // pred_fallthru
      _
    // Predicated region
    $region10: #{tpu_custom_call.1} parent=1 // pred_check
      _
    $region11: #{tpu_custom_call.1} parent=1 // pred_check_branch
      %17 = sbr.rel (0) target = $region13
    $region12: #{tpu_custom_call.1} parent=1 // pred_region
      _
    $region13: #{tpu_custom_call.1} parent=1 // pred_fallthru
      _
    // Predicated region
    $region14: #{tpu_custom_call.1} parent=1 // pred_check
      _
    $region15: #{tpu_custom_call.1} parent=1 // pred_check_branch
      %19 = sbr.rel (0) target = $region17
    $region16: #{tpu_custom_call.1} parent=1 // pred_region
      _
    $region17: #{tpu_custom_call.1} parent=1 // pred_fallthru
      _
    // Predicated region
    $region18: #{tpu_custom_call.1} parent=1 // pred_check
      _
    $region19: #{tpu_custom_call.1} parent=1 // pred_check_branch
      %21 = sbr.rel (0) target = $region21
    $region20: #{tpu_custom_call.1} parent=1 // pred_region
      _
    $region21: #{tpu_custom_call.1} parent=1 // pred_fallthru
      _
    // Predicated region
    $region22: #{tpu_custom_call.1} parent=1 // pred_check
      _
    $region23: #{tpu_custom_call.1} parent=1 // pred_check_branch
      %23 = sbr.rel (0) target = $region25
    $region24: #{tpu_custom_call.1} parent=1 // pred_region
      _
    $region25: #{tpu_custom_call.1} parent=1 // pred_fallthru
      _
    %v24 = vld [vmem:[%s0] sm:$0xff]
    %v25 = vld [vmem:[%s0 + $0x8] sm:$0xff]
    %v26 = vmul.f32 %v24, 5.656854
    %v27 = vmul.f32 %v25, 5.656854
    %v28 = vld [vmem:[%s1] sm:$0x1]
    %v29 = vld [vmem:[%s1 + $0x1] sm:$0x1]
    %v32 = vlaneseq
    %v33 = vshrl.u32 %v32, 7
    %v34 = vsub.s32 0, %v33
    %v35 = vrot.slane %v28, %v34
    %v36 = vlaneseq
    %v37 = vshrl.u32 %v36, 7
    %v38 = vsub.s32 0, %v37
    %v39 = vrot.slane %v29, %v38
    %v42 = vadd.f32 %v26, %v35
    %v43 = vadd.f32 %v27, %v39
    %v44 = vld [vmem:[%s2] sm:$0xff]
    %v45 = vld [vmem:[%s3] sm:$0xff]
    %v46 = vld [vmem:[%s3 + $0x8] sm:$0xff]
    %v47 = vld [vmem:[%s3 + $0x10] sm:$0xff]
    %v48 = vld [vmem:[%s3 + $0x18] sm:$0xff]
    %v49 = vld [vmem:[%s5] sm:$0x1]
    %v50 = vlaneseq
    %v51 = vshrl.u32 %v50, 7
    %v52 = vsub.s32 0, %v51
    %v53 = vrot.slane %v49, %v52
    %vm54 = vcmask 261120
    %v56 = vsel %vm54, %v42, 0
    %v59 = vsel %vm54, %v43, 0
    %61 = vmatprep.subr.mxu0 0.0
    %62 = vmatpush1.msra.mxu0 %v45
    %63 = vmatprep.subr.mxu0 0.0
    %64 = vmatpush1.msra.mxu0 %v46
    %65 = vmatprep.subr.mxu0 0.0
    %66 = vmatpush1.msra.mxu0 %v47
    %67 = vmatprep.subr.mxu0 0.0
    %68 = vmatpush1.msra.mxu0 %v48
    %69 = vmatprep.subr.mxu0 0.0
    %70 = vmatpush1.msra.mxu0 0.0
    %71 = vmatprep.subr.mxu0 0.0
    %72 = vmatpush1.msra.mxu0 0.0
    %73 = vmatprep.subr.mxu0 0.0
    %74 = vmatpush1.msra.mxu0 0.0
    %75 = vmatprep.subr.mxu0 0.0
    %76 = vmatpush1.msra.mxu0 0.0
    %77 = vmatprep.subr.mxu0 0.0
    %78 = vmatpush1.msra.mxu0 0.0
    %79 = vmatprep.subr.mxu0 0.0
    %80 = vmatpush1.msra.mxu0 0.0
    %81 = vmatprep.subr.mxu0 0.0
    %82 = vmatpush1.msra.mxu0 0.0
    %83 = vmatprep.subr.mxu0 0.0
    %84 = vmatpush1.msra.mxu0 0.0
    %85 = vmatprep.subr.mxu0 0.0
    %86 = vmatpush1.msra.mxu0 0.0
    %87 = vmatprep.subr.mxu0 0.0
    %88 = vmatpush1.msra.mxu0 0.0
    %89 = vmatprep.subr.mxu0 0.0
    %90 = vmatpush1.msra.mxu0 0.0
    %91 = vmatprep.subr.mxu0 0.0
    %92 = vmatpush1.msra.mxu0 0.0
    %93 = vmatprep.subr.mxu0 0.0
    %94 = vmatpush1.msra.mxu0 0.0
    %95 = vmatprep.subr.mxu0 0.0
    %96 = vmatpush1.msra.mxu0 0.0
    %97 = vmatprep.subr.mxu0 0.0
    %98 = vmatpush1.msra.mxu0 0.0
    %99 = vmatprep.subr.mxu0 0.0
    %100 = vmatpush1.msra.mxu0 0.0
    %101 = vmatprep.subr.mxu0 0.0
    %102 = vmatpush1.msra.mxu0 0.0
    %103 = vmatprep.subr.mxu0 0.0
    %104 = vmatpush1.msra.mxu0 0.0
    %105 = vmatprep.subr.mxu0 0.0
    %106 = vmatpush1.msra.mxu0 0.0
    %107 = vmatprep.subr.mxu0 0.0
    %108 = vmatpush1.msra.mxu0 0.0
    %109 = vmatprep.subr.mxu0 0.0
    %110 = vmatpush1.msra.mxu0 0.0
    %111 = vmatprep.subr.mxu0 0.0
    %112 = vmatpush1.msra.mxu0 0.0
    %113 = vmatprep.subr.mxu0 0.0
    %114 = vmatpush1.msra.mxu0 0.0
    %115 = vmatprep.subr.mxu0 0.0
    %116 = vmatpush1.msra.mxu0 0.0
    %117 = vmatprep.subr.mxu0 0.0
    %118 = vmatpush1.msra.mxu0 0.0
    %119 = vmatprep.subr.mxu0 0.0
    %120 = vmatpush1.msra.mxu0 0.0
    %121 = vmatprep.subr.mxu0 0.0
    %122 = vmatpush1.msra.mxu0 0.0
    %123 = vmatprep.subr.mxu0 0.0
    %124 = vmatpush1.msra.mxu0 0.0
    %125 = vmatprep.mubr.f32.mxu0 0.0
    %126 = vmatmul.mubr.f32.gmra.mrb[0].mxu0 %v56
    %v127 = vpop.f32.mrb[0].mxu0
    %v128 = vadd.f32 %v53, %v127
    %v129 = vpop.f32.mrb[0].mxu0
    %130 = vmatprep.mubr.f32.mxu0 0.0
    %131 = vmatmul.mubr.f32.gmra.mrb[0].mxu0 %v59
    %v132 = vpop.f32.mrb[0].mxu0
    %v133 = vadd.f32 %v53, %v132
    %v134 = vpop.f32.mrb[0].mxu0
    %135 = vdwg.mxu0
    %s136 = scalar_lea.vmem %s3, 32
    %v137 = vld [vmem:[%s136] sm:$0xff]
    %v138 = vld [vmem:[%s136 + $0x8] sm:$0xff]
    %v139 = vld [vmem:[%s136 + $0x10] sm:$0xff]
    %v140 = vld [vmem:[%s136 + $0x18] sm:$0xff]
    %v141 = vld [vmem:[%s5 + $0x1] sm:$0x1]
    %v142 = vlaneseq
    %v143 = vshrl.u32 %v142, 7
    %v144 = vsub.s32 0, %v143
    %v145 = vrot.slane %v141, %v144
    %146 = vmatprep.subr.mxu0 0.0
    %147 = vmatpush1.msra.mxu0 %v137
    %148 = vmatprep.subr.mxu0 0.0
    %149 = vmatpush1.msra.mxu0 %v138
    %150 = vmatprep.subr.mxu0 0.0
    %151 = vmatpush1.msra.mxu0 %v139
    %152 = vmatprep.subr.mxu0 0.0
    %153 = vmatpush1.msra.mxu0 %v140
    %154 = vmatprep.subr.mxu0 0.0
    %155 = vmatpush1.msra.mxu0 0.0
    %156 = vmatprep.subr.mxu0 0.0
    %157 = vmatpush1.msra.mxu0 0.0
    %158 = vmatprep.subr.mxu0 0.0
    %159 = vmatpush1.msra.mxu0 0.0
    %160 = vmatprep.subr.mxu0 0.0
    %161 = vmatpush1.msra.mxu0 0.0
    %162 = vmatprep.subr.mxu0 0.0
    %163 = vmatpush1.msra.mxu0 0.0
    %164 = vmatprep.subr.mxu0 0.0
    %165 = vmatpush1.msra.mxu0 0.0
    %166 = vmatprep.subr.mxu0 0.0
    %167 = vmatpush1.msra.mxu0 0.0
    %168 = vmatprep.subr.mxu0 0.0
    %169 = vmatpush1.msra.mxu0 0.0
    %170 = vmatprep.subr.mxu0 0.0
    %171 = vmatpush1.msra.mxu0 0.0
    %172 = vmatprep.subr.mxu0 0.0
    %173 = vmatpush1.msra.mxu0 0.0
    %174 = vmatprep.subr.mxu0 0.0
    %175 = vmatpush1.msra.mxu0 0.0
    %176 = vmatprep.subr.mxu0 0.0
    %177 = vmatpush1.msra.mxu0 0.0
    %178 = vmatprep.subr.mxu0 0.0
    %179 = vmatpush1.msra.mxu0 0.0
    %180 = vmatprep.subr.mxu0 0.0
    %181 = vmatpush1.msra.mxu0 0.0
    %182 = vmatprep.subr.mxu0 0.0
    %183 = vmatpush1.msra.mxu0 0.0
    %184 = vmatprep.subr.mxu0 0.0
    %185 = vmatpush1.msra.mxu0 0.0
    %186 = vmatprep.subr.mxu0 0.0
    %187 = vmatpush1.msra.mxu0 0.0
    %188 = vmatprep.subr.mxu0 0.0
    %189 = vmatpush1.msra.mxu0 0.0
    %190 = vmatprep.subr.mxu0 0.0
    %191 = vmatpush1.msra.mxu0 0.0
    %192 = vmatprep.subr.mxu0 0.0
    %193 = vmatpush1.msra.mxu0 0.0
    %194 = vmatprep.subr.mxu0 0.0
    %195 = vmatpush1.msra.mxu0 0.0
    %196 = vmatprep.subr.mxu0 0.0
    %197 = vmatpush1.msra.mxu0 0.0
    %198 = vmatprep.subr.mxu0 0.0
    %199 = vmatpush1.msra.mxu0 0.0
    %200 = vmatprep.subr.mxu0 0.0
    %201 = vmatpush1.msra.mxu0 0.0
    %202 = vmatprep.subr.mxu0 0.0
    %203 = vmatpush1.msra.mxu0 0.0
    %204 = vmatprep.subr.mxu0 0.0
    %205 = vmatpush1.msra.mxu0 0.0
    %206 = vmatprep.subr.mxu0 0.0
    %207 = vmatpush1.msra.mxu0 0.0
    %208 = vmatprep.subr.mxu0 0.0
    %209 = vmatpush1.msra.mxu0 0.0
    %210 = vmatprep.mubr.f32.mxu0 0.0
    %211 = vmatmul.mubr.f32.gmra.mrb[0].mxu0 %v56
    %v212 = vpop.f32.mrb[0].mxu0
    %v213 = vadd.f32 %v145, %v212
    %v214 = vpop.f32.mrb[0].mxu0
    %215 = vmatprep.mubr.f32.mxu0 0.0
    %216 = vmatmul.mubr.f32.gmra.mrb[0].mxu0 %v59
    %v217 = vpop.f32.mrb[0].mxu0
    %v218 = vadd.f32 %v145, %v217
    %v219 = vpop.f32.mrb[0].mxu0
    %220 = vdwg.mxu0
    %s221 = scalar_lea.vmem %s3, 64
    %v222 = vld [vmem:[%s221] sm:$0xff]
    %v223 = vld [vmem:[%s221 + $0x8] sm:$0xff]
    %v224 = vld [vmem:[%s221 + $0x10] sm:$0xff]
    %v225 = vld [vmem:[%s221 + $0x18] sm:$0xff]
    %v226 = vld [vmem:[%s5 + $0x2] sm:$0x1]
    %v227 = vlaneseq
    %v228 = vshrl.u32 %v227, 7
    %v229 = vsub.s32 0, %v228
    %v230 = vrot.slane %v226, %v229
    %231 = vmatprep.subr.mxu0 0.0
    %232 = vmatpush1.msra.mxu0 %v222
    %233 = vmatprep.subr.mxu0 0.0
    %234 = vmatpush1.msra.mxu0 %v223
    %235 = vmatprep.subr.mxu0 0.0
    %236 = vmatpush1.msra.mxu0 %v224
    %237 = vmatprep.subr.mxu0 0.0
    %238 = vmatpush1.msra.mxu0 %v225
    %239 = vmatprep.subr.mxu0 0.0
    %240 = vmatpush1.msra.mxu0 0.0
    %241 = vmatprep.subr.mxu0 0.0
    %242 = vmatpush1.msra.mxu0 0.0
    %243 = vmatprep.subr.mxu0 0.0
    %244 = vmatpush1.msra.mxu0 0.0
    %245 = vmatprep.subr.mxu0 0.0
    %246 = vmatpush1.msra.mxu0 0.0
    %247 = vmatprep.subr.mxu0 0.0
    %248 = vmatpush1.msra.mxu0 0.0
    %249 = vmatprep.subr.mxu0 0.0
    %250 = vmatpush1.msra.mxu0 0.0
    %251 = vmatprep.subr.mxu0 0.0
    %252 = vmatpush1.msra.mxu0 0.0
    %253 = vmatprep.subr.mxu0 0.0
    %254 = vmatpush1.msra.mxu0 0.0
    %255 = vmatprep.subr.mxu0 0.0
    %256 = vmatpush1.msra.mxu0 0.0
    %257 = vmatprep.subr.mxu0 0.0
    %258 = vmatpush1.msra.mxu0 0.0
    %259 = vmatprep.subr.mxu0 0.0
    %260 = vmatpush1.msra.mxu0 0.0
    %261 = vmatprep.subr.mxu0 0.0
    %262 = vmatpush1.msra.mxu0 0.0
    %263 = vmatprep.subr.mxu0 0.0
    %264 = vmatpush1.msra.mxu0 0.0
    %265 = vmatprep.subr.mxu0 0.0
    %266 = vmatpush1.msra.mxu0 0.0
    %267 = vmatprep.subr.mxu0 0.0
    %268 = vmatpush1.msra.mxu0 0.0
    %269 = vmatprep.subr.mxu0 0.0
    %270 = vmatpush1.msra.mxu0 0.0
    %271 = vmatprep.subr.mxu0 0.0
    %272 = vmatpush1.msra.mxu0 0.0
    %273 = vmatprep.subr.mxu0 0.0
    %274 = vmatpush1.msra.mxu0 0.0
    %275 = vmatprep.subr.mxu0 0.0
    %276 = vmatpush1.msra.mxu0 0.0
    %277 = vmatprep.subr.mxu0 0.0
    %278 = vmatpush1.msra.mxu0 0.0
    %279 = vmatprep.subr.mxu0 0.0
    %280 = vmatpush1.msra.mxu0 0.0
    %281 = vmatprep.subr.mxu0 0.0
    %282 = vmatpush1.msra.mxu0 0.0
    %283 = vmatprep.subr.mxu0 0.0
    %284 = vmatpush1.msra.mxu0 0.0
    %285 = vmatprep.subr.mxu0 0.0
    %286 = vmatpush1.msra.mxu0 0.0
    %287 = vmatprep.subr.mxu0 0.0
    %288 = vmatpush1.msra.mxu0 0.0
    %289 = vmatprep.subr.mxu0 0.0
    %290 = vmatpush1.msra.mxu0 0.0
    %291 = vmatprep.subr.mxu0 0.0
    %292 = vmatpush1.msra.mxu0 0.0
    %293 = vmatprep.subr.mxu0 0.0
    %294 = vmatpush1.msra.mxu0 0.0
    %295 = vmatprep.mubr.f32.mxu0 0.0
    %296 = vmatmul.mubr.f32.gmra.mrb[0].mxu0 %v56
    %v297 = vpop.f32.mrb[0].mxu0
    %v298 = vadd.f32 %v230, %v297
    %v299 = vpop.f32.mrb[0].mxu0
    %300 = vmatprep.mubr.f32.mxu0 0.0
    %301 = vmatmul.mubr.f32.gmra.mrb[0].mxu0 %v59
    %v302 = vpop.f32.mrb[0].mxu0
    %v303 = vadd.f32 %v230, %v302
    %v304 = vpop.f32.mrb[0].mxu0
    %305 = vdwg.mxu0
    %vm306 = vcmask 64512
    %v308 = vsel %vm306, %v128, 0
    %v311 = vsel %vm306, %v213, 0
    %313 = vmatprep.subr.mxu0 0.0
    %314 = vmatpush1.xpose.msra.mxu0 %v311
    %315 = vmatprep.subr.mxu0 0.0
    %316 = vmatpush1.xpose.msra.mxu0 0.0
    %317 = vmatprep.subr.mxu0 0.0
    %318 = vmatpush1.xpose.msra.mxu0 0.0
    %319 = vmatprep.subr.mxu0 0.0
    %320 = vmatpush1.xpose.msra.mxu0 0.0
    %321 = vmatprep.subr.mxu0 0.0
    %322 = vmatpush1.xpose.msra.mxu0 0.0
    %323 = vmatprep.subr.mxu0 0.0
    %324 = vmatpush1.xpose.msra.mxu0 0.0
    %325 = vmatprep.subr.mxu0 0.0
    %326 = vmatpush1.xpose.msra.mxu0 0.0
    %327 = vmatprep.subr.mxu0 0.0
    %328 = vmatpush1.xpose.msra.mxu0 0.0
    %329 = vmatprep.subr.mxu0 0.0
    %330 = vmatpush1.xpose.msra.mxu0 0.0
    %331 = vmatprep.subr.mxu0 0.0
    %332 = vmatpush1.xpose.msra.mxu0 0.0
    %333 = vmatprep.subr.mxu0 0.0
    %334 = vmatpush1.xpose.msra.mxu0 0.0
    %335 = vmatprep.subr.mxu0 0.0
    %336 = vmatpush1.xpose.msra.mxu0 0.0
    %337 = vmatprep.subr.mxu0 0.0
    %338 = vmatpush1.xpose.msra.mxu0 0.0
    %339 = vmatprep.subr.mxu0 0.0
    %340 = vmatpush1.xpose.msra.mxu0 0.0
    %341 = vmatprep.subr.mxu0 0.0
    %342 = vmatpush1.xpose.msra.mxu0 0.0
    %343 = vmatprep.subr.mxu0 0.0
    %344 = vmatpush1.xpose.msra.mxu0 0.0
    %345 = vmatprep.subr.mxu0 0.0
    %346 = vmatpush1.xpose.msra.mxu0 0.0
    %347 = vmatprep.subr.mxu0 0.0
    %348 = vmatpush1.xpose.msra.mxu0 0.0
    %349 = vmatprep.subr.mxu0 0.0
    %350 = vmatpush1.xpose.msra.mxu0 0.0
    %351 = vmatprep.subr.mxu0 0.0
    %352 = vmatpush1.xpose.msra.mxu0 0.0
    %353 = vmatprep.subr.mxu0 0.0
    %354 = vmatpush1.xpose.msra.mxu0 0.0
    %355 = vmatprep.subr.mxu0 0.0
    %356 = vmatpush1.xpose.msra.mxu0 0.0
    %357 = vmatprep.subr.mxu0 0.0
    %358 = vmatpush1.xpose.msra.mxu0 0.0
    %359 = vmatprep.subr.mxu0 0.0
    %360 = vmatpush1.xpose.msra.mxu0 0.0
    %361 = vmatprep.subr.mxu0 0.0
    %362 = vmatpush1.xpose.msra.mxu0 0.0
    %363 = vmatprep.subr.mxu0 0.0
    %364 = vmatpush1.xpose.msra.mxu0 0.0
    %365 = vmatprep.subr.mxu0 0.0
    %366 = vmatpush1.xpose.msra.mxu0 0.0
    %367 = vmatprep.subr.mxu0 0.0
    %368 = vmatpush1.xpose.msra.mxu0 0.0
    %369 = vmatprep.subr.mxu0 0.0
    %370 = vmatpush1.xpose.msra.mxu0 0.0
    %371 = vmatprep.subr.mxu0 0.0
    %372 = vmatpush1.xpose.msra.mxu0 0.0
    %373 = vmatprep.subr.mxu0 0.0
    %374 = vmatpush1.xpose.msra.mxu0 0.0
    %375 = vmatprep.subr.mxu0 0.0
    %376 = vmatpush1.xpose.msra.mxu0 0.0
    %377 = vmatprep.mubr.f32.mxu0 0.0
    %378 = vmatmul.mubr.f32.gmra.mrb[0].mxu0 %v308
    %v379 = vpop.f32.mrb[0].mxu0
    %v380 = vadd.f32 %v44, %v379
    %v381 = vpop.f32.mrb[0].mxu0
    %382 = vdwg.mxu0
    %v384 = vsel %vm306, %v133, 0
    %v387 = vsel %vm306, %v218, 0
    %389 = vmatprep.subr.mxu0 0.0
    %390 = vmatpush1.xpose.msra.mxu0 %v387
    %391 = vmatprep.subr.mxu0 0.0
    %392 = vmatpush1.xpose.msra.mxu0 0.0
    %393 = vmatprep.subr.mxu0 0.0
    %394 = vmatpush1.xpose.msra.mxu0 0.0
    %395 = vmatprep.subr.mxu0 0.0
    %396 = vmatpush1.xpose.msra.mxu0 0.0
    %397 = vmatprep.subr.mxu0 0.0
    %398 = vmatpush1.xpose.msra.mxu0 0.0
    %399 = vmatprep.subr.mxu0 0.0
    %400 = vmatpush1.xpose.msra.mxu0 0.0
    %401 = vmatprep.subr.mxu0 0.0
    %402 = vmatpush1.xpose.msra.mxu0 0.0
    %403 = vmatprep.subr.mxu0 0.0
    %404 = vmatpush1.xpose.msra.mxu0 0.0
    %405 = vmatprep.subr.mxu0 0.0
    %406 = vmatpush1.xpose.msra.mxu0 0.0
    %407 = vmatprep.subr.mxu0 0.0
    %408 = vmatpush1.xpose.msra.mxu0 0.0
    %409 = vmatprep.subr.mxu0 0.0
    %410 = vmatpush1.xpose.msra.mxu0 0.0
    %411 = vmatprep.subr.mxu0 0.0
    %412 = vmatpush1.xpose.msra.mxu0 0.0
    %413 = vmatprep.subr.mxu0 0.0
    %414 = vmatpush1.xpose.msra.mxu0 0.0
    %415 = vmatprep.subr.mxu0 0.0
    %416 = vmatpush1.xpose.msra.mxu0 0.0
    %417 = vmatprep.subr.mxu0 0.0
    %418 = vmatpush1.xpose.msra.mxu0 0.0
    %419 = vmatprep.subr.mxu0 0.0
    %420 = vmatpush1.xpose.msra.mxu0 0.0
    %421 = vmatprep.subr.mxu0 0.0
    %422 = vmatpush1.xpose.msra.mxu0 0.0
    %423 = vmatprep.subr.mxu0 0.0
    %424 = vmatpush1.xpose.msra.mxu0 0.0
    %425 = vmatprep.subr.mxu0 0.0
    %426 = vmatpush1.xpose.msra.mxu0 0.0
    %427 = vmatprep.subr.mxu0 0.0
    %428 = vmatpush1.xpose.msra.mxu0 0.0
    %429 = vmatprep.subr.mxu0 0.0
    %430 = vmatpush1.xpose.msra.mxu0 0.0
    %431 = vmatprep.subr.mxu0 0.0
    %432 = vmatpush1.xpose.msra.mxu0 0.0
    %433 = vmatprep.subr.mxu0 0.0
    %434 = vmatpush1.xpose.msra.mxu0 0.0
    %435 = vmatprep.subr.mxu0 0.0
    %436 = vmatpush1.xpose.msra.mxu0 0.0
    %437 = vmatprep.subr.mxu0 0.0
    %438 = vmatpush1.xpose.msra.mxu0 0.0
    %439 = vmatprep.subr.mxu0 0.0
    %440 = vmatpush1.xpose.msra.mxu0 0.0
    %441 = vmatprep.subr.mxu0 0.0
    %442 = vmatpush1.xpose.msra.mxu0 0.0
    %443 = vmatprep.subr.mxu0 0.0
    %444 = vmatpush1.xpose.msra.mxu0 0.0
    %445 = vmatprep.subr.mxu0 0.0
    %446 = vmatpush1.xpose.msra.mxu0 0.0
    %447 = vmatprep.subr.mxu0 0.0
    %448 = vmatpush1.xpose.msra.mxu0 0.0
    %449 = vmatprep.subr.mxu0 0.0
    %450 = vmatpush1.xpose.msra.mxu0 0.0
    %451 = vmatprep.subr.mxu0 0.0
    %452 = vmatpush1.xpose.msra.mxu0 0.0
    %453 = vmatprep.mubr.f32.mxu0 0.0
    %454 = vmatmul.mubr.f32.gmra.mrb[0].mxu0 %v384
    %v455 = vpop.f32.mrb[0].mxu0
    %v456 = vadd.f32 %v44, %v455
    %v457 = vpop.f32.mrb[0].mxu0
    %458 = vdwg.mxu0
    %v459 = vsel %vm306, %v380, -inf
    %460 = vmax.xlane.f32.xlu0 %v459
    %v461 = vpop.xlane.xlu0 %460
    %v462 = vsel %vm306, %v456, -inf
    %463 = vmax.xlane.f32.xlu0 %v462
    %v464 = vpop.xlane.xlu0 %463
    %v465 = vsub.f32 %v380, %v461
    %v466 = vsub.f32 %v456, %v464
    %v467 = vmul.f32 %v465, 1.442695
    %v468 = vpow.pop %v467
    %v469 = vmul.f32 %v466, 1.442695
    %v470 = vpow.pop %v469
    %v471 = vsel %vm306, %v468, 0.0
    %472 = vadd.xlane.f32.xlu0 %v471
    %v473 = vpop.xlane.xlu0 %472
    %v474 = vsel %vm306, %v470, 0.0
    %475 = vadd.xlane.f32.xlu0 %v474
    %v476 = vpop.xlane.xlu0 %475
    %v477 = vrcp.pop %v473
    %v478 = vrcp.pop %v476
    %v479 = vmul.f32 %v468, %v477
    %v480 = vmul.f32 %v470, %v478
    %v482 = vsel %vm306, %v479, 0
    %484 = vmatprep.subr.mxu0 0.0
    %485 = vmatpush1.msra.mxu0 %v298
    %486 = vmatprep.subr.mxu0 0.0
    %487 = vmatpush1.msra.mxu0 0.0
    %488 = vmatprep.subr.mxu0 0.0
    %489 = vmatpush1.msra.mxu0 0.0
    %490 = vmatprep.subr.mxu0 0.0
    %491 = vmatpush1.msra.mxu0 0.0
    %492 = vmatprep.subr.mxu0 0.0
    %493 = vmatpush1.msra.mxu0 0.0
    %494 = vmatprep.subr.mxu0 0.0
    %495 = vmatpush1.msra.mxu0 0.0
    %496 = vmatprep.subr.mxu0 0.0
    %497 = vmatpush1.msra.mxu0 0.0
    %498 = vmatprep.subr.mxu0 0.0
    %499 = vmatpush1.msra.mxu0 0.0
    %500 = vmatprep.subr.mxu0 0.0
    %501 = vmatpush1.msra.mxu0 0.0
    %502 = vmatprep.subr.mxu0 0.0
    %503 = vmatpush1.msra.mxu0 0.0
    %504 = vmatprep.subr.mxu0 0.0
    %505 = vmatpush1.msra.mxu0 0.0
    %506 = vmatprep.subr.mxu0 0.0
    %507 = vmatpush1.msra.mxu0 0.0
    %508 = vmatprep.subr.mxu0 0.0
    %509 = vmatpush1.msra.mxu0 0.0
    %510 = vmatprep.subr.mxu0 0.0
    %511 = vmatpush1.msra.mxu0 0.0
    %512 = vmatprep.subr.mxu0 0.0
    %513 = vmatpush1.msra.mxu0 0.0
    %514 = vmatprep.subr.mxu0 0.0
    %515 = vmatpush1.msra.mxu0 0.0
    %516 = vmatprep.subr.mxu0 0.0
    %517 = vmatpush1.msra.mxu0 0.0
    %518 = vmatprep.subr.mxu0 0.0
    %519 = vmatpush1.msra.mxu0 0.0
    %520 = vmatprep.subr.mxu0 0.0
    %521 = vmatpush1.msra.mxu0 0.0
    %522 = vmatprep.subr.mxu0 0.0
    %523 = vmatpush1.msra.mxu0 0.0
    %524 = vmatprep.subr.mxu0 0.0
    %525 = vmatpush1.msra.mxu0 0.0
    %526 = vmatprep.subr.mxu0 0.0
    %527 = vmatpush1.msra.mxu0 0.0
    %528 = vmatprep.subr.mxu0 0.0
    %529 = vmatpush1.msra.mxu0 0.0
    %530 = vmatprep.subr.mxu0 0.0
    %531 = vmatpush1.msra.mxu0 0.0
    %532 = vmatprep.subr.mxu0 0.0
    %533 = vmatpush1.msra.mxu0 0.0
    %534 = vmatprep.subr.mxu0 0.0
    %535 = vmatpush1.msra.mxu0 0.0
    %536 = vmatprep.subr.mxu0 0.0
    %537 = vmatpush1.msra.mxu0 0.0
    %538 = vmatprep.subr.mxu0 0.0
    %539 = vmatpush1.msra.mxu0 0.0
    %540 = vmatprep.subr.mxu0 0.0
    %541 = vmatpush1.msra.mxu0 0.0
    %542 = vmatprep.subr.mxu0 0.0
    %543 = vmatpush1.msra.mxu0 0.0
    %544 = vmatprep.subr.mxu0 0.0
    %545 = vmatpush1.msra.mxu0 0.0
    %546 = vmatprep.subr.mxu0 0.0
    %547 = vmatpush1.msra.mxu0 0.0
    %548 = vmatprep.mubr.f32.mxu0 0.0
    %549 = vmatmul.mubr.f32.gmra.mrb[0].mxu0 %v482
    %v550 = vpop.f32.mrb[0].mxu0
    %v551 = vadd.f32 0.0, %v550
    %v552 = vpop.f32.mrb[0].mxu0
    %553 = vdwg.mxu0
    %v555 = vsel %vm306, %v480, 0
    %557 = vmatprep.subr.mxu0 0.0
    %558 = vmatpush1.msra.mxu0 %v303
    %559 = vmatprep.subr.mxu0 0.0
    %560 = vmatpush1.msra.mxu0 0.0
    %561 = vmatprep.subr.mxu0 0.0
    %562 = vmatpush1.msra.mxu0 0.0
    %563 = vmatprep.subr.mxu0 0.0
    %564 = vmatpush1.msra.mxu0 0.0
    %565 = vmatprep.subr.mxu0 0.0
    %566 = vmatpush1.msra.mxu0 0.0
    %567 = vmatprep.subr.mxu0 0.0
    %568 = vmatpush1.msra.mxu0 0.0
    %569 = vmatprep.subr.mxu0 0.0
    %570 = vmatpush1.msra.mxu0 0.0
    %571 = vmatprep.subr.mxu0 0.0
    %572 = vmatpush1.msra.mxu0 0.0
    %573 = vmatprep.subr.mxu0 0.0
    %574 = vmatpush1.msra.mxu0 0.0
    %575 = vmatprep.subr.mxu0 0.0
    %576 = vmatpush1.msra.mxu0 0.0
    %577 = vmatprep.subr.mxu0 0.0
    %578 = vmatpush1.msra.mxu0 0.0
    %579 = vmatprep.subr.mxu0 0.0
    %580 = vmatpush1.msra.mxu0 0.0
    %581 = vmatprep.subr.mxu0 0.0
    %582 = vmatpush1.msra.mxu0 0.0
    %583 = vmatprep.subr.mxu0 0.0
    %584 = vmatpush1.msra.mxu0 0.0
    %585 = vmatprep.subr.mxu0 0.0
    %586 = vmatpush1.msra.mxu0 0.0
    %587 = vmatprep.subr.mxu0 0.0
    %588 = vmatpush1.msra.mxu0 0.0
    %589 = vmatprep.subr.mxu0 0.0
    %590 = vmatpush1.msra.mxu0 0.0
    %591 = vmatprep.subr.mxu0 0.0
    %592 = vmatpush1.msra.mxu0 0.0
    %593 = vmatprep.subr.mxu0 0.0
    %594 = vmatpush1.msra.mxu0 0.0
    %595 = vmatprep.subr.mxu0 0.0
    %596 = vmatpush1.msra.mxu0 0.0
    %597 = vmatprep.subr.mxu0 0.0
    %598 = vmatpush1.msra.mxu0 0.0
    %599 = vmatprep.subr.mxu0 0.0
    %600 = vmatpush1.msra.mxu0 0.0
    %601 = vmatprep.subr.mxu0 0.0
    %602 = vmatpush1.msra.mxu0 0.0
    %603 = vmatprep.subr.mxu0 0.0
    %604 = vmatpush1.msra.mxu0 0.0
    %605 = vmatprep.subr.mxu0 0.0
    %606 = vmatpush1.msra.mxu0 0.0
    %607 = vmatprep.subr.mxu0 0.0
    %608 = vmatpush1.msra.mxu0 0.0
    %609 = vmatprep.subr.mxu0 0.0
    %610 = vmatpush1.msra.mxu0 0.0
    %611 = vmatprep.subr.mxu0 0.0
    %612 = vmatpush1.msra.mxu0 0.0
    %613 = vmatprep.subr.mxu0 0.0
    %614 = vmatpush1.msra.mxu0 0.0
    %615 = vmatprep.subr.mxu0 0.0
    %616 = vmatpush1.msra.mxu0 0.0
    %617 = vmatprep.subr.mxu0 0.0
    %618 = vmatpush1.msra.mxu0 0.0
    %619 = vmatprep.subr.mxu0 0.0
    %620 = vmatpush1.msra.mxu0 0.0
    %621 = vmatprep.mubr.f32.mxu0 0.0
    %622 = vmatmul.mubr.f32.gmra.mrb[0].mxu0 %v555
    %v623 = vpop.f32.mrb[0].mxu0
    %v624 = vadd.f32 0.0, %v623
    %v625 = vpop.f32.mrb[0].mxu0
    %626 = vdwg.mxu0
    %627 = vrot.lane.b32.xlu0 %v128, 120
    %v628 = vpop.permute.xlu0 %627
    %629 = vrot.lane.b32.xlu0 %v213, 120
    %v630 = vpop.permute.xlu0 %629
    %v631 = vsel %vm306, %v628, 0
    %v633 = vsel %vm306, %v630, 0
    %635 = vmatprep.subr.mxu0 0.0
    %636 = vmatpush1.xpose.msra.mxu0 %v633
    %637 = vmatprep.subr.mxu0 0.0
    %638 = vmatpush1.xpose.msra.mxu0 0.0
    %639 = vmatprep.subr.mxu0 0.0
    %640 = vmatpush1.xpose.msra.mxu0 0.0
    %641 = vmatprep.subr.mxu0 0.0
    %642 = vmatpush1.xpose.msra.mxu0 0.0
    %643 = vmatprep.subr.mxu0 0.0
    %644 = vmatpush1.xpose.msra.mxu0 0.0
    %645 = vmatprep.subr.mxu0 0.0
    %646 = vmatpush1.xpose.msra.mxu0 0.0
    %647 = vmatprep.subr.mxu0 0.0
    %648 = vmatpush1.xpose.msra.mxu0 0.0
    %649 = vmatprep.subr.mxu0 0.0
    %650 = vmatpush1.xpose.msra.mxu0 0.0
    %651 = vmatprep.subr.mxu0 0.0
    %652 = vmatpush1.xpose.msra.mxu0 0.0
    %653 = vmatprep.subr.mxu0 0.0
    %654 = vmatpush1.xpose.msra.mxu0 0.0
    %655 = vmatprep.subr.mxu0 0.0
    %656 = vmatpush1.xpose.msra.mxu0 0.0
    %657 = vmatprep.subr.mxu0 0.0
    %658 = vmatpush1.xpose.msra.mxu0 0.0
    %659 = vmatprep.subr.mxu0 0.0
    %660 = vmatpush1.xpose.msra.mxu0 0.0
    %661 = vmatprep.subr.mxu0 0.0
    %662 = vmatpush1.xpose.msra.mxu0 0.0
    %663 = vmatprep.subr.mxu0 0.0
    %664 = vmatpush1.xpose.msra.mxu0 0.0
    %665 = vmatprep.subr.mxu0 0.0
    %666 = vmatpush1.xpose.msra.mxu0 0.0
    %667 = vmatprep.subr.mxu0 0.0
    %668 = vmatpush1.xpose.msra.mxu0 0.0
    %669 = vmatprep.subr.mxu0 0.0
    %670 = vmatpush1.xpose.msra.mxu0 0.0
    %671 = vmatprep.subr.mxu0 0.0
    %672 = vmatpush1.xpose.msra.mxu0 0.0
    %673 = vmatprep.subr.mxu0 0.0
    %674 = vmatpush1.xpose.msra.mxu0 0.0
    %675 = vmatprep.subr.mxu0 0.0
    %676 = vmatpush1.xpose.msra.mxu0 0.0
    %677 = vmatprep.subr.mxu0 0.0
    %678 = vmatpush1.xpose.msra.mxu0 0.0
    %679 = vmatprep.subr.mxu0 0.0
    %680 = vmatpush1.xpose.msra.mxu0 0.0
    %681 = vmatprep.subr.mxu0 0.0
    %682 = vmatpush1.xpose.msra.mxu0 0.0
    %683 = vmatprep.subr.mxu0 0.0
    %684 = vmatpush1.xpose.msra.mxu0 0.0
    %685 = vmatprep.subr.mxu0 0.0
    %686 = vmatpush1.xpose.msra.mxu0 0.0
    %687 = vmatprep.subr.mxu0 0.0
    %688 = vmatpush1.xpose.msra.mxu0 0.0
    %689 = vmatprep.subr.mxu0 0.0
    %690 = vmatpush1.xpose.msra.mxu0 0.0
    %691 = vmatprep.subr.mxu0 0.0
    %692 = vmatpush1.xpose.msra.mxu0 0.0
    %693 = vmatprep.subr.mxu0 0.0
    %694 = vmatpush1.xpose.msra.mxu0 0.0
    %695 = vmatprep.subr.mxu0 0.0
    %696 = vmatpush1.xpose.msra.mxu0 0.0
    %697 = vmatprep.subr.mxu0 0.0
    %698 = vmatpush1.xpose.msra.mxu0 0.0
    %699 = vmatprep.mubr.f32.mxu0 0.0
    %700 = vmatmul.mubr.f32.gmra.mrb[0].mxu0 %v631
    %v701 = vpop.f32.mrb[0].mxu0
    %v702 = vadd.f32 %v44, %v701
    %v703 = vpop.f32.mrb[0].mxu0
    %704 = vdwg.mxu0
    %705 = vrot.lane.b32.xlu0 %v133, 120
    %v706 = vpop.permute.xlu0 %705
    %707 = vrot.lane.b32.xlu0 %v218, 120
    %v708 = vpop.permute.xlu0 %707
    %v709 = vsel %vm306, %v706, 0
    %v711 = vsel %vm306, %v708, 0
    %713 = vmatprep.subr.mxu0 0.0
    %714 = vmatpush1.xpose.msra.mxu0 %v711
    %715 = vmatprep.subr.mxu0 0.0
    %716 = vmatpush1.xpose.msra.mxu0 0.0
    %717 = vmatprep.subr.mxu0 0.0
    %718 = vmatpush1.xpose.msra.mxu0 0.0
    %719 = vmatprep.subr.mxu0 0.0
    %720 = vmatpush1.xpose.msra.mxu0 0.0
    %721 = vmatprep.subr.mxu0 0.0
    %722 = vmatpush1.xpose.msra.mxu0 0.0
    %723 = vmatprep.subr.mxu0 0.0
    %724 = vmatpush1.xpose.msra.mxu0 0.0
    %725 = vmatprep.subr.mxu0 0.0
    %726 = vmatpush1.xpose.msra.mxu0 0.0
    %727 = vmatprep.subr.mxu0 0.0
    %728 = vmatpush1.xpose.msra.mxu0 0.0
    %729 = vmatprep.subr.mxu0 0.0
    %730 = vmatpush1.xpose.msra.mxu0 0.0
    %731 = vmatprep.subr.mxu0 0.0
    %732 = vmatpush1.xpose.msra.mxu0 0.0
    %733 = vmatprep.subr.mxu0 0.0
    %734 = vmatpush1.xpose.msra.mxu0 0.0
    %735 = vmatprep.subr.mxu0 0.0
    %736 = vmatpush1.xpose.msra.mxu0 0.0
    %737 = vmatprep.subr.mxu0 0.0
    %738 = vmatpush1.xpose.msra.mxu0 0.0
    %739 = vmatprep.subr.mxu0 0.0
    %740 = vmatpush1.xpose.msra.mxu0 0.0
    %741 = vmatprep.subr.mxu0 0.0
    %742 = vmatpush1.xpose.msra.mxu0 0.0
    %743 = vmatprep.subr.mxu0 0.0
    %744 = vmatpush1.xpose.msra.mxu0 0.0
    %745 = vmatprep.subr.mxu0 0.0
    %746 = vmatpush1.xpose.msra.mxu0 0.0
    %747 = vmatprep.subr.mxu0 0.0
    %748 = vmatpush1.xpose.msra.mxu0 0.0
    %749 = vmatprep.subr.mxu0 0.0
    %750 = vmatpush1.xpose.msra.mxu0 0.0
    %751 = vmatprep.subr.mxu0 0.0
    %752 = vmatpush1.xpose.msra.mxu0 0.0
    %753 = vmatprep.subr.mxu0 0.0
    %754 = vmatpush1.xpose.msra.mxu0 0.0
    %755 = vmatprep.subr.mxu0 0.0
    %756 = vmatpush1.xpose.msra.mxu0 0.0
    %757 = vmatprep.subr.mxu0 0.0
    %758 = vmatpush1.xpose.msra.mxu0 0.0
    %759 = vmatprep.subr.mxu0 0.0
    %760 = vmatpush1.xpose.msra.mxu0 0.0
    %761 = vmatprep.subr.mxu0 0.0
    %762 = vmatpush1.xpose.msra.mxu0 0.0
    %763 = vmatprep.subr.mxu0 0.0
    %764 = vmatpush1.xpose.msra.mxu0 0.0
    %765 = vmatprep.subr.mxu0 0.0
    %766 = vmatpush1.xpose.msra.mxu0 0.0
    %767 = vmatprep.subr.mxu0 0.0
    %768 = vmatpush1.xpose.msra.mxu0 0.0
    %769 = vmatprep.subr.mxu0 0.0
    %770 = vmatpush1.xpose.msra.mxu0 0.0
    %771 = vmatprep.subr.mxu0 0.0
    %772 = vmatpush1.xpose.msra.mxu0 0.0
    %773 = vmatprep.subr.mxu0 0.0
    %774 = vmatpush1.xpose.msra.mxu0 0.0
    %775 = vmatprep.subr.mxu0 0.0
    %776 = vmatpush1.xpose.msra.mxu0 0.0
    %777 = vmatprep.mubr.f32.mxu0 0.0
    %778 = vmatmul.mubr.f32.gmra.mrb[0].mxu0 %v709
    %v779 = vpop.f32.mrb[0].mxu0
    %v780 = vadd.f32 %v44, %v779
    %v781 = vpop.f32.mrb[0].mxu0
    %782 = vdwg.mxu0
    %v783 = vsel %vm306, %v702, -inf
    %784 = vmax.xlane.f32.xlu0 %v783
    %v785 = vpop.xlane.xlu0 %784
    %v786 = vsel %vm306, %v780, -inf
    %787 = vmax.xlane.f32.xlu0 %v786
    %v788 = vpop.xlane.xlu0 %787
    %v789 = vsub.f32 %v702, %v785
    %v790 = vsub.f32 %v780, %v788
    %v791 = vmul.f32 %v789, 1.442695
    %v792 = vpow.pop %v791
    %v793 = vmul.f32 %v790, 1.442695
    %v794 = vpow.pop %v793
    %v795 = vsel %vm306, %v792, 0.0
    %796 = vadd.xlane.f32.xlu0 %v795
    %v797 = vpop.xlane.xlu0 %796
    %v798 = vsel %vm306, %v794, 0.0
    %799 = vadd.xlane.f32.xlu0 %v798
    %v800 = vpop.xlane.xlu0 %799
    %v801 = vrcp.pop %v797
    %v802 = vrcp.pop %v800
    %v803 = vmul.f32 %v792, %v801
    %v804 = vmul.f32 %v794, %v802
    %806 = vrot.lane.b32.xlu0 %v298, 120
    %v807 = vpop.permute.xlu0 %806
    %v810 = vsel %vm306, %v803, 0
    %812 = vmatprep.subr.mxu0 0.0
    %813 = vmatpush1.msra.mxu0 %v807
    %814 = vmatprep.subr.mxu0 0.0
    %815 = vmatpush1.msra.mxu0 0.0
    %816 = vmatprep.subr.mxu0 0.0
    %817 = vmatpush1.msra.mxu0 0.0
    %818 = vmatprep.subr.mxu0 0.0
    %819 = vmatpush1.msra.mxu0 0.0
    %820 = vmatprep.subr.mxu0 0.0
    %821 = vmatpush1.msra.mxu0 0.0
    %822 = vmatprep.subr.mxu0 0.0
    %823 = vmatpush1.msra.mxu0 0.0
    %824 = vmatprep.subr.mxu0 0.0
    %825 = vmatpush1.msra.mxu0 0.0
    %826 = vmatprep.subr.mxu0 0.0
    %827 = vmatpush1.msra.mxu0 0.0
    %828 = vmatprep.subr.mxu0 0.0
    %829 = vmatpush1.msra.mxu0 0.0
    %830 = vmatprep.subr.mxu0 0.0
    %831 = vmatpush1.msra.mxu0 0.0
    %832 = vmatprep.subr.mxu0 0.0
    %833 = vmatpush1.msra.mxu0 0.0
    %834 = vmatprep.subr.mxu0 0.0
    %835 = vmatpush1.msra.mxu0 0.0
    %836 = vmatprep.subr.mxu0 0.0
    %837 = vmatpush1.msra.mxu0 0.0
    %838 = vmatprep.subr.mxu0 0.0
    %839 = vmatpush1.msra.mxu0 0.0
    %840 = vmatprep.subr.mxu0 0.0
    %841 = vmatpush1.msra.mxu0 0.0
    %842 = vmatprep.subr.mxu0 0.0
    %843 = vmatpush1.msra.mxu0 0.0
    %844 = vmatprep.subr.mxu0 0.0
    %845 = vmatpush1.msra.mxu0 0.0
    %846 = vmatprep.subr.mxu0 0.0
    %847 = vmatpush1.msra.mxu0 0.0
    %848 = vmatprep.subr.mxu0 0.0
    %849 = vmatpush1.msra.mxu0 0.0
    %850 = vmatprep.subr.mxu0 0.0
    %851 = vmatpush1.msra.mxu0 0.0
    %852 = vmatprep.subr.mxu0 0.0
    %853 = vmatpush1.msra.mxu0 0.0
    %854 = vmatprep.subr.mxu0 0.0
    %855 = vmatpush1.msra.mxu0 0.0
    %856 = vmatprep.subr.mxu0 0.0
    %857 = vmatpush1.msra.mxu0 0.0
    %858 = vmatprep.subr.mxu0 0.0
    %859 = vmatpush1.msra.mxu0 0.0
    %860 = vmatprep.subr.mxu0 0.0
    %861 = vmatpush1.msra.mxu0 0.0
    %862 = vmatprep.subr.mxu0 0.0
    %863 = vmatpush1.msra.mxu0 0.0
    %864 = vmatprep.subr.mxu0 0.0
    %865 = vmatpush1.msra.mxu0 0.0
    %866 = vmatprep.subr.mxu0 0.0
    %867 = vmatpush1.msra.mxu0 0.0
    %868 = vmatprep.subr.mxu0 0.0
    %869 = vmatpush1.msra.mxu0 0.0
    %870 = vmatprep.subr.mxu0 0.0
    %871 = vmatpush1.msra.mxu0 0.0
    %872 = vmatprep.subr.mxu0 0.0
    %873 = vmatpush1.msra.mxu0 0.0
    %874 = vmatprep.subr.mxu0 0.0
    %875 = vmatpush1.msra.mxu0 0.0
    %876 = vmatprep.mubr.f32.mxu0 0.0
    %877 = vmatmul.mubr.f32.gmra.mrb[0].mxu0 %v810
    %v878 = vpop.f32.mrb[0].mxu0
    %v879 = vadd.f32 0.0, %v878
    %v880 = vpop.f32.mrb[0].mxu0
    %881 = vdwg.mxu0
    %883 = vrot.lane.b32.xlu0 %v303, 120
    %v884 = vpop.permute.xlu0 %883
    %v887 = vsel %vm306, %v804, 0
    %889 = vmatprep.subr.mxu0 0.0
    %890 = vmatpush1.msra.mxu0 %v884
    %891 = vmatprep.subr.mxu0 0.0
    %892 = vmatpush1.msra.mxu0 0.0
    %893 = vmatprep.subr.mxu0 0.0
    %894 = vmatpush1.msra.mxu0 0.0
    %895 = vmatprep.subr.mxu0 0.0
    %896 = vmatpush1.msra.mxu0 0.0
    %897 = vmatprep.subr.mxu0 0.0
    %898 = vmatpush1.msra.mxu0 0.0
    %899 = vmatprep.subr.mxu0 0.0
    %900 = vmatpush1.msra.mxu0 0.0
    %901 = vmatprep.subr.mxu0 0.0
    %902 = vmatpush1.msra.mxu0 0.0
    %903 = vmatprep.subr.mxu0 0.0
    %904 = vmatpush1.msra.mxu0 0.0
    %905 = vmatprep.subr.mxu0 0.0
    %906 = vmatpush1.msra.mxu0 0.0
    %907 = vmatprep.subr.mxu0 0.0
    %908 = vmatpush1.msra.mxu0 0.0
    %909 = vmatprep.subr.mxu0 0.0
    %910 = vmatpush1.msra.mxu0 0.0
    %911 = vmatprep.subr.mxu0 0.0
    %912 = vmatpush1.msra.mxu0 0.0
    %913 = vmatprep.subr.mxu0 0.0
    %914 = vmatpush1.msra.mxu0 0.0
    %915 = vmatprep.subr.mxu0 0.0
    %916 = vmatpush1.msra.mxu0 0.0
    %917 = vmatprep.subr.mxu0 0.0
    %918 = vmatpush1.msra.mxu0 0.0
    %919 = vmatprep.subr.mxu0 0.0
    %920 = vmatpush1.msra.mxu0 0.0
    %921 = vmatprep.subr.mxu0 0.0
    %922 = vmatpush1.msra.mxu0 0.0
    %923 = vmatprep.subr.mxu0 0.0
    %924 = vmatpush1.msra.mxu0 0.0
    %925 = vmatprep.subr.mxu0 0.0
    %926 = vmatpush1.msra.mxu0 0.0
    %927 = vmatprep.subr.mxu0 0.0
    %928 = vmatpush1.msra.mxu0 0.0
    %929 = vmatprep.subr.mxu0 0.0
    %930 = vmatpush1.msra.mxu0 0.0
    %931 = vmatprep.subr.mxu0 0.0
    %932 = vmatpush1.msra.mxu0 0.0
    %933 = vmatprep.subr.mxu0 0.0
    %934 = vmatpush1.msra.mxu0 0.0
    %935 = vmatprep.subr.mxu0 0.0
    %936 = vmatpush1.msra.mxu0 0.0
    %937 = vmatprep.subr.mxu0 0.0
    %938 = vmatpush1.msra.mxu0 0.0
    %939 = vmatprep.subr.mxu0 0.0
    %940 = vmatpush1.msra.mxu0 0.0
    %941 = vmatprep.subr.mxu0 0.0
    %942 = vmatpush1.msra.mxu0 0.0
    %943 = vmatprep.subr.mxu0 0.0
    %944 = vmatpush1.msra.mxu0 0.0
    %945 = vmatprep.subr.mxu0 0.0
    %946 = vmatpush1.msra.mxu0 0.0
    %947 = vmatprep.subr.mxu0 0.0
    %948 = vmatpush1.msra.mxu0 0.0
    %949 = vmatprep.subr.mxu0 0.0
    %950 = vmatpush1.msra.mxu0 0.0
    %951 = vmatprep.subr.mxu0 0.0
    %952 = vmatpush1.msra.mxu0 0.0
    %953 = vmatprep.mubr.f32.mxu0 0.0
    %954 = vmatmul.mubr.f32.gmra.mrb[0].mxu0 %v887
    %v955 = vpop.f32.mrb[0].mxu0
    %v956 = vadd.f32 0.0, %v955
    %v957 = vpop.f32.mrb[0].mxu0
    %958 = vdwg.mxu0
    %959 = vrot.lane.b32.xlu0 %v128, 112
    %v960 = vpop.permute.xlu0 %959
    %961 = vrot.lane.b32.xlu0 %v213, 112
    %v962 = vpop.permute.xlu0 %961
    %v963 = vsel %vm306, %v960, 0
    %v965 = vsel %vm306, %v962, 0
    %967 = vmatprep.subr.mxu0 0.0
    %968 = vmatpush1.xpose.msra.mxu0 %v965
    %969 = vmatprep.subr.mxu0 0.0
    %970 = vmatpush1.xpose.msra.mxu0 0.0
    %971 = vmatprep.subr.mxu0 0.0
    %972 = vmatpush1.xpose.msra.mxu0 0.0
    %973 = vmatprep.subr.mxu0 0.0
    %974 = vmatpush1.xpose.msra.mxu0 0.0
    %975 = vmatprep.subr.mxu0 0.0
    %976 = vmatpush1.xpose.msra.mxu0 0.0
    %977 = vmatprep.subr.mxu0 0.0
    %978 = vmatpush1.xpose.msra.mxu0 0.0
    %979 = vmatprep.subr.mxu0 0.0
    %980 = vmatpush1.xpose.msra.mxu0 0.0
    %981 = vmatprep.subr.mxu0 0.0
    %982 = vmatpush1.xpose.msra.mxu0 0.0
    %983 = vmatprep.subr.mxu0 0.0
    %984 = vmatpush1.xpose.msra.mxu0 0.0
    %985 = vmatprep.subr.mxu0 0.0
    %986 = vmatpush1.xpose.msra.mxu0 0.0
    %987 = vmatprep.subr.mxu0 0.0
    %988 = vmatpush1.xpose.msra.mxu0 0.0
    %989 = vmatprep.subr.mxu0 0.0
    %990 = vmatpush1.xpose.msra.mxu0 0.0
    %991 = vmatprep.subr.mxu0 0.0
    %992 = vmatpush1.xpose.msra.mxu0 0.0
    %993 = vmatprep.subr.mxu0 0.0
    %994 = vmatpush1.xpose.msra.mxu0 0.0
    %995 = vmatprep.subr.mxu0 0.0
    %996 = vmatpush1.xpose.msra.mxu0 0.0
    %997 = vmatprep.subr.mxu0 0.0
    %998 = vmatpush1.xpose.msra.mxu0 0.0
    %999 = vmatprep.subr.mxu0 0.0
    %1000 = vmatpush1.xpose.msra.mxu0 0.0
    %1001 = vmatprep.subr.mxu0 0.0
    %1002 = vmatpush1.xpose.msra.mxu0 0.0
    %1003 = vmatprep.subr.mxu0 0.0
    %1004 = vmatpush1.xpose.msra.mxu0 0.0
    %1005 = vmatprep.subr.mxu0 0.0
    %1006 = vmatpush1.xpose.msra.mxu0 0.0
    %1007 = vmatprep.subr.mxu0 0.0
    %1008 = vmatpush1.xpose.msra.mxu0 0.0
    %1009 = vmatprep.subr.mxu0 0.0
    %1010 = vmatpush1.xpose.msra.mxu0 0.0
    %1011 = vmatprep.subr.mxu0 0.0
    %1012 = vmatpush1.xpose.msra.mxu0 0.0
    %1013 = vmatprep.subr.mxu0 0.0
    %1014 = vmatpush1.xpose.msra.mxu0 0.0
    %1015 = vmatprep.subr.mxu0 0.0
    %1016 = vmatpush1.xpose.msra.mxu0 0.0
    %1017 = vmatprep.subr.mxu0 0.0
    %1018 = vmatpush1.xpose.msra.mxu0 0.0
    %1019 = vmatprep.subr.mxu0 0.0
    %1020 = vmatpush1.xpose.msra.mxu0 0.0
    %1021 = vmatprep.subr.mxu0 0.0
    %1022 = vmatpush1.xpose.msra.mxu0 0.0
    %1023 = vmatprep.subr.mxu0 0.0
    %1024 = vmatpush1.xpose.msra.mxu0 0.0
    %1025 = vmatprep.subr.mxu0 0.0
    %1026 = vmatpush1.xpose.msra.mxu0 0.0
    %1027 = vmatprep.subr.mxu0 0.0
    %1028 = vmatpush1.xpose.msra.mxu0 0.0
    %1029 = vmatprep.subr.mxu0 0.0
    %1030 = vmatpush1.xpose.msra.mxu0 0.0
    %1031 = vmatprep.mubr.f32.mxu0 0.0
    %1032 = vmatmul.mubr.f32.gmra.mrb[0].mxu0 %v963
    %v1033 = vpop.f32.mrb[0].mxu0
    %v1034 = vadd.f32 %v44, %v1033
    %v1035 = vpop.f32.mrb[0].mxu0
    %1036 = vdwg.mxu0
    %1037 = vrot.lane.b32.xlu0 %v133, 112
    %v1038 = vpop.permute.xlu0 %1037
    %1039 = vrot.lane.b32.xlu0 %v218, 112
    %v1040 = vpop.permute.xlu0 %1039
    %v1041 = vsel %vm306, %v1038, 0
    %v1043 = vsel %vm306, %v1040, 0
    %1045 = vmatprep.subr.mxu0 0.0
    %1046 = vmatpush1.xpose.msra.mxu0 %v1043
    %1047 = vmatprep.subr.mxu0 0.0
    %1048 = vmatpush1.xpose.msra.mxu0 0.0
    %1049 = vmatprep.subr.mxu0 0.0
    %1050 = vmatpush1.xpose.msra.mxu0 0.0
    %1051 = vmatprep.subr.mxu0 0.0
    %1052 = vmatpush1.xpose.msra.mxu0 0.0
    %1053 = vmatprep.subr.mxu0 0.0
    %1054 = vmatpush1.xpose.msra.mxu0 0.0
    %1055 = vmatprep.subr.mxu0 0.0
    %1056 = vmatpush1.xpose.msra.mxu0 0.0
    %1057 = vmatprep.subr.mxu0 0.0
    %1058 = vmatpush1.xpose.msra.mxu0 0.0
    %1059 = vmatprep.subr.mxu0 0.0
    %1060 = vmatpush1.xpose.msra.mxu0 0.0
    %1061 = vmatprep.subr.mxu0 0.0
    %1062 = vmatpush1.xpose.msra.mxu0 0.0
    %1063 = vmatprep.subr.mxu0 0.0
    %1064 = vmatpush1.xpose.msra.mxu0 0.0
    %1065 = vmatprep.subr.mxu0 0.0
    %1066 = vmatpush1.xpose.msra.mxu0 0.0
    %1067 = vmatprep.subr.mxu0 0.0
    %1068 = vmatpush1.xpose.msra.mxu0 0.0
    %1069 = vmatprep.subr.mxu0 0.0
    %1070 = vmatpush1.xpose.msra.mxu0 0.0
    %1071 = vmatprep.subr.mxu0 0.0
    %1072 = vmatpush1.xpose.msra.mxu0 0.0
    %1073 = vmatprep.subr.mxu0 0.0
    %1074 = vmatpush1.xpose.msra.mxu0 0.0
    %1075 = vmatprep.subr.mxu0 0.0
    %1076 = vmatpush1.xpose.msra.mxu0 0.0
    %1077 = vmatprep.subr.mxu0 0.0
    %1078 = vmatpush1.xpose.msra.mxu0 0.0
    %1079 = vmatprep.subr.mxu0 0.0
    %1080 = vmatpush1.xpose.msra.mxu0 0.0
    %1081 = vmatprep.subr.mxu0 0.0
    %1082 = vmatpush1.xpose.msra.mxu0 0.0
    %1083 = vmatprep.subr.mxu0 0.0
    %1084 = vmatpush1.xpose.msra.mxu0 0.0
    %1085 = vmatprep.subr.mxu0 0.0
    %1086 = vmatpush1.xpose.msra.mxu0 0.0
    %1087 = vmatprep.subr.mxu0 0.0
    %1088 = vmatpush1.xpose.msra.mxu0 0.0
    %1089 = vmatprep.subr.mxu0 0.0
    %1090 = vmatpush1.xpose.msra.mxu0 0.0
    %1091 = vmatprep.subr.mxu0 0.0
    %1092 = vmatpush1.xpose.msra.mxu0 0.0
    %1093 = vmatprep.subr.mxu0 0.0
    %1094 = vmatpush1.xpose.msra.mxu0 0.0
    %1095 = vmatprep.subr.mxu0 0.0
    %1096 = vmatpush1.xpose.msra.mxu0 0.0
    %1097 = vmatprep.subr.mxu0 0.0
    %1098 = vmatpush1.xpose.msra.mxu0 0.0
    %1099 = vmatprep.subr.mxu0 0.0
    %1100 = vmatpush1.xpose.msra.mxu0 0.0
    %1101 = vmatprep.subr.mxu0 0.0
    %1102 = vmatpush1.xpose.msra.mxu0 0.0
    %1103 = vmatprep.subr.mxu0 0.0
    %1104 = vmatpush1.xpose.msra.mxu0 0.0
    %1105 = vmatprep.subr.mxu0 0.0
    %1106 = vmatpush1.xpose.msra.mxu0 0.0
    %1107 = vmatprep.subr.mxu0 0.0
    %1108 = vmatpush1.xpose.msra.mxu0 0.0
    %1109 = vmatprep.mubr.f32.mxu0 0.0
    %1110 = vmatmul.mubr.f32.gmra.mrb[0].mxu0 %v1041
    %v1111 = vpop.f32.mrb[0].mxu0
    %v1112 = vadd.f32 %v44, %v1111
    %v1113 = vpop.f32.mrb[0].mxu0
    %1114 = vdwg.mxu0
    %v1115 = vsel %vm306, %v1034, -inf
    %1116 = vmax.xlane.f32.xlu0 %v1115
    %v1117 = vpop.xlane.xlu0 %1116
    %v1118 = vsel %vm306, %v1112, -inf
    %1119 = vmax.xlane.f32.xlu0 %v1118
    %v1120 = vpop.xlane.xlu0 %1119
    %v1121 = vsub.f32 %v1034, %v1117
    %v1122 = vsub.f32 %v1112, %v1120
    %v1123 = vmul.f32 %v1121, 1.442695
    %v1124 = vpow.pop %v1123
    %v1125 = vmul.f32 %v1122, 1.442695
    %v1126 = vpow.pop %v1125
    %v1127 = vsel %vm306, %v1124, 0.0
    %1128 = vadd.xlane.f32.xlu0 %v1127
    %v1129 = vpop.xlane.xlu0 %1128
    %v1130 = vsel %vm306, %v1126, 0.0
    %1131 = vadd.xlane.f32.xlu0 %v1130
    %v1132 = vpop.xlane.xlu0 %1131
    %v1133 = vrcp.pop %v1129
    %v1134 = vrcp.pop %v1132
    %v1135 = vmul.f32 %v1124, %v1133
    %v1136 = vmul.f32 %v1126, %v1134
    %1137 = vrot.lane.b32.xlu0 %v298, 112
    %v1138 = vpop.permute.xlu0 %1137
    %v1141 = vsel %vm306, %v1135, 0
    %1143 = vmatprep.subr.mxu0 0.0
    %1144 = vmatpush1.msra.mxu0 %v1138
    %1145 = vmatprep.subr.mxu0 0.0
    %1146 = vmatpush1.msra.mxu0 0.0
    %1147 = vmatprep.subr.mxu0 0.0
    %1148 = vmatpush1.msra.mxu0 0.0
    %1149 = vmatprep.subr.mxu0 0.0
    %1150 = vmatpush1.msra.mxu0 0.0
    %1151 = vmatprep.subr.mxu0 0.0
    %1152 = vmatpush1.msra.mxu0 0.0
    %1153 = vmatprep.subr.mxu0 0.0
    %1154 = vmatpush1.msra.mxu0 0.0
    %1155 = vmatprep.subr.mxu0 0.0
    %1156 = vmatpush1.msra.mxu0 0.0
    %1157 = vmatprep.subr.mxu0 0.0
    %1158 = vmatpush1.msra.mxu0 0.0
    %1159 = vmatprep.subr.mxu0 0.0
    %1160 = vmatpush1.msra.mxu0 0.0
    %1161 = vmatprep.subr.mxu0 0.0
    %1162 = vmatpush1.msra.mxu0 0.0
    %1163 = vmatprep.subr.mxu0 0.0
    %1164 = vmatpush1.msra.mxu0 0.0
    %1165 = vmatprep.subr.mxu0 0.0
    %1166 = vmatpush1.msra.mxu0 0.0
    %1167 = vmatprep.subr.mxu0 0.0
    %1168 = vmatpush1.msra.mxu0 0.0
    %1169 = vmatprep.subr.mxu0 0.0
    %1170 = vmatpush1.msra.mxu0 0.0
    %1171 = vmatprep.subr.mxu0 0.0
    %1172 = vmatpush1.msra.mxu0 0.0
    %1173 = vmatprep.subr.mxu0 0.0
    %1174 = vmatpush1.msra.mxu0 0.0
    %1175 = vmatprep.subr.mxu0 0.0
    %1176 = vmatpush1.msra.mxu0 0.0
    %1177 = vmatprep.subr.mxu0 0.0
    %1178 = vmatpush1.msra.mxu0 0.0
    %1179 = vmatprep.subr.mxu0 0.0
    %1180 = vmatpush1.msra.mxu0 0.0
    %1181 = vmatprep.subr.mxu0 0.0
    %1182 = vmatpush1.msra.mxu0 0.0
    %1183 = vmatprep.subr.mxu0 0.0
    %1184 = vmatpush1.msra.mxu0 0.0
    %1185 = vmatprep.subr.mxu0 0.0
    %1186 = vmatpush1.msra.mxu0 0.0
    %1187 = vmatprep.subr.mxu0 0.0
    %1188 = vmatpush1.msra.mxu0 0.0
    %1189 = vmatprep.subr.mxu0 0.0
    %1190 = vmatpush1.msra.mxu0 0.0
    %1191 = vmatprep.subr.mxu0 0.0
    %1192 = vmatpush1.msra.mxu0 0.0
    %1193 = vmatprep.subr.mxu0 0.0
    %1194 = vmatpush1.msra.mxu0 0.0
    %1195 = vmatprep.subr.mxu0 0.0
    %1196 = vmatpush1.msra.mxu0 0.0
    %1197 = vmatprep.subr.mxu0 0.0
    %1198 = vmatpush1.msra.mxu0 0.0
    %1199 = vmatprep.subr.mxu0 0.0
    %1200 = vmatpush1.msra.mxu0 0.0
    %1201 = vmatprep.subr.mxu0 0.0
    %1202 = vmatpush1.msra.mxu0 0.0
    %1203 = vmatprep.subr.mxu0 0.0
    %1204 = vmatpush1.msra.mxu0 0.0
    %1205 = vmatprep.subr.mxu0 0.0
    %1206 = vmatpush1.msra.mxu0 0.0
    %1207 = vmatprep.mubr.f32.mxu0 0.0
    %1208 = vmatmul.mubr.f32.gmra.mrb[0].mxu0 %v1141
    %v1209 = vpop.f32.mrb[0].mxu0
    %v1210 = vadd.f32 0.0, %v1209
    %v1211 = vpop.f32.mrb[0].mxu0
    %1212 = vdwg.mxu0
    %1213 = vrot.lane.b32.xlu0 %v303, 112
    %v1214 = vpop.permute.xlu0 %1213
    %v1217 = vsel %vm306, %v1136, 0
    %1219 = vmatprep.subr.mxu0 0.0
    %1220 = vmatpush1.msra.mxu0 %v1214
    %1221 = vmatprep.subr.mxu0 0.0
    %1222 = vmatpush1.msra.mxu0 0.0
    %1223 = vmatprep.subr.mxu0 0.0
    %1224 = vmatpush1.msra.mxu0 0.0
    %1225 = vmatprep.subr.mxu0 0.0
    %1226 = vmatpush1.msra.mxu0 0.0
    %1227 = vmatprep.subr.mxu0 0.0
    %1228 = vmatpush1.msra.mxu0 0.0
    %1229 = vmatprep.subr.mxu0 0.0
    %1230 = vmatpush1.msra.mxu0 0.0
    %1231 = vmatprep.subr.mxu0 0.0
    %1232 = vmatpush1.msra.mxu0 0.0
    %1233 = vmatprep.subr.mxu0 0.0
    %1234 = vmatpush1.msra.mxu0 0.0
    %1235 = vmatprep.subr.mxu0 0.0
    %1236 = vmatpush1.msra.mxu0 0.0
    %1237 = vmatprep.subr.mxu0 0.0
    %1238 = vmatpush1.msra.mxu0 0.0
    %1239 = vmatprep.subr.mxu0 0.0
    %1240 = vmatpush1.msra.mxu0 0.0
    %1241 = vmatprep.subr.mxu0 0.0
    %1242 = vmatpush1.msra.mxu0 0.0
    %1243 = vmatprep.subr.mxu0 0.0
    %1244 = vmatpush1.msra.mxu0 0.0
    %1245 = vmatprep.subr.mxu0 0.0
    %1246 = vmatpush1.msra.mxu0 0.0
    %1247 = vmatprep.subr.mxu0 0.0
    %1248 = vmatpush1.msra.mxu0 0.0
    %1249 = vmatprep.subr.mxu0 0.0
    %1250 = vmatpush1.msra.mxu0 0.0
    %1251 = vmatprep.subr.mxu0 0.0
    %1252 = vmatpush1.msra.mxu0 0.0
    %1253 = vmatprep.subr.mxu0 0.0
    %1254 = vmatpush1.msra.mxu0 0.0
    %1255 = vmatprep.subr.mxu0 0.0
    %1256 = vmatpush1.msra.mxu0 0.0
    %1257 = vmatprep.subr.mxu0 0.0
    %1258 = vmatpush1.msra.mxu0 0.0
    %1259 = vmatprep.subr.mxu0 0.0
    %1260 = vmatpush1.msra.mxu0 0.0
    %1261 = vmatprep.subr.mxu0 0.0
    %1262 = vmatpush1.msra.mxu0 0.0
    %1263 = vmatprep.subr.mxu0 0.0
    %1264 = vmatpush1.msra.mxu0 0.0
    %1265 = vmatprep.subr.mxu0 0.0
    %1266 = vmatpush1.msra.mxu0 0.0
    %1267 = vmatprep.subr.mxu0 0.0
    %1268 = vmatpush1.msra.mxu0 0.0
    %1269 = vmatprep.subr.mxu0 0.0
    %1270 = vmatpush1.msra.mxu0 0.0
    %1271 = vmatprep.subr.mxu0 0.0
    %1272 = vmatpush1.msra.mxu0 0.0
    %1273 = vmatprep.subr.mxu0 0.0
    %1274 = vmatpush1.msra.mxu0 0.0
    %1275 = vmatprep.subr.mxu0 0.0
    %1276 = vmatpush1.msra.mxu0 0.0
    %1277 = vmatprep.subr.mxu0 0.0
    %1278 = vmatpush1.msra.mxu0 0.0
    %1279 = vmatprep.subr.mxu0 0.0
    %1280 = vmatpush1.msra.mxu0 0.0
    %1281 = vmatprep.subr.mxu0 0.0
    %1282 = vmatpush1.msra.mxu0 0.0
    %1283 = vmatprep.mubr.f32.mxu0 0.0
    %1284 = vmatmul.mubr.f32.gmra.mrb[0].mxu0 %v1217
    %v1285 = vpop.f32.mrb[0].mxu0
    %v1286 = vadd.f32 0.0, %v1285
    %v1287 = vpop.f32.mrb[0].mxu0
    %1288 = vdwg.mxu0
    %1289 = vrot.lane.b32.xlu0 %v128, 104
    %v1290 = vpop.permute.xlu0 %1289
    %1291 = vrot.lane.b32.xlu0 %v213, 104
    %v1292 = vpop.permute.xlu0 %1291
    %v1293 = vsel %vm306, %v1290, 0
    %v1295 = vsel %vm306, %v1292, 0
    %1297 = vmatprep.subr.mxu0 0.0
    %1298 = vmatpush1.xpose.msra.mxu0 %v1295
    %1299 = vmatprep.subr.mxu0 0.0
    %1300 = vmatpush1.xpose.msra.mxu0 0.0
    %1301 = vmatprep.subr.mxu0 0.0
    %1302 = vmatpush1.xpose.msra.mxu0 0.0
    %1303 = vmatprep.subr.mxu0 0.0
    %1304 = vmatpush1.xpose.msra.mxu0 0.0
    %1305 = vmatprep.subr.mxu0 0.0
    %1306 = vmatpush1.xpose.msra.mxu0 0.0
    %1307 = vmatprep.subr.mxu0 0.0
    %1308 = vmatpush1.xpose.msra.mxu0 0.0
    %1309 = vmatprep.subr.mxu0 0.0
    %1310 = vmatpush1.xpose.msra.mxu0 0.0
    %1311 = vmatprep.subr.mxu0 0.0
    %1312 = vmatpush1.xpose.msra.mxu0 0.0
    %1313 = vmatprep.subr.mxu0 0.0
    %1314 = vmatpush1.xpose.msra.mxu0 0.0
    %1315 = vmatprep.subr.mxu0 0.0
    %1316 = vmatpush1.xpose.msra.mxu0 0.0
    %1317 = vmatprep.subr.mxu0 0.0
    %1318 = vmatpush1.xpose.msra.mxu0 0.0
    %1319 = vmatprep.subr.mxu0 0.0
    %1320 = vmatpush1.xpose.msra.mxu0 0.0
    %1321 = vmatprep.subr.mxu0 0.0
    %1322 = vmatpush1.xpose.msra.mxu0 0.0
    %1323 = vmatprep.subr.mxu0 0.0
    %1324 = vmatpush1.xpose.msra.mxu0 0.0
    %1325 = vmatprep.subr.mxu0 0.0
    %1326 = vmatpush1.xpose.msra.mxu0 0.0
    %1327 = vmatprep.subr.mxu0 0.0
    %1328 = vmatpush1.xpose.msra.mxu0 0.0
    %1329 = vmatprep.subr.mxu0 0.0
    %1330 = vmatpush1.xpose.msra.mxu0 0.0
    %1331 = vmatprep.subr.mxu0 0.0
    %1332 = vmatpush1.xpose.msra.mxu0 0.0
    %1333 = vmatprep.subr.mxu0 0.0
    %1334 = vmatpush1.xpose.msra.mxu0 0.0
    %1335 = vmatprep.subr.mxu0 0.0
    %1336 = vmatpush1.xpose.msra.mxu0 0.0
    %1337 = vmatprep.subr.mxu0 0.0
    %1338 = vmatpush1.xpose.msra.mxu0 0.0
    %1339 = vmatprep.subr.mxu0 0.0
    %1340 = vmatpush1.xpose.msra.mxu0 0.0
    %1341 = vmatprep.subr.mxu0 0.0
    %1342 = vmatpush1.xpose.msra.mxu0 0.0
    %1343 = vmatprep.subr.mxu0 0.0
    %1344 = vmatpush1.xpose.msra.mxu0 0.0
    %1345 = vmatprep.subr.mxu0 0.0
    %1346 = vmatpush1.xpose.msra.mxu0 0.0
    %1347 = vmatprep.subr.mxu0 0.0
    %1348 = vmatpush1.xpose.msra.mxu0 0.0
    %1349 = vmatprep.subr.mxu0 0.0
    %1350 = vmatpush1.xpose.msra.mxu0 0.0
    %1351 = vmatprep.subr.mxu0 0.0
    %1352 = vmatpush1.xpose.msra.mxu0 0.0
    %1353 = vmatprep.subr.mxu0 0.0
    %1354 = vmatpush1.xpose.msra.mxu0 0.0
    %1355 = vmatprep.subr.mxu0 0.0
    %1356 = vmatpush1.xpose.msra.mxu0 0.0
    %1357 = vmatprep.subr.mxu0 0.0
    %1358 = vmatpush1.xpose.msra.mxu0 0.0
    %1359 = vmatprep.subr.mxu0 0.0
    %1360 = vmatpush1.xpose.msra.mxu0 0.0
    %1361 = vmatprep.mubr.f32.mxu0 0.0
    %1362 = vmatmul.mubr.f32.gmra.mrb[0].mxu0 %v1293
    %v1363 = vpop.f32.mrb[0].mxu0
    %v1364 = vadd.f32 %v44, %v1363
    %v1365 = vpop.f32.mrb[0].mxu0
    %1366 = vdwg.mxu0
    %1367 = vrot.lane.b32.xlu0 %v133, 104
    %v1368 = vpop.permute.xlu0 %1367
    %1369 = vrot.lane.b32.xlu0 %v218, 104
    %v1370 = vpop.permute.xlu0 %1369
    %v1371 = vsel %vm306, %v1368, 0
    %v1373 = vsel %vm306, %v1370, 0
    %1375 = vmatprep.subr.mxu0 0.0
    %1376 = vmatpush1.xpose.msra.mxu0 %v1373
    %1377 = vmatprep.subr.mxu0 0.0
    %1378 = vmatpush1.xpose.msra.mxu0 0.0
    %1379 = vmatprep.subr.mxu0 0.0
    %1380 = vmatpush1.xpose.msra.mxu0 0.0
    %1381 = vmatprep.subr.mxu0 0.0
    %1382 = vmatpush1.xpose.msra.mxu0 0.0
    %1383 = vmatprep.subr.mxu0 0.0
    %1384 = vmatpush1.xpose.msra.mxu0 0.0
    %1385 = vmatprep.subr.mxu0 0.0
    %1386 = vmatpush1.xpose.msra.mxu0 0.0
    %1387 = vmatprep.subr.mxu0 0.0
    %1388 = vmatpush1.xpose.msra.mxu0 0.0
    %1389 = vmatprep.subr.mxu0 0.0
    %1390 = vmatpush1.xpose.msra.mxu0 0.0
    %1391 = vmatprep.subr.mxu0 0.0
    %1392 = vmatpush1.xpose.msra.mxu0 0.0
    %1393 = vmatprep.subr.mxu0 0.0
    %1394 = vmatpush1.xpose.msra.mxu0 0.0
    %1395 = vmatprep.subr.mxu0 0.0
    %1396 = vmatpush1.xpose.msra.mxu0 0.0
    %1397 = vmatprep.subr.mxu0 0.0
    %1398 = vmatpush1.xpose.msra.mxu0 0.0
    %1399 = vmatprep.subr.mxu0 0.0
    %1400 = vmatpush1.xpose.msra.mxu0 0.0
    %1401 = vmatprep.subr.mxu0 0.0
    %1402 = vmatpush1.xpose.msra.mxu0 0.0
    %1403 = vmatprep.subr.mxu0 0.0
    %1404 = vmatpush1.xpose.msra.mxu0 0.0
    %1405 = vmatprep.subr.mxu0 0.0
    %1406 = vmatpush1.xpose.msra.mxu0 0.0
    %1407 = vmatprep.subr.mxu0 0.0
    %1408 = vmatpush1.xpose.msra.mxu0 0.0
    %1409 = vmatprep.subr.mxu0 0.0
    %1410 = vmatpush1.xpose.msra.mxu0 0.0
    %1411 = vmatprep.subr.mxu0 0.0
    %1412 = vmatpush1.xpose.msra.mxu0 0.0
    %1413 = vmatprep.subr.mxu0 0.0
    %1414 = vmatpush1.xpose.msra.mxu0 0.0
    %1415 = vmatprep.subr.mxu0 0.0
    %1416 = vmatpush1.xpose.msra.mxu0 0.0
    %1417 = vmatprep.subr.mxu0 0.0
    %1418 = vmatpush1.xpose.msra.mxu0 0.0
    %1419 = vmatprep.subr.mxu0 0.0
    %1420 = vmatpush1.xpose.msra.mxu0 0.0
    %1421 = vmatprep.subr.mxu0 0.0
    %1422 = vmatpush1.xpose.msra.mxu0 0.0
    %1423 = vmatprep.subr.mxu0 0.0
    %1424 = vmatpush1.xpose.msra.mxu0 0.0
    %1425 = vmatprep.subr.mxu0 0.0
    %1426 = vmatpush1.xpose.msra.mxu0 0.0
    %1427 = vmatprep.subr.mxu0 0.0
    %1428 = vmatpush1.xpose.msra.mxu0 0.0
    %1429 = vmatprep.subr.mxu0 0.0
    %1430 = vmatpush1.xpose.msra.mxu0 0.0
    %1431 = vmatprep.subr.mxu0 0.0
    %1432 = vmatpush1.xpose.msra.mxu0 0.0
    %1433 = vmatprep.subr.mxu0 0.0
    %1434 = vmatpush1.xpose.msra.mxu0 0.0
    %1435 = vmatprep.subr.mxu0 0.0
    %1436 = vmatpush1.xpose.msra.mxu0 0.0
    %1437 = vmatprep.subr.mxu0 0.0
    %1438 = vmatpush1.xpose.msra.mxu0 0.0
    %1439 = vmatprep.mubr.f32.mxu0 0.0
    %1440 = vmatmul.mubr.f32.gmra.mrb[0].mxu0 %v1371
    %v1441 = vpop.f32.mrb[0].mxu0
    %v1442 = vadd.f32 %v44, %v1441
    %v1443 = vpop.f32.mrb[0].mxu0
    %1444 = vdwg.mxu0
    %v1445 = vsel %vm306, %v1364, -inf
    %1446 = vmax.xlane.f32.xlu0 %v1445
    %v1447 = vpop.xlane.xlu0 %1446
    %v1448 = vsel %vm306, %v1442, -inf
    %1449 = vmax.xlane.f32.xlu0 %v1448
    %v1450 = vpop.xlane.xlu0 %1449
    %v1451 = vsub.f32 %v1364, %v1447
    %v1452 = vsub.f32 %v1442, %v1450
    %v1453 = vmul.f32 %v1451, 1.442695
    %v1454 = vpow.pop %v1453
    %v1455 = vmul.f32 %v1452, 1.442695
    %v1456 = vpow.pop %v1455
    %v1457 = vsel %vm306, %v1454, 0.0
    %1458 = vadd.xlane.f32.xlu0 %v1457
    %v1459 = vpop.xlane.xlu0 %1458
    %v1460 = vsel %vm306, %v1456, 0.0
    %1461 = vadd.xlane.f32.xlu0 %v1460
    %v1462 = vpop.xlane.xlu0 %1461
    %v1463 = vrcp.pop %v1459
    %v1464 = vrcp.pop %v1462
    %v1465 = vmul.f32 %v1454, %v1463
    %v1466 = vmul.f32 %v1456, %v1464
    %1467 = vrot.lane.b32.xlu0 %v298, 104
    %v1468 = vpop.permute.xlu0 %1467
    %v1471 = vsel %vm306, %v1465, 0
    %1473 = vmatprep.subr.mxu0 0.0
    %1474 = vmatpush1.msra.mxu0 %v1468
    %1475 = vmatprep.subr.mxu0 0.0
    %1476 = vmatpush1.msra.mxu0 0.0
    %1477 = vmatprep.subr.mxu0 0.0
    %1478 = vmatpush1.msra.mxu0 0.0
    %1479 = vmatprep.subr.mxu0 0.0
    %1480 = vmatpush1.msra.mxu0 0.0
    %1481 = vmatprep.subr.mxu0 0.0
    %1482 = vmatpush1.msra.mxu0 0.0
    %1483 = vmatprep.subr.mxu0 0.0
    %1484 = vmatpush1.msra.mxu0 0.0
    %1485 = vmatprep.subr.mxu0 0.0
    %1486 = vmatpush1.msra.mxu0 0.0
    %1487 = vmatprep.subr.mxu0 0.0
    %1488 = vmatpush1.msra.mxu0 0.0
    %1489 = vmatprep.subr.mxu0 0.0
    %1490 = vmatpush1.msra.mxu0 0.0
    %1491 = vmatprep.subr.mxu0 0.0
    %1492 = vmatpush1.msra.mxu0 0.0
    %1493 = vmatprep.subr.mxu0 0.0
    %1494 = vmatpush1.msra.mxu0 0.0
    %1495 = vmatprep.subr.mxu0 0.0
    %1496 = vmatpush1.msra.mxu0 0.0
    %1497 = vmatprep.subr.mxu0 0.0
    %1498 = vmatpush1.msra.mxu0 0.0
    %1499 = vmatprep.subr.mxu0 0.0
    %1500 = vmatpush1.msra.mxu0 0.0
    %1501 = vmatprep.subr.mxu0 0.0
    %1502 = vmatpush1.msra.mxu0 0.0
    %1503 = vmatprep.subr.mxu0 0.0
    %1504 = vmatpush1.msra.mxu0 0.0
    %1505 = vmatprep.subr.mxu0 0.0
    %1506 = vmatpush1.msra.mxu0 0.0
    %1507 = vmatprep.subr.mxu0 0.0
    %1508 = vmatpush1.msra.mxu0 0.0
    %1509 = vmatprep.subr.mxu0 0.0
    %1510 = vmatpush1.msra.mxu0 0.0
    %1511 = vmatprep.subr.mxu0 0.0
    %1512 = vmatpush1.msra.mxu0 0.0
    %1513 = vmatprep.subr.mxu0 0.0
    %1514 = vmatpush1.msra.mxu0 0.0
    %1515 = vmatprep.subr.mxu0 0.0
    %1516 = vmatpush1.msra.mxu0 0.0
    %1517 = vmatprep.subr.mxu0 0.0
    %1518 = vmatpush1.msra.mxu0 0.0
    %1519 = vmatprep.subr.mxu0 0.0
    %1520 = vmatpush1.msra.mxu0 0.0
    %1521 = vmatprep.subr.mxu0 0.0
    %1522 = vmatpush1.msra.mxu0 0.0
    %1523 = vmatprep.subr.mxu0 0.0
    %1524 = vmatpush1.msra.mxu0 0.0
    %1525 = vmatprep.subr.mxu0 0.0
    %1526 = vmatpush1.msra.mxu0 0.0
    %1527 = vmatprep.subr.mxu0 0.0
    %1528 = vmatpush1.msra.mxu0 0.0
    %1529 = vmatprep.subr.mxu0 0.0
    %1530 = vmatpush1.msra.mxu0 0.0
    %1531 = vmatprep.subr.mxu0 0.0
    %1532 = vmatpush1.msra.mxu0 0.0
    %1533 = vmatprep.subr.mxu0 0.0
    %1534 = vmatpush1.msra.mxu0 0.0
    %1535 = vmatprep.subr.mxu0 0.0
    %1536 = vmatpush1.msra.mxu0 0.0
    %1537 = vmatprep.mubr.f32.mxu0 0.0
    %1538 = vmatmul.mubr.f32.gmra.mrb[0].mxu0 %v1471
    %v1539 = vpop.f32.mrb[0].mxu0
    %v1540 = vadd.f32 0.0, %v1539
    %v1541 = vpop.f32.mrb[0].mxu0
    %1542 = vdwg.mxu0
    %1543 = vrot.lane.b32.xlu0 %v303, 104
    %v1544 = vpop.permute.xlu0 %1543
    %v1547 = vsel %vm306, %v1466, 0
    %1549 = vmatprep.subr.mxu0 0.0
    %1550 = vmatpush1.msra.mxu0 %v1544
    %1551 = vmatprep.subr.mxu0 0.0
    %1552 = vmatpush1.msra.mxu0 0.0
    %1553 = vmatprep.subr.mxu0 0.0
    %1554 = vmatpush1.msra.mxu0 0.0
    %1555 = vmatprep.subr.mxu0 0.0
    %1556 = vmatpush1.msra.mxu0 0.0
    %1557 = vmatprep.subr.mxu0 0.0
    %1558 = vmatpush1.msra.mxu0 0.0
    %1559 = vmatprep.subr.mxu0 0.0
    %1560 = vmatpush1.msra.mxu0 0.0
    %1561 = vmatprep.subr.mxu0 0.0
    %1562 = vmatpush1.msra.mxu0 0.0
    %1563 = vmatprep.subr.mxu0 0.0
    %1564 = vmatpush1.msra.mxu0 0.0
    %1565 = vmatprep.subr.mxu0 0.0
    %1566 = vmatpush1.msra.mxu0 0.0
    %1567 = vmatprep.subr.mxu0 0.0
    %1568 = vmatpush1.msra.mxu0 0.0
    %1569 = vmatprep.subr.mxu0 0.0
    %1570 = vmatpush1.msra.mxu0 0.0
    %1571 = vmatprep.subr.mxu0 0.0
    %1572 = vmatpush1.msra.mxu0 0.0
    %1573 = vmatprep.subr.mxu0 0.0
    %1574 = vmatpush1.msra.mxu0 0.0
    %1575 = vmatprep.subr.mxu0 0.0
    %1576 = vmatpush1.msra.mxu0 0.0
    %1577 = vmatprep.subr.mxu0 0.0
    %1578 = vmatpush1.msra.mxu0 0.0
    %1579 = vmatprep.subr.mxu0 0.0
    %1580 = vmatpush1.msra.mxu0 0.0
    %1581 = vmatprep.subr.mxu0 0.0
    %1582 = vmatpush1.msra.mxu0 0.0
    %1583 = vmatprep.subr.mxu0 0.0
    %1584 = vmatpush1.msra.mxu0 0.0
    %1585 = vmatprep.subr.mxu0 0.0
    %1586 = vmatpush1.msra.mxu0 0.0
    %1587 = vmatprep.subr.mxu0 0.0
    %1588 = vmatpush1.msra.mxu0 0.0
    %1589 = vmatprep.subr.mxu0 0.0
    %1590 = vmatpush1.msra.mxu0 0.0
    %1591 = vmatprep.subr.mxu0 0.0
    %1592 = vmatpush1.msra.mxu0 0.0
    %1593 = vmatprep.subr.mxu0 0.0
    %1594 = vmatpush1.msra.mxu0 0.0
    %1595 = vmatprep.subr.mxu0 0.0
    %1596 = vmatpush1.msra.mxu0 0.0
    %1597 = vmatprep.subr.mxu0 0.0
    %1598 = vmatpush1.msra.mxu0 0.0
    %1599 = vmatprep.subr.mxu0 0.0
    %1600 = vmatpush1.msra.mxu0 0.0
    %1601 = vmatprep.subr.mxu0 0.0
    %1602 = vmatpush1.msra.mxu0 0.0
    %1603 = vmatprep.subr.mxu0 0.0
    %1604 = vmatpush1.msra.mxu0 0.0
    %1605 = vmatprep.subr.mxu0 0.0
    %1606 = vmatpush1.msra.mxu0 0.0
    %1607 = vmatprep.subr.mxu0 0.0
    %1608 = vmatpush1.msra.mxu0 0.0
    %1609 = vmatprep.subr.mxu0 0.0
    %1610 = vmatpush1.msra.mxu0 0.0
    %1611 = vmatprep.subr.mxu0 0.0
    %1612 = vmatpush1.msra.mxu0 0.0
    %1613 = vmatprep.mubr.f32.mxu0 0.0
    %1614 = vmatmul.mubr.f32.gmra.mrb[0].mxu0 %v1547
    %v1615 = vpop.f32.mrb[0].mxu0
    %v1616 = vadd.f32 0.0, %v1615
    %v1617 = vpop.f32.mrb[0].mxu0
    %1618 = vdwg.mxu0
    %1621 = vrot.lane.b32.xlu0 %v879, 8
    %v1622 = vpop.permute.xlu0 %1621
    %1623 = vrot.lane.b32.xlu0 %v956, 8
    %v1624 = vpop.permute.xlu0 %1623
    %1629 = vrot.lane.b32.xlu0 %v1210, 16
    %v1630 = vpop.permute.xlu0 %1629
    %1631 = vrot.lane.b32.xlu0 %v1286, 16
    %v1632 = vpop.permute.xlu0 %1631
    %1637 = vrot.lane.b32.xlu0 %v1540, 24
    %v1638 = vpop.permute.xlu0 %1637
    %1639 = vrot.lane.b32.xlu0 %v1616, 24
    %v1640 = vpop.permute.xlu0 %1639
    %v1643 = vsel %vm306, %v551, %v1622
    %v1644 = vsel %vm306, %v624, %v1624
    %vm1645 = vcmask 130048
    %v1646 = vsel %vm1645, %v1643, %v1630
    %v1647 = vsel %vm1645, %v1644, %v1632
    %vm1648 = vcmask 195584
    %v1649 = vsel %vm1648, %v1646, %v1638
    %v1650 = vsel %vm1648, %v1647, %v1640
    %s1651 = scalar_lea.vmem %s3, 96
    %v1652 = vld [vmem:[%s1651] sm:$0xff]
    %v1653 = vld [vmem:[%s1651 + $0x8] sm:$0xff]
    %v1654 = vld [vmem:[%s1651 + $0x10] sm:$0xff]
    %v1655 = vld [vmem:[%s1651 + $0x18] sm:$0xff]
    %v1656 = vld [vmem:[%s5 + $0x3] sm:$0x1]
    %v1657 = vlaneseq
    %v1658 = vshrl.u32 %v1657, 7
    %v1659 = vsub.s32 0, %v1658
    %v1660 = vrot.slane %v1656, %v1659
    %v1662 = vsel %vm54, %v1649, 0
    %v1665 = vsel %vm54, %v1650, 0
    %1667 = vmatprep.subr.mxu0 0.0
    %1668 = vmatpush1.msra.mxu0 %v1652
    %1669 = vmatprep.subr.mxu0 0.0
    %1670 = vmatpush1.msra.mxu0 %v1653
    %1671 = vmatprep.subr.mxu0 0.0
    %1672 = vmatpush1.msra.mxu0 %v1654
    %1673 = vmatprep.subr.mxu0 0.0
    %1674 = vmatpush1.msra.mxu0 %v1655
    %1675 = vmatprep.subr.mxu0 0.0
    %1676 = vmatpush1.msra.mxu0 0.0
    %1677 = vmatprep.subr.mxu0 0.0
    %1678 = vmatpush1.msra.mxu0 0.0
    %1679 = vmatprep.subr.mxu0 0.0
    %1680 = vmatpush1.msra.mxu0 0.0
    %1681 = vmatprep.subr.mxu0 0.0
    %1682 = vmatpush1.msra.mxu0 0.0
    %1683 = vmatprep.subr.mxu0 0.0
    %1684 = vmatpush1.msra.mxu0 0.0
    %1685 = vmatprep.subr.mxu0 0.0
    %1686 = vmatpush1.msra.mxu0 0.0
    %1687 = vmatprep.subr.mxu0 0.0
    %1688 = vmatpush1.msra.mxu0 0.0
    %1689 = vmatprep.subr.mxu0 0.0
    %1690 = vmatpush1.msra.mxu0 0.0
    %1691 = vmatprep.subr.mxu0 0.0
    %1692 = vmatpush1.msra.mxu0 0.0
    %1693 = vmatprep.subr.mxu0 0.0
    %1694 = vmatpush1.msra.mxu0 0.0
    %1695 = vmatprep.subr.mxu0 0.0
    %1696 = vmatpush1.msra.mxu0 0.0
    %1697 = vmatprep.subr.mxu0 0.0
    %1698 = vmatpush1.msra.mxu0 0.0
    %1699 = vmatprep.subr.mxu0 0.0
    %1700 = vmatpush1.msra.mxu0 0.0
    %1701 = vmatprep.subr.mxu0 0.0
    %1702 = vmatpush1.msra.mxu0 0.0
    %1703 = vmatprep.subr.mxu0 0.0
    %1704 = vmatpush1.msra.mxu0 0.0
    %1705 = vmatprep.subr.mxu0 0.0
    %1706 = vmatpush1.msra.mxu0 0.0
    %1707 = vmatprep.subr.mxu0 0.0
    %1708 = vmatpush1.msra.mxu0 0.0
    %1709 = vmatprep.subr.mxu0 0.0
    %1710 = vmatpush1.msra.mxu0 0.0
    %1711 = vmatprep.subr.mxu0 0.0
    %1712 = vmatpush1.msra.mxu0 0.0
    %1713 = vmatprep.subr.mxu0 0.0
    %1714 = vmatpush1.msra.mxu0 0.0
    %1715 = vmatprep.subr.mxu0 0.0
    %1716 = vmatpush1.msra.mxu0 0.0
    %1717 = vmatprep.subr.mxu0 0.0
    %1718 = vmatpush1.msra.mxu0 0.0
    %1719 = vmatprep.subr.mxu0 0.0
    %1720 = vmatpush1.msra.mxu0 0.0
    %1721 = vmatprep.subr.mxu0 0.0
    %1722 = vmatpush1.msra.mxu0 0.0
    %1723 = vmatprep.subr.mxu0 0.0
    %1724 = vmatpush1.msra.mxu0 0.0
    %1725 = vmatprep.subr.mxu0 0.0
    %1726 = vmatpush1.msra.mxu0 0.0
    %1727 = vmatprep.subr.mxu0 0.0
    %1728 = vmatpush1.msra.mxu0 0.0
    %1729 = vmatprep.subr.mxu0 0.0
    %1730 = vmatpush1.msra.mxu0 0.0
    %1731 = vmatprep.mubr.f32.mxu0 0.0
    %1732 = vmatmul.mubr.f32.gmra.mrb[0].mxu0 %v1662
    %v1733 = vpop.f32.mrb[0].mxu0
    %v1734 = vadd.f32 %v1660, %v1733
    %v1735 = vpop.f32.mrb[0].mxu0
    %1736 = vmatprep.mubr.f32.mxu0 0.0
    %1737 = vmatmul.mubr.f32.gmra.mrb[0].mxu0 %v1665
    %v1738 = vpop.f32.mrb[0].mxu0
    %v1739 = vadd.f32 %v1660, %v1738
    %v1740 = vpop.f32.mrb[0].mxu0
    %1741 = vdwg.mxu0
    %v1742 = vadd.f32 %v42, %v1734
    %v1743 = vadd.f32 %v43, %v1739
    %v1744 = vld [vmem:[%s5 + $0x4] sm:$0x1]
    %v1745 = vld [vmem:[%s5 + $0x5] sm:$0x1]
    %v1746 = vsel %vm54, %v1742, 0.0
    %1747 = vadd.xlane.f32.xlu0 %v1746
    %v1748 = vpop.xlane.xlu0 %1747
    %v1749 = vsel %vm54, %v1743, 0.0
    %1750 = vadd.xlane.f32.xlu0 %v1749
    %v1751 = vpop.xlane.xlu0 %1750
    %v1752 = vrcp.pop 32.0
    %v1753 = vmul.f32 %v1748, %v1752
    %v1754 = vmul.f32 %v1751, %v1752
    %v1755 = vsub.f32 %v1742, %v1753
    %v1756 = vsub.f32 %v1743, %v1754
    %v1757 = vmul.f32 %v1755, %v1755
    %v1758 = vmul.f32 %v1756, %v1756
    %v1759 = vsel %vm54, %v1757, 0.0
    %1760 = vadd.xlane.f32.xlu0 %v1759
    %v1761 = vpop.xlane.xlu0 %1760
    %v1762 = vsel %vm54, %v1758, 0.0
    %1763 = vadd.xlane.f32.xlu0 %v1762
    %v1764 = vpop.xlane.xlu0 %1763
    %v1765 = vmul.f32 %v1761, %v1752
    %v1766 = vmul.f32 %v1764, %v1752
    %v1767 = vadd.f32 %v1765, 1e-05
    %v1768 = vadd.f32 %v1766, 1e-05
    %v1769 = vrsqrt.pop %v1767
    %v1770 = vrsqrt.pop %v1768
    %v1771 = vmul.f32 %v1755, %v1769
    %v1772 = vmul.f32 %v1756, %v1770
    %v1773 = vlaneseq
    %v1774 = vshrl.u32 %v1773, 7
    %v1775 = vsub.s32 0, %v1774
    %v1776 = vrot.slane %v1744, %v1775
    %v1777 = vmul.f32 %v1771, %v1776
    %v1778 = vmul.f32 %v1772, %v1776
    %v1779 = vlaneseq
    %v1780 = vshrl.u32 %v1779, 7
    %v1781 = vsub.s32 0, %v1780
    %v1782 = vrot.slane %v1745, %v1781
    %v1783 = vadd.f32 %v1777, %v1782
    %v1784 = vadd.f32 %v1778, %v1782
    %v1785 = vld [vmem:[%s4] sm:$0xff]
    %v1786 = vld [vmem:[%s4 + $0x8] sm:$0xff]
    %v1787 = vld [vmem:[%s4 + $0x10] sm:$0xff]
    %v1788 = vld [vmem:[%s4 + $0x18] sm:$0xff]
    %v1789 = vld [vmem:[%s4 + $0x20] sm:$0xff]
    %v1790 = vld [vmem:[%s4 + $0x28] sm:$0xff]
    %v1791 = vld [vmem:[%s4 + $0x30] sm:$0xff]
    %v1792 = vld [vmem:[%s4 + $0x38] sm:$0xff]
    %v1793 = vld [vmem:[%s4 + $0x40] sm:$0xff]
    %v1794 = vld [vmem:[%s4 + $0x48] sm:$0xff]
    %v1795 = vld [vmem:[%s4 + $0x50] sm:$0xff]
    %v1796 = vld [vmem:[%s4 + $0x58] sm:$0xff]
    %v1797 = vld [vmem:[%s5 + $0x8] sm:$0x1]
    %v1798 = vlaneseq
    %v1799 = vshrl.u32 %v1798, 7
    %v1800 = vsub.s32 0, %v1799
    %v1801 = vrot.slane %v1797, %v1800
    %v1803 = vsel %vm54, %v1783, 0
    %v1806 = vsel %vm54, %v1784, 0
    %1808 = vmatprep.subr.mxu0 0.0
    %1809 = vmatpush1.msra.mxu0 %v1785
    %1810 = vmatprep.subr.mxu0 0.0
    %1811 = vmatpush1.msra.mxu0 %v1786
    %1812 = vmatprep.subr.mxu0 0.0
    %1813 = vmatpush1.msra.mxu0 %v1787
    %1814 = vmatprep.subr.mxu0 0.0
    %1815 = vmatpush1.msra.mxu0 %v1788
    %1816 = vmatprep.subr.mxu0 0.0
    %1817 = vmatpush1.msra.mxu0 0.0
    %1818 = vmatprep.subr.mxu0 0.0
    %1819 = vmatpush1.msra.mxu0 0.0
    %1820 = vmatprep.subr.mxu0 0.0
    %1821 = vmatpush1.msra.mxu0 0.0
    %1822 = vmatprep.subr.mxu0 0.0
    %1823 = vmatpush1.msra.mxu0 0.0
    %1824 = vmatprep.subr.mxu0 0.0
    %1825 = vmatpush1.msra.mxu0 0.0
    %1826 = vmatprep.subr.mxu0 0.0
    %1827 = vmatpush1.msra.mxu0 0.0
    %1828 = vmatprep.subr.mxu0 0.0
    %1829 = vmatpush1.msra.mxu0 0.0
    %1830 = vmatprep.subr.mxu0 0.0
    %1831 = vmatpush1.msra.mxu0 0.0
    %1832 = vmatprep.subr.mxu0 0.0
    %1833 = vmatpush1.msra.mxu0 0.0
    %1834 = vmatprep.subr.mxu0 0.0
    %1835 = vmatpush1.msra.mxu0 0.0
    %1836 = vmatprep.subr.mxu0 0.0
    %1837 = vmatpush1.msra.mxu0 0.0
    %1838 = vmatprep.subr.mxu0 0.0
    %1839 = vmatpush1.msra.mxu0 0.0
    %1840 = vmatprep.subr.mxu0 0.0
    %1841 = vmatpush1.msra.mxu0 0.0
    %1842 = vmatprep.subr.mxu0 0.0
    %1843 = vmatpush1.msra.mxu0 0.0
    %1844 = vmatprep.subr.mxu0 0.0
    %1845 = vmatpush1.msra.mxu0 0.0
    %1846 = vmatprep.subr.mxu0 0.0
    %1847 = vmatpush1.msra.mxu0 0.0
    %1848 = vmatprep.subr.mxu0 0.0
    %1849 = vmatpush1.msra.mxu0 0.0
    %1850 = vmatprep.subr.mxu0 0.0
    %1851 = vmatpush1.msra.mxu0 0.0
    %1852 = vmatprep.subr.mxu0 0.0
    %1853 = vmatpush1.msra.mxu0 0.0
    %1854 = vmatprep.subr.mxu0 0.0
    %1855 = vmatpush1.msra.mxu0 0.0
    %1856 = vmatprep.subr.mxu0 0.0
    %1857 = vmatpush1.msra.mxu0 0.0
    %1858 = vmatprep.subr.mxu0 0.0
    %1859 = vmatpush1.msra.mxu0 0.0
    %1860 = vmatprep.subr.mxu0 0.0
    %1861 = vmatpush1.msra.mxu0 0.0
    %1862 = vmatprep.subr.mxu0 0.0
    %1863 = vmatpush1.msra.mxu0 0.0
    %1864 = vmatprep.subr.mxu0 0.0
    %1865 = vmatpush1.msra.mxu0 0.0
    %1866 = vmatprep.subr.mxu0 0.0
    %1867 = vmatpush1.msra.mxu0 0.0
    %1868 = vmatprep.subr.mxu0 0.0
    %1869 = vmatpush1.msra.mxu0 0.0
    %1870 = vmatprep.subr.mxu0 0.0
    %1871 = vmatpush1.msra.mxu0 0.0
    %1872 = vmatprep.mubr.f32.mxu0 0.0
    %1873 = vmatmul.mubr.f32.gmra.mrb[0].mxu0 %v1803
    %v1874 = vpop.f32.mrb[0].mxu0
    %v1875 = vadd.f32 %v1801, %v1874
    %v1876 = vpop.f32.mrb[0].mxu0
    %1877 = vmatprep.mubr.f32.mxu0 0.0
    %1878 = vmatmul.mubr.f32.gmra.mrb[0].mxu0 %v1806
    %v1879 = vpop.f32.mrb[0].mxu0
    %v1880 = vadd.f32 %v1801, %v1879
    %v1881 = vpop.f32.mrb[0].mxu0
    %1882 = vdwg.mxu0
    %v1883 = vmax.f32 %v1875, 0.0
    %v1884 = vmax.f32 %v1880, 0.0
    %v1885 = vld [vmem:[%s5 + $0x9] sm:$0x1]
    %v1886 = vlaneseq
    %v1887 = vshrl.u32 %v1886, 7
    %v1888 = vsub.s32 0, %v1887
    %v1889 = vrot.slane %v1885, %v1888
    %vm1890 = vcmask 523264
    %v1892 = vsel %vm1890, %v1883, 0
    %v1895 = vsel %vm1890, %v1884, 0
    %1897 = vmatprep.subr.mxu0 0.0
    %1898 = vmatpush1.msra.mxu0 %v1789
    %1899 = vmatprep.subr.mxu0 0.0
    %1900 = vmatpush1.msra.mxu0 %v1790
    %1901 = vmatprep.subr.mxu0 0.0
    %1902 = vmatpush1.msra.mxu0 %v1791
    %1903 = vmatprep.subr.mxu0 0.0
    %1904 = vmatpush1.msra.mxu0 %v1792
    %1905 = vmatprep.subr.mxu0 0.0
    %1906 = vmatpush1.msra.mxu0 %v1793
    %1907 = vmatprep.subr.mxu0 0.0
    %1908 = vmatpush1.msra.mxu0 %v1794
    %1909 = vmatprep.subr.mxu0 0.0
    %1910 = vmatpush1.msra.mxu0 %v1795
    %1911 = vmatprep.subr.mxu0 0.0
    %1912 = vmatpush1.msra.mxu0 %v1796
    %1913 = vmatprep.subr.mxu0 0.0
    %1914 = vmatpush1.msra.mxu0 0.0
    %1915 = vmatprep.subr.mxu0 0.0
    %1916 = vmatpush1.msra.mxu0 0.0
    %1917 = vmatprep.subr.mxu0 0.0
    %1918 = vmatpush1.msra.mxu0 0.0
    %1919 = vmatprep.subr.mxu0 0.0
    %1920 = vmatpush1.msra.mxu0 0.0
    %1921 = vmatprep.subr.mxu0 0.0
    %1922 = vmatpush1.msra.mxu0 0.0
    %1923 = vmatprep.subr.mxu0 0.0
    %1924 = vmatpush1.msra.mxu0 0.0
    %1925 = vmatprep.subr.mxu0 0.0
    %1926 = vmatpush1.msra.mxu0 0.0
    %1927 = vmatprep.subr.mxu0 0.0
    %1928 = vmatpush1.msra.mxu0 0.0
    %1929 = vmatprep.subr.mxu0 0.0
    %1930 = vmatpush1.msra.mxu0 0.0
    %1931 = vmatprep.subr.mxu0 0.0
    %1932 = vmatpush1.msra.mxu0 0.0
    %1933 = vmatprep.subr.mxu0 0.0
    %1934 = vmatpush1.msra.mxu0 0.0
    %1935 = vmatprep.subr.mxu0 0.0
    %1936 = vmatpush1.msra.mxu0 0.0
    %1937 = vmatprep.subr.mxu0 0.0
    %1938 = vmatpush1.msra.mxu0 0.0
    %1939 = vmatprep.subr.mxu0 0.0
    %1940 = vmatpush1.msra.mxu0 0.0
    %1941 = vmatprep.subr.mxu0 0.0
    %1942 = vmatpush1.msra.mxu0 0.0
    %1943 = vmatprep.subr.mxu0 0.0
    %1944 = vmatpush1.msra.mxu0 0.0
    %1945 = vmatprep.subr.mxu0 0.0
    %1946 = vmatpush1.msra.mxu0 0.0
    %1947 = vmatprep.subr.mxu0 0.0
    %1948 = vmatpush1.msra.mxu0 0.0
    %1949 = vmatprep.subr.mxu0 0.0
    %1950 = vmatpush1.msra.mxu0 0.0
    %1951 = vmatprep.subr.mxu0 0.0
    %1952 = vmatpush1.msra.mxu0 0.0
    %1953 = vmatprep.subr.mxu0 0.0
    %1954 = vmatpush1.msra.mxu0 0.0
    %1955 = vmatprep.subr.mxu0 0.0
    %1956 = vmatpush1.msra.mxu0 0.0
    %1957 = vmatprep.subr.mxu0 0.0
    %1958 = vmatpush1.msra.mxu0 0.0
    %1959 = vmatprep.subr.mxu0 0.0
    %1960 = vmatpush1.msra.mxu0 0.0
    %1961 = vmatprep.mubr.f32.mxu0 0.0
    %1962 = vmatmul.mubr.f32.gmra.mrb[0].mxu0 %v1892
    %v1963 = vpop.f32.mrb[0].mxu0
    %v1964 = vadd.f32 %v1889, %v1963
    %v1965 = vpop.f32.mrb[0].mxu0
    %1966 = vmatprep.mubr.f32.mxu0 0.0
    %1967 = vmatmul.mubr.f32.gmra.mrb[0].mxu0 %v1895
    %v1968 = vpop.f32.mrb[0].mxu0
    %v1969 = vadd.f32 %v1889, %v1968
    %v1970 = vpop.f32.mrb[0].mxu0
    %1971 = vdwg.mxu0
    %v1972 = vadd.f32 %v1783, %v1964
    %v1973 = vadd.f32 %v1784, %v1969
    %v1974 = vld [vmem:[%s5 + $0x6] sm:$0x1]
    %v1975 = vld [vmem:[%s5 + $0x7] sm:$0x1]
    %v1976 = vsel %vm54, %v1972, 0.0
    %1977 = vadd.xlane.f32.xlu0 %v1976
    %v1978 = vpop.xlane.xlu0 %1977
    %v1979 = vsel %vm54, %v1973, 0.0
    %1980 = vadd.xlane.f32.xlu0 %v1979
    %v1981 = vpop.xlane.xlu0 %1980
    %v1982 = vmul.f32 %v1978, %v1752
    %v1983 = vmul.f32 %v1981, %v1752
    %v1984 = vsub.f32 %v1972, %v1982
    %v1985 = vsub.f32 %v1973, %v1983
    %v1986 = vmul.f32 %v1984, %v1984
    %v1987 = vmul.f32 %v1985, %v1985
    %v1988 = vsel %vm54, %v1986, 0.0
    %1989 = vadd.xlane.f32.xlu0 %v1988
    %v1990 = vpop.xlane.xlu0 %1989
    %v1991 = vsel %vm54, %v1987, 0.0
    %1992 = vadd.xlane.f32.xlu0 %v1991
    %v1993 = vpop.xlane.xlu0 %1992
    %v1994 = vmul.f32 %v1990, %v1752
    %v1995 = vmul.f32 %v1993, %v1752
    %v1996 = vadd.f32 %v1994, 1e-05
    %v1997 = vadd.f32 %v1995, 1e-05
    %v1998 = vrsqrt.pop %v1996
    %v1999 = vrsqrt.pop %v1997
    %v2000 = vmul.f32 %v1984, %v1998
    %v2001 = vmul.f32 %v1985, %v1999
    %v2002 = vlaneseq
    %v2003 = vshrl.u32 %v2002, 7
    %v2004 = vsub.s32 0, %v2003
    %v2005 = vrot.slane %v1974, %v2004
    %v2006 = vmul.f32 %v2000, %v2005
    %v2007 = vmul.f32 %v2001, %v2005
    %v2008 = vlaneseq
    %v2009 = vshrl.u32 %v2008, 7
    %v2010 = vsub.s32 0, %v2009
    %v2011 = vrot.slane %v1975, %v2010
    %v2012 = vadd.f32 %v2006, %v2011
    %v2013 = vadd.f32 %v2007, %v2011
    %s2014 = scalar_lea.vmem %s3, 128
    %v2015 = vld [vmem:[%s2014] sm:$0xff]
    %v2016 = vld [vmem:[%s2014 + $0x8] sm:$0xff]
    %v2017 = vld [vmem:[%s2014 + $0x10] sm:$0xff]
    %v2018 = vld [vmem:[%s2014 + $0x18] sm:$0xff]
    %v2019 = vld [vmem:[%s5 + $0xa] sm:$0x1]
    %v2020 = vlaneseq
    %v2021 = vshrl.u32 %v2020, 7
    %v2022 = vsub.s32 0, %v2021
    %v2023 = vrot.slane %v2019, %v2022
    %v2025 = vsel %vm54, %v2012, 0
    %v2028 = vsel %vm54, %v2013, 0
    %2030 = vmatprep.subr.mxu0 0.0
    %2031 = vmatpush1.msra.mxu0 %v2015
    %2032 = vmatprep.subr.mxu0 0.0
    %2033 = vmatpush1.msra.mxu0 %v2016
    %2034 = vmatprep.subr.mxu0 0.0
    %2035 = vmatpush1.msra.mxu0 %v2017
    %2036 = vmatprep.subr.mxu0 0.0
    %2037 = vmatpush1.msra.mxu0 %v2018
    %2038 = vmatprep.subr.mxu0 0.0
    %2039 = vmatpush1.msra.mxu0 0.0
    %2040 = vmatprep.subr.mxu0 0.0
    %2041 = vmatpush1.msra.mxu0 0.0
    %2042 = vmatprep.subr.mxu0 0.0
    %2043 = vmatpush1.msra.mxu0 0.0
    %2044 = vmatprep.subr.mxu0 0.0
    %2045 = vmatpush1.msra.mxu0 0.0
    %2046 = vmatprep.subr.mxu0 0.0
    %2047 = vmatpush1.msra.mxu0 0.0
    %2048 = vmatprep.subr.mxu0 0.0
    %2049 = vmatpush1.msra.mxu0 0.0
    %2050 = vmatprep.subr.mxu0 0.0
    %2051 = vmatpush1.msra.mxu0 0.0
    %2052 = vmatprep.subr.mxu0 0.0
    %2053 = vmatpush1.msra.mxu0 0.0
    %2054 = vmatprep.subr.mxu0 0.0
    %2055 = vmatpush1.msra.mxu0 0.0
    %2056 = vmatprep.subr.mxu0 0.0
    %2057 = vmatpush1.msra.mxu0 0.0
    %2058 = vmatprep.subr.mxu0 0.0
    %2059 = vmatpush1.msra.mxu0 0.0
    %2060 = vmatprep.subr.mxu0 0.0
    %2061 = vmatpush1.msra.mxu0 0.0
    %2062 = vmatprep.subr.mxu0 0.0
    %2063 = vmatpush1.msra.mxu0 0.0
    %2064 = vmatprep.subr.mxu0 0.0
    %2065 = vmatpush1.msra.mxu0 0.0
    %2066 = vmatprep.subr.mxu0 0.0
    %2067 = vmatpush1.msra.mxu0 0.0
    %2068 = vmatprep.subr.mxu0 0.0
    %2069 = vmatpush1.msra.mxu0 0.0
    %2070 = vmatprep.subr.mxu0 0.0
    %2071 = vmatpush1.msra.mxu0 0.0
    %2072 = vmatprep.subr.mxu0 0.0
    %2073 = vmatpush1.msra.mxu0 0.0
    %2074 = vmatprep.subr.mxu0 0.0
    %2075 = vmatpush1.msra.mxu0 0.0
    %2076 = vmatprep.subr.mxu0 0.0
    %2077 = vmatpush1.msra.mxu0 0.0
    %2078 = vmatprep.subr.mxu0 0.0
    %2079 = vmatpush1.msra.mxu0 0.0
    %2080 = vmatprep.subr.mxu0 0.0
    %2081 = vmatpush1.msra.mxu0 0.0
    %2082 = vmatprep.subr.mxu0 0.0
    %2083 = vmatpush1.msra.mxu0 0.0
    %2084 = vmatprep.subr.mxu0 0.0
    %2085 = vmatpush1.msra.mxu0 0.0
    %2086 = vmatprep.subr.mxu0 0.0
    %2087 = vmatpush1.msra.mxu0 0.0
    %2088 = vmatprep.subr.mxu0 0.0
    %2089 = vmatpush1.msra.mxu0 0.0
    %2090 = vmatprep.subr.mxu0 0.0
    %2091 = vmatpush1.msra.mxu0 0.0
    %2092 = vmatprep.subr.mxu0 0.0
    %2093 = vmatpush1.msra.mxu0 0.0
    %2094 = vmatprep.mubr.f32.mxu0 0.0
    %2095 = vmatmul.mubr.f32.gmra.mrb[0].mxu0 %v2025
    %v2096 = vpop.f32.mrb[0].mxu0
    %v2097 = vadd.f32 %v2023, %v2096
    %v2098 = vpop.f32.mrb[0].mxu0
    %2099 = vmatprep.mubr.f32.mxu0 0.0
    %2100 = vmatmul.mubr.f32.gmra.mrb[0].mxu0 %v2028
    %v2101 = vpop.f32.mrb[0].mxu0
    %v2102 = vadd.f32 %v2023, %v2101
    %v2103 = vpop.f32.mrb[0].mxu0
    %2104 = vdwg.mxu0
    %s2105 = scalar_lea.vmem %s3, 160
    %v2106 = vld [vmem:[%s2105] sm:$0xff]
    %v2107 = vld [vmem:[%s2105 + $0x8] sm:$0xff]
    %v2108 = vld [vmem:[%s2105 + $0x10] sm:$0xff]
    %v2109 = vld [vmem:[%s2105 + $0x18] sm:$0xff]
    %v2110 = vld [vmem:[%s5 + $0xb] sm:$0x1]
    %v2111 = vlaneseq
    %v2112 = vshrl.u32 %v2111, 7
    %v2113 = vsub.s32 0, %v2112
    %v2114 = vrot.slane %v2110, %v2113
    %2115 = vmatprep.subr.mxu0 0.0
    %2116 = vmatpush1.msra.mxu0 %v2106
    %2117 = vmatprep.subr.mxu0 0.0
    %2118 = vmatpush1.msra.mxu0 %v2107
    %2119 = vmatprep.subr.mxu0 0.0
    %2120 = vmatpush1.msra.mxu0 %v2108
    %2121 = vmatprep.subr.mxu0 0.0
    %2122 = vmatpush1.msra.mxu0 %v2109
    %2123 = vmatprep.subr.mxu0 0.0
    %2124 = vmatpush1.msra.mxu0 0.0
    %2125 = vmatprep.subr.mxu0 0.0
    %2126 = vmatpush1.msra.mxu0 0.0
    %2127 = vmatprep.subr.mxu0 0.0
    %2128 = vmatpush1.msra.mxu0 0.0
    %2129 = vmatprep.subr.mxu0 0.0
    %2130 = vmatpush1.msra.mxu0 0.0
    %2131 = vmatprep.subr.mxu0 0.0
    %2132 = vmatpush1.msra.mxu0 0.0
    %2133 = vmatprep.subr.mxu0 0.0
    %2134 = vmatpush1.msra.mxu0 0.0
    %2135 = vmatprep.subr.mxu0 0.0
    %2136 = vmatpush1.msra.mxu0 0.0
    %2137 = vmatprep.subr.mxu0 0.0
    %2138 = vmatpush1.msra.mxu0 0.0
    %2139 = vmatprep.subr.mxu0 0.0
    %2140 = vmatpush1.msra.mxu0 0.0
    %2141 = vmatprep.subr.mxu0 0.0
    %2142 = vmatpush1.msra.mxu0 0.0
    %2143 = vmatprep.subr.mxu0 0.0
    %2144 = vmatpush1.msra.mxu0 0.0
    %2145 = vmatprep.subr.mxu0 0.0
    %2146 = vmatpush1.msra.mxu0 0.0
    %2147 = vmatprep.subr.mxu0 0.0
    %2148 = vmatpush1.msra.mxu0 0.0
    %2149 = vmatprep.subr.mxu0 0.0
    %2150 = vmatpush1.msra.mxu0 0.0
    %2151 = vmatprep.subr.mxu0 0.0
    %2152 = vmatpush1.msra.mxu0 0.0
    %2153 = vmatprep.subr.mxu0 0.0
    %2154 = vmatpush1.msra.mxu0 0.0
    %2155 = vmatprep.subr.mxu0 0.0
    %2156 = vmatpush1.msra.mxu0 0.0
    %2157 = vmatprep.subr.mxu0 0.0
    %2158 = vmatpush1.msra.mxu0 0.0
    %2159 = vmatprep.subr.mxu0 0.0
    %2160 = vmatpush1.msra.mxu0 0.0
    %2161 = vmatprep.subr.mxu0 0.0
    %2162 = vmatpush1.msra.mxu0 0.0
    %2163 = vmatprep.subr.mxu0 0.0
    %2164 = vmatpush1.msra.mxu0 0.0
    %2165 = vmatprep.subr.mxu0 0.0
    %2166 = vmatpush1.msra.mxu0 0.0
    %2167 = vmatprep.subr.mxu0 0.0
    %2168 = vmatpush1.msra.mxu0 0.0
    %2169 = vmatprep.subr.mxu0 0.0
    %2170 = vmatpush1.msra.mxu0 0.0
    %2171 = vmatprep.subr.mxu0 0.0
    %2172 = vmatpush1.msra.mxu0 0.0
    %2173 = vmatprep.subr.mxu0 0.0
    %2174 = vmatpush1.msra.mxu0 0.0
    %2175 = vmatprep.subr.mxu0 0.0
    %2176 = vmatpush1.msra.mxu0 0.0
    %2177 = vmatprep.subr.mxu0 0.0
    %2178 = vmatpush1.msra.mxu0 0.0
    %2179 = vmatprep.mubr.f32.mxu0 0.0
    %2180 = vmatmul.mubr.f32.gmra.mrb[0].mxu0 %v2025
    %v2181 = vpop.f32.mrb[0].mxu0
    %v2182 = vadd.f32 %v2114, %v2181
    %v2183 = vpop.f32.mrb[0].mxu0
    %2184 = vmatprep.mubr.f32.mxu0 0.0
    %2185 = vmatmul.mubr.f32.gmra.mrb[0].mxu0 %v2028
    %v2186 = vpop.f32.mrb[0].mxu0
    %v2187 = vadd.f32 %v2114, %v2186
    %v2188 = vpop.f32.mrb[0].mxu0
    %2189 = vdwg.mxu0
    %s2190 = scalar_lea.vmem %s3, 192
    %v2191 = vld [vmem:[%s2190] sm:$0xff]
    %v2192 = vld [vmem:[%s2190 + $0x8] sm:$0xff]
    %v2193 = vld [vmem:[%s2190 + $0x10] sm:$0xff]
    %v2194 = vld [vmem:[%s2190 + $0x18] sm:$0xff]
    %v2195 = vld [vmem:[%s5 + $0xc] sm:$0x1]
    %v2196 = vlaneseq
    %v2197 = vshrl.u32 %v2196, 7
    %v2198 = vsub.s32 0, %v2197
    %v2199 = vrot.slane %v2195, %v2198
    %2200 = vmatprep.subr.mxu0 0.0
    %2201 = vmatpush1.msra.mxu0 %v2191
    %2202 = vmatprep.subr.mxu0 0.0
    %2203 = vmatpush1.msra.mxu0 %v2192
    %2204 = vmatprep.subr.mxu0 0.0
    %2205 = vmatpush1.msra.mxu0 %v2193
    %2206 = vmatprep.subr.mxu0 0.0
    %2207 = vmatpush1.msra.mxu0 %v2194
    %2208 = vmatprep.subr.mxu0 0.0
    %2209 = vmatpush1.msra.mxu0 0.0
    %2210 = vmatprep.subr.mxu0 0.0
    %2211 = vmatpush1.msra.mxu0 0.0
    %2212 = vmatprep.subr.mxu0 0.0
    %2213 = vmatpush1.msra.mxu0 0.0
    %2214 = vmatprep.subr.mxu0 0.0
    %2215 = vmatpush1.msra.mxu0 0.0
    %2216 = vmatprep.subr.mxu0 0.0
    %2217 = vmatpush1.msra.mxu0 0.0
    %2218 = vmatprep.subr.mxu0 0.0
    %2219 = vmatpush1.msra.mxu0 0.0
    %2220 = vmatprep.subr.mxu0 0.0
    %2221 = vmatpush1.msra.mxu0 0.0
    %2222 = vmatprep.subr.mxu0 0.0
    %2223 = vmatpush1.msra.mxu0 0.0
    %2224 = vmatprep.subr.mxu0 0.0
    %2225 = vmatpush1.msra.mxu0 0.0
    %2226 = vmatprep.subr.mxu0 0.0
    %2227 = vmatpush1.msra.mxu0 0.0
    %2228 = vmatprep.subr.mxu0 0.0
    %2229 = vmatpush1.msra.mxu0 0.0
    %2230 = vmatprep.subr.mxu0 0.0
    %2231 = vmatpush1.msra.mxu0 0.0
    %2232 = vmatprep.subr.mxu0 0.0
    %2233 = vmatpush1.msra.mxu0 0.0
    %2234 = vmatprep.subr.mxu0 0.0
    %2235 = vmatpush1.msra.mxu0 0.0
    %2236 = vmatprep.subr.mxu0 0.0
    %2237 = vmatpush1.msra.mxu0 0.0
    %2238 = vmatprep.subr.mxu0 0.0
    %2239 = vmatpush1.msra.mxu0 0.0
    %2240 = vmatprep.subr.mxu0 0.0
    %2241 = vmatpush1.msra.mxu0 0.0
    %2242 = vmatprep.subr.mxu0 0.0
    %2243 = vmatpush1.msra.mxu0 0.0
    %2244 = vmatprep.subr.mxu0 0.0
    %2245 = vmatpush1.msra.mxu0 0.0
    %2246 = vmatprep.subr.mxu0 0.0
    %2247 = vmatpush1.msra.mxu0 0.0
    %2248 = vmatprep.subr.mxu0 0.0
    %2249 = vmatpush1.msra.mxu0 0.0
    %2250 = vmatprep.subr.mxu0 0.0
    %2251 = vmatpush1.msra.mxu0 0.0
    %2252 = vmatprep.subr.mxu0 0.0
    %2253 = vmatpush1.msra.mxu0 0.0
    %2254 = vmatprep.subr.mxu0 0.0
    %2255 = vmatpush1.msra.mxu0 0.0
    %2256 = vmatprep.subr.mxu0 0.0
    %2257 = vmatpush1.msra.mxu0 0.0
    %2258 = vmatprep.subr.mxu0 0.0
    %2259 = vmatpush1.msra.mxu0 0.0
    %2260 = vmatprep.subr.mxu0 0.0
    %2261 = vmatpush1.msra.mxu0 0.0
    %2262 = vmatprep.subr.mxu0 0.0
    %2263 = vmatpush1.msra.mxu0 0.0
    %2264 = vmatprep.mubr.f32.mxu0 0.0
    %2265 = vmatmul.mubr.f32.gmra.mrb[0].mxu0 %v2025
    %v2266 = vpop.f32.mrb[0].mxu0
    %v2267 = vadd.f32 %v2199, %v2266
    %v2268 = vpop.f32.mrb[0].mxu0
    %2269 = vmatprep.mubr.f32.mxu0 0.0
    %2270 = vmatmul.mubr.f32.gmra.mrb[0].mxu0 %v2028
    %v2271 = vpop.f32.mrb[0].mxu0
    %v2272 = vadd.f32 %v2199, %v2271
    %v2273 = vpop.f32.mrb[0].mxu0
    %2274 = vdwg.mxu0
    %v2276 = vsel %vm306, %v2097, 0
    %v2279 = vsel %vm306, %v2182, 0
    %2281 = vmatprep.subr.mxu0 0.0
    %2282 = vmatpush1.xpose.msra.mxu0 %v2279
    %2283 = vmatprep.subr.mxu0 0.0
    %2284 = vmatpush1.xpose.msra.mxu0 0.0
    %2285 = vmatprep.subr.mxu0 0.0
    %2286 = vmatpush1.xpose.msra.mxu0 0.0
    %2287 = vmatprep.subr.mxu0 0.0
    %2288 = vmatpush1.xpose.msra.mxu0 0.0
    %2289 = vmatprep.subr.mxu0 0.0
    %2290 = vmatpush1.xpose.msra.mxu0 0.0
    %2291 = vmatprep.subr.mxu0 0.0
    %2292 = vmatpush1.xpose.msra.mxu0 0.0
    %2293 = vmatprep.subr.mxu0 0.0
    %2294 = vmatpush1.xpose.msra.mxu0 0.0
    %2295 = vmatprep.subr.mxu0 0.0
    %2296 = vmatpush1.xpose.msra.mxu0 0.0
    %2297 = vmatprep.subr.mxu0 0.0
    %2298 = vmatpush1.xpose.msra.mxu0 0.0
    %2299 = vmatprep.subr.mxu0 0.0
    %2300 = vmatpush1.xpose.msra.mxu0 0.0
    %2301 = vmatprep.subr.mxu0 0.0
    %2302 = vmatpush1.xpose.msra.mxu0 0.0
    %2303 = vmatprep.subr.mxu0 0.0
    %2304 = vmatpush1.xpose.msra.mxu0 0.0
    %2305 = vmatprep.subr.mxu0 0.0
    %2306 = vmatpush1.xpose.msra.mxu0 0.0
    %2307 = vmatprep.subr.mxu0 0.0
    %2308 = vmatpush1.xpose.msra.mxu0 0.0
    %2309 = vmatprep.subr.mxu0 0.0
    %2310 = vmatpush1.xpose.msra.mxu0 0.0
    %2311 = vmatprep.subr.mxu0 0.0
    %2312 = vmatpush1.xpose.msra.mxu0 0.0
    %2313 = vmatprep.subr.mxu0 0.0
    %2314 = vmatpush1.xpose.msra.mxu0 0.0
    %2315 = vmatprep.subr.mxu0 0.0
    %2316 = vmatpush1.xpose.msra.mxu0 0.0
    %2317 = vmatprep.subr.mxu0 0.0
    %2318 = vmatpush1.xpose.msra.mxu0 0.0
    %2319 = vmatprep.subr.mxu0 0.0
    %2320 = vmatpush1.xpose.msra.mxu0 0.0
    %2321 = vmatprep.subr.mxu0 0.0
    %2322 = vmatpush1.xpose.msra.mxu0 0.0
    %2323 = vmatprep.subr.mxu0 0.0
    %2324 = vmatpush1.xpose.msra.mxu0 0.0
    %2325 = vmatprep.subr.mxu0 0.0
    %2326 = vmatpush1.xpose.msra.mxu0 0.0
    %2327 = vmatprep.subr.mxu0 0.0
    %2328 = vmatpush1.xpose.msra.mxu0 0.0
    %2329 = vmatprep.subr.mxu0 0.0
    %2330 = vmatpush1.xpose.msra.mxu0 0.0
    %2331 = vmatprep.subr.mxu0 0.0
    %2332 = vmatpush1.xpose.msra.mxu0 0.0
    %2333 = vmatprep.subr.mxu0 0.0
    %2334 = vmatpush1.xpose.msra.mxu0 0.0
    %2335 = vmatprep.subr.mxu0 0.0
    %2336 = vmatpush1.xpose.msra.mxu0 0.0
    %2337 = vmatprep.subr.mxu0 0.0
    %2338 = vmatpush1.xpose.msra.mxu0 0.0
    %2339 = vmatprep.subr.mxu0 0.0
    %2340 = vmatpush1.xpose.msra.mxu0 0.0
    %2341 = vmatprep.subr.mxu0 0.0
    %2342 = vmatpush1.xpose.msra.mxu0 0.0
    %2343 = vmatprep.subr.mxu0 0.0
    %2344 = vmatpush1.xpose.msra.mxu0 0.0
    %2345 = vmatprep.mubr.f32.mxu0 0.0
    %2346 = vmatmul.mubr.f32.gmra.mrb[0].mxu0 %v2276
    %v2347 = vpop.f32.mrb[0].mxu0
    %v2348 = vadd.f32 %v44, %v2347
    %v2349 = vpop.f32.mrb[0].mxu0
    %2350 = vdwg.mxu0
    %v2352 = vsel %vm306, %v2102, 0
    %v2355 = vsel %vm306, %v2187, 0
    %2357 = vmatprep.subr.mxu0 0.0
    %2358 = vmatpush1.xpose.msra.mxu0 %v2355
    %2359 = vmatprep.subr.mxu0 0.0
    %2360 = vmatpush1.xpose.msra.mxu0 0.0
    %2361 = vmatprep.subr.mxu0 0.0
    %2362 = vmatpush1.xpose.msra.mxu0 0.0
    %2363 = vmatprep.subr.mxu0 0.0
    %2364 = vmatpush1.xpose.msra.mxu0 0.0
    %2365 = vmatprep.subr.mxu0 0.0
    %2366 = vmatpush1.xpose.msra.mxu0 0.0
    %2367 = vmatprep.subr.mxu0 0.0
    %2368 = vmatpush1.xpose.msra.mxu0 0.0
    %2369 = vmatprep.subr.mxu0 0.0
    %2370 = vmatpush1.xpose.msra.mxu0 0.0
    %2371 = vmatprep.subr.mxu0 0.0
    %2372 = vmatpush1.xpose.msra.mxu0 0.0
    %2373 = vmatprep.subr.mxu0 0.0
    %2374 = vmatpush1.xpose.msra.mxu0 0.0
    %2375 = vmatprep.subr.mxu0 0.0
    %2376 = vmatpush1.xpose.msra.mxu0 0.0
    %2377 = vmatprep.subr.mxu0 0.0
    %2378 = vmatpush1.xpose.msra.mxu0 0.0
    %2379 = vmatprep.subr.mxu0 0.0
    %2380 = vmatpush1.xpose.msra.mxu0 0.0
    %2381 = vmatprep.subr.mxu0 0.0
    %2382 = vmatpush1.xpose.msra.mxu0 0.0
    %2383 = vmatprep.subr.mxu0 0.0
    %2384 = vmatpush1.xpose.msra.mxu0 0.0
    %2385 = vmatprep.subr.mxu0 0.0
    %2386 = vmatpush1.xpose.msra.mxu0 0.0
    %2387 = vmatprep.subr.mxu0 0.0
    %2388 = vmatpush1.xpose.msra.mxu0 0.0
    %2389 = vmatprep.subr.mxu0 0.0
    %2390 = vmatpush1.xpose.msra.mxu0 0.0
    %2391 = vmatprep.subr.mxu0 0.0
    %2392 = vmatpush1.xpose.msra.mxu0 0.0
    %2393 = vmatprep.subr.mxu0 0.0
    %2394 = vmatpush1.xpose.msra.mxu0 0.0
    %2395 = vmatprep.subr.mxu0 0.0
    %2396 = vmatpush1.xpose.msra.mxu0 0.0
    %2397 = vmatprep.subr.mxu0 0.0
    %2398 = vmatpush1.xpose.msra.mxu0 0.0
    %2399 = vmatprep.subr.mxu0 0.0
    %2400 = vmatpush1.xpose.msra.mxu0 0.0
    %2401 = vmatprep.subr.mxu0 0.0
    %2402 = vmatpush1.xpose.msra.mxu0 0.0
    %2403 = vmatprep.subr.mxu0 0.0
    %2404 = vmatpush1.xpose.msra.mxu0 0.0
    %2405 = vmatprep.subr.mxu0 0.0
    %2406 = vmatpush1.xpose.msra.mxu0 0.0
    %2407 = vmatprep.subr.mxu0 0.0
    %2408 = vmatpush1.xpose.msra.mxu0 0.0
    %2409 = vmatprep.subr.mxu0 0.0
    %2410 = vmatpush1.xpose.msra.mxu0 0.0
    %2411 = vmatprep.subr.mxu0 0.0
    %2412 = vmatpush1.xpose.msra.mxu0 0.0
    %2413 = vmatprep.subr.mxu0 0.0
    %2414 = vmatpush1.xpose.msra.mxu0 0.0
    %2415 = vmatprep.subr.mxu0 0.0
    %2416 = vmatpush1.xpose.msra.mxu0 0.0
    %2417 = vmatprep.subr.mxu0 0.0
    %2418 = vmatpush1.xpose.msra.mxu0 0.0
    %2419 = vmatprep.subr.mxu0 0.0
    %2420 = vmatpush1.xpose.msra.mxu0 0.0
    %2421 = vmatprep.mubr.f32.mxu0 0.0
    %2422 = vmatmul.mubr.f32.gmra.mrb[0].mxu0 %v2352
    %v2423 = vpop.f32.mrb[0].mxu0
    %v2424 = vadd.f32 %v44, %v2423
    %v2425 = vpop.f32.mrb[0].mxu0
    %2426 = vdwg.mxu0
    %v2427 = vsel %vm306, %v2348, -inf
    %2428 = vmax.xlane.f32.xlu0 %v2427
    %v2429 = vpop.xlane.xlu0 %2428
    %v2430 = vsel %vm306, %v2424, -inf
    %2431 = vmax.xlane.f32.xlu0 %v2430
    %v2432 = vpop.xlane.xlu0 %2431
    %v2433 = vsub.f32 %v2348, %v2429
    %v2434 = vsub.f32 %v2424, %v2432
    %v2435 = vmul.f32 %v2433, 1.442695
    %v2436 = vpow.pop %v2435
    %v2437 = vmul.f32 %v2434, 1.442695
    %v2438 = vpow.pop %v2437
    %v2439 = vsel %vm306, %v2436, 0.0
    %2440 = vadd.xlane.f32.xlu0 %v2439
    %v2441 = vpop.xlane.xlu0 %2440
    %v2442 = vsel %vm306, %v2438, 0.0
    %2443 = vadd.xlane.f32.xlu0 %v2442
    %v2444 = vpop.xlane.xlu0 %2443
    %v2445 = vrcp.pop %v2441
    %v2446 = vrcp.pop %v2444
    %v2447 = vmul.f32 %v2436, %v2445
    %v2448 = vmul.f32 %v2438, %v2446
    %v2450 = vsel %vm306, %v2447, 0
    %2452 = vmatprep.subr.mxu0 0.0
    %2453 = vmatpush1.msra.mxu0 %v2267
    %2454 = vmatprep.subr.mxu0 0.0
    %2455 = vmatpush1.msra.mxu0 0.0
    %2456 = vmatprep.subr.mxu0 0.0
    %2457 = vmatpush1.msra.mxu0 0.0
    %2458 = vmatprep.subr.mxu0 0.0
    %2459 = vmatpush1.msra.mxu0 0.0
    %2460 = vmatprep.subr.mxu0 0.0
    %2461 = vmatpush1.msra.mxu0 0.0
    %2462 = vmatprep.subr.mxu0 0.0
    %2463 = vmatpush1.msra.mxu0 0.0
    %2464 = vmatprep.subr.mxu0 0.0
    %2465 = vmatpush1.msra.mxu0 0.0
    %2466 = vmatprep.subr.mxu0 0.0
    %2467 = vmatpush1.msra.mxu0 0.0
    %2468 = vmatprep.subr.mxu0 0.0
    %2469 = vmatpush1.msra.mxu0 0.0
    %2470 = vmatprep.subr.mxu0 0.0
    %2471 = vmatpush1.msra.mxu0 0.0
    %2472 = vmatprep.subr.mxu0 0.0
    %2473 = vmatpush1.msra.mxu0 0.0
    %2474 = vmatprep.subr.mxu0 0.0
    %2475 = vmatpush1.msra.mxu0 0.0
    %2476 = vmatprep.subr.mxu0 0.0
    %2477 = vmatpush1.msra.mxu0 0.0
    %2478 = vmatprep.subr.mxu0 0.0
    %2479 = vmatpush1.msra.mxu0 0.0
    %2480 = vmatprep.subr.mxu0 0.0
    %2481 = vmatpush1.msra.mxu0 0.0
    %2482 = vmatprep.subr.mxu0 0.0
    %2483 = vmatpush1.msra.mxu0 0.0
    %2484 = vmatprep.subr.mxu0 0.0
    %2485 = vmatpush1.msra.mxu0 0.0
    %2486 = vmatprep.subr.mxu0 0.0
    %2487 = vmatpush1.msra.mxu0 0.0
    %2488 = vmatprep.subr.mxu0 0.0
    %2489 = vmatpush1.msra.mxu0 0.0
    %2490 = vmatprep.subr.mxu0 0.0
    %2491 = vmatpush1.msra.mxu0 0.0
    %2492 = vmatprep.subr.mxu0 0.0
    %2493 = vmatpush1.msra.mxu0 0.0
    %2494 = vmatprep.subr.mxu0 0.0
    %2495 = vmatpush1.msra.mxu0 0.0
    %2496 = vmatprep.subr.mxu0 0.0
    %2497 = vmatpush1.msra.mxu0 0.0
    %2498 = vmatprep.subr.mxu0 0.0
    %2499 = vmatpush1.msra.mxu0 0.0
    %2500 = vmatprep.subr.mxu0 0.0
    %2501 = vmatpush1.msra.mxu0 0.0
    %2502 = vmatprep.subr.mxu0 0.0
    %2503 = vmatpush1.msra.mxu0 0.0
    %2504 = vmatprep.subr.mxu0 0.0
    %2505 = vmatpush1.msra.mxu0 0.0
    %2506 = vmatprep.subr.mxu0 0.0
    %2507 = vmatpush1.msra.mxu0 0.0
    %2508 = vmatprep.subr.mxu0 0.0
    %2509 = vmatpush1.msra.mxu0 0.0
    %2510 = vmatprep.subr.mxu0 0.0
    %2511 = vmatpush1.msra.mxu0 0.0
    %2512 = vmatprep.subr.mxu0 0.0
    %2513 = vmatpush1.msra.mxu0 0.0
    %2514 = vmatprep.subr.mxu0 0.0
    %2515 = vmatpush1.msra.mxu0 0.0
    %2516 = vmatprep.mubr.f32.mxu0 0.0
    %2517 = vmatmul.mubr.f32.gmra.mrb[0].mxu0 %v2450
    %v2518 = vpop.f32.mrb[0].mxu0
    %v2519 = vadd.f32 0.0, %v2518
    %v2520 = vpop.f32.mrb[0].mxu0
    %2521 = vdwg.mxu0
    %v2523 = vsel %vm306, %v2448, 0
    %2525 = vmatprep.subr.mxu0 0.0
    %2526 = vmatpush1.msra.mxu0 %v2272
    %2527 = vmatprep.subr.mxu0 0.0
    %2528 = vmatpush1.msra.mxu0 0.0
    %2529 = vmatprep.subr.mxu0 0.0
    %2530 = vmatpush1.msra.mxu0 0.0
    %2531 = vmatprep.subr.mxu0 0.0
    %2532 = vmatpush1.msra.mxu0 0.0
    %2533 = vmatprep.subr.mxu0 0.0
    %2534 = vmatpush1.msra.mxu0 0.0
    %2535 = vmatprep.subr.mxu0 0.0
    %2536 = vmatpush1.msra.mxu0 0.0
    %2537 = vmatprep.subr.mxu0 0.0
    %2538 = vmatpush1.msra.mxu0 0.0
    %2539 = vmatprep.subr.mxu0 0.0
    %2540 = vmatpush1.msra.mxu0 0.0
    %2541 = vmatprep.subr.mxu0 0.0
    %2542 = vmatpush1.msra.mxu0 0.0
    %2543 = vmatprep.subr.mxu0 0.0
    %2544 = vmatpush1.msra.mxu0 0.0
    %2545 = vmatprep.subr.mxu0 0.0
    %2546 = vmatpush1.msra.mxu0 0.0
    %2547 = vmatprep.subr.mxu0 0.0
    %2548 = vmatpush1.msra.mxu0 0.0
    %2549 = vmatprep.subr.mxu0 0.0
    %2550 = vmatpush1.msra.mxu0 0.0
    %2551 = vmatprep.subr.mxu0 0.0
    %2552 = vmatpush1.msra.mxu0 0.0
    %2553 = vmatprep.subr.mxu0 0.0
    %2554 = vmatpush1.msra.mxu0 0.0
    %2555 = vmatprep.subr.mxu0 0.0
    %2556 = vmatpush1.msra.mxu0 0.0
    %2557 = vmatprep.subr.mxu0 0.0
    %2558 = vmatpush1.msra.mxu0 0.0
    %2559 = vmatprep.subr.mxu0 0.0
    %2560 = vmatpush1.msra.mxu0 0.0
    %2561 = vmatprep.subr.mxu0 0.0
    %2562 = vmatpush1.msra.mxu0 0.0
    %2563 = vmatprep.subr.mxu0 0.0
    %2564 = vmatpush1.msra.mxu0 0.0
    %2565 = vmatprep.subr.mxu0 0.0
    %2566 = vmatpush1.msra.mxu0 0.0
    %2567 = vmatprep.subr.mxu0 0.0
    %2568 = vmatpush1.msra.mxu0 0.0
    %2569 = vmatprep.subr.mxu0 0.0
    %2570 = vmatpush1.msra.mxu0 0.0
    %2571 = vmatprep.subr.mxu0 0.0
    %2572 = vmatpush1.msra.mxu0 0.0
    %2573 = vmatprep.subr.mxu0 0.0
    %2574 = vmatpush1.msra.mxu0 0.0
    %2575 = vmatprep.subr.mxu0 0.0
    %2576 = vmatpush1.msra.mxu0 0.0
    %2577 = vmatprep.subr.mxu0 0.0
    %2578 = vmatpush1.msra.mxu0 0.0
    %2579 = vmatprep.subr.mxu0 0.0
    %2580 = vmatpush1.msra.mxu0 0.0
    %2581 = vmatprep.subr.mxu0 0.0
    %2582 = vmatpush1.msra.mxu0 0.0
    %2583 = vmatprep.subr.mxu0 0.0
    %2584 = vmatpush1.msra.mxu0 0.0
    %2585 = vmatprep.subr.mxu0 0.0
    %2586 = vmatpush1.msra.mxu0 0.0
    %2587 = vmatprep.subr.mxu0 0.0
    %2588 = vmatpush1.msra.mxu0 0.0
    %2589 = vmatprep.mubr.f32.mxu0 0.0
    %2590 = vmatmul.mubr.f32.gmra.mrb[0].mxu0 %v2523
    %v2591 = vpop.f32.mrb[0].mxu0
    %v2592 = vadd.f32 0.0, %v2591
    %v2593 = vpop.f32.mrb[0].mxu0
    %2594 = vdwg.mxu0
    %2595 = vrot.lane.b32.xlu0 %v2097, 120
    %v2596 = vpop.permute.xlu0 %2595
    %2597 = vrot.lane.b32.xlu0 %v2182, 120
    %v2598 = vpop.permute.xlu0 %2597
    %v2599 = vsel %vm306, %v2596, 0
    %v2601 = vsel %vm306, %v2598, 0
    %2603 = vmatprep.subr.mxu0 0.0
    %2604 = vmatpush1.xpose.msra.mxu0 %v2601
    %2605 = vmatprep.subr.mxu0 0.0
    %2606 = vmatpush1.xpose.msra.mxu0 0.0
    %2607 = vmatprep.subr.mxu0 0.0
    %2608 = vmatpush1.xpose.msra.mxu0 0.0
    %2609 = vmatprep.subr.mxu0 0.0
    %2610 = vmatpush1.xpose.msra.mxu0 0.0
    %2611 = vmatprep.subr.mxu0 0.0
    %2612 = vmatpush1.xpose.msra.mxu0 0.0
    %2613 = vmatprep.subr.mxu0 0.0
    %2614 = vmatpush1.xpose.msra.mxu0 0.0
    %2615 = vmatprep.subr.mxu0 0.0
    %2616 = vmatpush1.xpose.msra.mxu0 0.0
    %2617 = vmatprep.subr.mxu0 0.0
    %2618 = vmatpush1.xpose.msra.mxu0 0.0
    %2619 = vmatprep.subr.mxu0 0.0
    %2620 = vmatpush1.xpose.msra.mxu0 0.0
    %2621 = vmatprep.subr.mxu0 0.0
    %2622 = vmatpush1.xpose.msra.mxu0 0.0
    %2623 = vmatprep.subr.mxu0 0.0
    %2624 = vmatpush1.xpose.msra.mxu0 0.0
    %2625 = vmatprep.subr.mxu0 0.0
    %2626 = vmatpush1.xpose.msra.mxu0 0.0
    %2627 = vmatprep.subr.mxu0 0.0
    %2628 = vmatpush1.xpose.msra.mxu0 0.0
    %2629 = vmatprep.subr.mxu0 0.0
    %2630 = vmatpush1.xpose.msra.mxu0 0.0
    %2631 = vmatprep.subr.mxu0 0.0
    %2632 = vmatpush1.xpose.msra.mxu0 0.0
    %2633 = vmatprep.subr.mxu0 0.0
    %2634 = vmatpush1.xpose.msra.mxu0 0.0
    %2635 = vmatprep.subr.mxu0 0.0
    %2636 = vmatpush1.xpose.msra.mxu0 0.0
    %2637 = vmatprep.subr.mxu0 0.0
    %2638 = vmatpush1.xpose.msra.mxu0 0.0
    %2639 = vmatprep.subr.mxu0 0.0
    %2640 = vmatpush1.xpose.msra.mxu0 0.0
    %2641 = vmatprep.subr.mxu0 0.0
    %2642 = vmatpush1.xpose.msra.mxu0 0.0
    %2643 = vmatprep.subr.mxu0 0.0
    %2644 = vmatpush1.xpose.msra.mxu0 0.0
    %2645 = vmatprep.subr.mxu0 0.0
    %2646 = vmatpush1.xpose.msra.mxu0 0.0
    %2647 = vmatprep.subr.mxu0 0.0
    %2648 = vmatpush1.xpose.msra.mxu0 0.0
    %2649 = vmatprep.subr.mxu0 0.0
    %2650 = vmatpush1.xpose.msra.mxu0 0.0
    %2651 = vmatprep.subr.mxu0 0.0
    %2652 = vmatpush1.xpose.msra.mxu0 0.0
    %2653 = vmatprep.subr.mxu0 0.0
    %2654 = vmatpush1.xpose.msra.mxu0 0.0
    %2655 = vmatprep.subr.mxu0 0.0
    %2656 = vmatpush1.xpose.msra.mxu0 0.0
    %2657 = vmatprep.subr.mxu0 0.0
    %2658 = vmatpush1.xpose.msra.mxu0 0.0
    %2659 = vmatprep.subr.mxu0 0.0
    %2660 = vmatpush1.xpose.msra.mxu0 0.0
    %2661 = vmatprep.subr.mxu0 0.0
    %2662 = vmatpush1.xpose.msra.mxu0 0.0
    %2663 = vmatprep.subr.mxu0 0.0
    %2664 = vmatpush1.xpose.msra.mxu0 0.0
    %2665 = vmatprep.subr.mxu0 0.0
    %2666 = vmatpush1.xpose.msra.mxu0 0.0
    %2667 = vmatprep.mubr.f32.mxu0 0.0
    %2668 = vmatmul.mubr.f32.gmra.mrb[0].mxu0 %v2599
    %v2669 = vpop.f32.mrb[0].mxu0
    %v2670 = vadd.f32 %v44, %v2669
    %v2671 = vpop.f32.mrb[0].mxu0
    %2672 = vdwg.mxu0
    %2673 = vrot.lane.b32.xlu0 %v2102, 120
    %v2674 = vpop.permute.xlu0 %2673
    %2675 = vrot.lane.b32.xlu0 %v2187, 120
    %v2676 = vpop.permute.xlu0 %2675
    %v2677 = vsel %vm306, %v2674, 0
    %v2679 = vsel %vm306, %v2676, 0
    %2681 = vmatprep.subr.mxu0 0.0
    %2682 = vmatpush1.xpose.msra.mxu0 %v2679
    %2683 = vmatprep.subr.mxu0 0.0
    %2684 = vmatpush1.xpose.msra.mxu0 0.0
    %2685 = vmatprep.subr.mxu0 0.0
    %2686 = vmatpush1.xpose.msra.mxu0 0.0
    %2687 = vmatprep.subr.mxu0 0.0
    %2688 = vmatpush1.xpose.msra.mxu0 0.0
    %2689 = vmatprep.subr.mxu0 0.0
    %2690 = vmatpush1.xpose.msra.mxu0 0.0
    %2691 = vmatprep.subr.mxu0 0.0
    %2692 = vmatpush1.xpose.msra.mxu0 0.0
    %2693 = vmatprep.subr.mxu0 0.0
    %2694 = vmatpush1.xpose.msra.mxu0 0.0
    %2695 = vmatprep.subr.mxu0 0.0
    %2696 = vmatpush1.xpose.msra.mxu0 0.0
    %2697 = vmatprep.subr.mxu0 0.0
    %2698 = vmatpush1.xpose.msra.mxu0 0.0
    %2699 = vmatprep.subr.mxu0 0.0
    %2700 = vmatpush1.xpose.msra.mxu0 0.0
    %2701 = vmatprep.subr.mxu0 0.0
    %2702 = vmatpush1.xpose.msra.mxu0 0.0
    %2703 = vmatprep.subr.mxu0 0.0
    %2704 = vmatpush1.xpose.msra.mxu0 0.0
    %2705 = vmatprep.subr.mxu0 0.0
    %2706 = vmatpush1.xpose.msra.mxu0 0.0
    %2707 = vmatprep.subr.mxu0 0.0
    %2708 = vmatpush1.xpose.msra.mxu0 0.0
    %2709 = vmatprep.subr.mxu0 0.0
    %2710 = vmatpush1.xpose.msra.mxu0 0.0
    %2711 = vmatprep.subr.mxu0 0.0
    %2712 = vmatpush1.xpose.msra.mxu0 0.0
    %2713 = vmatprep.subr.mxu0 0.0
    %2714 = vmatpush1.xpose.msra.mxu0 0.0
    %2715 = vmatprep.subr.mxu0 0.0
    %2716 = vmatpush1.xpose.msra.mxu0 0.0
    %2717 = vmatprep.subr.mxu0 0.0
    %2718 = vmatpush1.xpose.msra.mxu0 0.0
    %2719 = vmatprep.subr.mxu0 0.0
    %2720 = vmatpush1.xpose.msra.mxu0 0.0
    %2721 = vmatprep.subr.mxu0 0.0
    %2722 = vmatpush1.xpose.msra.mxu0 0.0
    %2723 = vmatprep.subr.mxu0 0.0
    %2724 = vmatpush1.xpose.msra.mxu0 0.0
    %2725 = vmatprep.subr.mxu0 0.0
    %2726 = vmatpush1.xpose.msra.mxu0 0.0
    %2727 = vmatprep.subr.mxu0 0.0
    %2728 = vmatpush1.xpose.msra.mxu0 0.0
    %2729 = vmatprep.subr.mxu0 0.0
    %2730 = vmatpush1.xpose.msra.mxu0 0.0
    %2731 = vmatprep.subr.mxu0 0.0
    %2732 = vmatpush1.xpose.msra.mxu0 0.0
    %2733 = vmatprep.subr.mxu0 0.0
    %2734 = vmatpush1.xpose.msra.mxu0 0.0
    %2735 = vmatprep.subr.mxu0 0.0
    %2736 = vmatpush1.xpose.msra.mxu0 0.0
    %2737 = vmatprep.subr.mxu0 0.0
    %2738 = vmatpush1.xpose.msra.mxu0 0.0
    %2739 = vmatprep.subr.mxu0 0.0
    %2740 = vmatpush1.xpose.msra.mxu0 0.0
    %2741 = vmatprep.subr.mxu0 0.0
    %2742 = vmatpush1.xpose.msra.mxu0 0.0
    %2743 = vmatprep.subr.mxu0 0.0
    %2744 = vmatpush1.xpose.msra.mxu0 0.0
    %2745 = vmatprep.mubr.f32.mxu0 0.0
    %2746 = vmatmul.mubr.f32.gmra.mrb[0].mxu0 %v2677
    %v2747 = vpop.f32.mrb[0].mxu0
    %v2748 = vadd.f32 %v44, %v2747
    %v2749 = vpop.f32.mrb[0].mxu0
    %2750 = vdwg.mxu0
    %v2751 = vsel %vm306, %v2670, -inf
    %2752 = vmax.xlane.f32.xlu0 %v2751
    %v2753 = vpop.xlane.xlu0 %2752
    %v2754 = vsel %vm306, %v2748, -inf
    %2755 = vmax.xlane.f32.xlu0 %v2754
    %v2756 = vpop.xlane.xlu0 %2755
    %v2757 = vsub.f32 %v2670, %v2753
    %v2758 = vsub.f32 %v2748, %v2756
    %v2759 = vmul.f32 %v2757, 1.442695
    %v2760 = vpow.pop %v2759
    %v2761 = vmul.f32 %v2758, 1.442695
    %v2762 = vpow.pop %v2761
    %v2763 = vsel %vm306, %v2760, 0.0
    %2764 = vadd.xlane.f32.xlu0 %v2763
    %v2765 = vpop.xlane.xlu0 %2764
    %v2766 = vsel %vm306, %v2762, 0.0
    %2767 = vadd.xlane.f32.xlu0 %v2766
    %v2768 = vpop.xlane.xlu0 %2767
    %v2769 = vrcp.pop %v2765
    %v2770 = vrcp.pop %v2768
    %v2771 = vmul.f32 %v2760, %v2769
    %v2772 = vmul.f32 %v2762, %v2770
    %2774 = vrot.lane.b32.xlu0 %v2267, 120
    %v2775 = vpop.permute.xlu0 %2774
    %v2778 = vsel %vm306, %v2771, 0
    %2780 = vmatprep.subr.mxu0 0.0
    %2781 = vmatpush1.msra.mxu0 %v2775
    %2782 = vmatprep.subr.mxu0 0.0
    %2783 = vmatpush1.msra.mxu0 0.0
    %2784 = vmatprep.subr.mxu0 0.0
    %2785 = vmatpush1.msra.mxu0 0.0
    %2786 = vmatprep.subr.mxu0 0.0
    %2787 = vmatpush1.msra.mxu0 0.0
    %2788 = vmatprep.subr.mxu0 0.0
    %2789 = vmatpush1.msra.mxu0 0.0
    %2790 = vmatprep.subr.mxu0 0.0
    %2791 = vmatpush1.msra.mxu0 0.0
    %2792 = vmatprep.subr.mxu0 0.0
    %2793 = vmatpush1.msra.mxu0 0.0
    %2794 = vmatprep.subr.mxu0 0.0
    %2795 = vmatpush1.msra.mxu0 0.0
    %2796 = vmatprep.subr.mxu0 0.0
    %2797 = vmatpush1.msra.mxu0 0.0
    %2798 = vmatprep.subr.mxu0 0.0
    %2799 = vmatpush1.msra.mxu0 0.0
    %2800 = vmatprep.subr.mxu0 0.0
    %2801 = vmatpush1.msra.mxu0 0.0
    %2802 = vmatprep.subr.mxu0 0.0
    %2803 = vmatpush1.msra.mxu0 0.0
    %2804 = vmatprep.subr.mxu0 0.0
    %2805 = vmatpush1.msra.mxu0 0.0
    %2806 = vmatprep.subr.mxu0 0.0
    %2807 = vmatpush1.msra.mxu0 0.0
    %2808 = vmatprep.subr.mxu0 0.0
    %2809 = vmatpush1.msra.mxu0 0.0
    %2810 = vmatprep.subr.mxu0 0.0
    %2811 = vmatpush1.msra.mxu0 0.0
    %2812 = vmatprep.subr.mxu0 0.0
    %2813 = vmatpush1.msra.mxu0 0.0
    %2814 = vmatprep.subr.mxu0 0.0
    %2815 = vmatpush1.msra.mxu0 0.0
    %2816 = vmatprep.subr.mxu0 0.0
    %2817 = vmatpush1.msra.mxu0 0.0
    %2818 = vmatprep.subr.mxu0 0.0
    %2819 = vmatpush1.msra.mxu0 0.0
    %2820 = vmatprep.subr.mxu0 0.0
    %2821 = vmatpush1.msra.mxu0 0.0
    %2822 = vmatprep.subr.mxu0 0.0
    %2823 = vmatpush1.msra.mxu0 0.0
    %2824 = vmatprep.subr.mxu0 0.0
    %2825 = vmatpush1.msra.mxu0 0.0
    %2826 = vmatprep.subr.mxu0 0.0
    %2827 = vmatpush1.msra.mxu0 0.0
    %2828 = vmatprep.subr.mxu0 0.0
    %2829 = vmatpush1.msra.mxu0 0.0
    %2830 = vmatprep.subr.mxu0 0.0
    %2831 = vmatpush1.msra.mxu0 0.0
    %2832 = vmatprep.subr.mxu0 0.0
    %2833 = vmatpush1.msra.mxu0 0.0
    %2834 = vmatprep.subr.mxu0 0.0
    %2835 = vmatpush1.msra.mxu0 0.0
    %2836 = vmatprep.subr.mxu0 0.0
    %2837 = vmatpush1.msra.mxu0 0.0
    %2838 = vmatprep.subr.mxu0 0.0
    %2839 = vmatpush1.msra.mxu0 0.0
    %2840 = vmatprep.subr.mxu0 0.0
    %2841 = vmatpush1.msra.mxu0 0.0
    %2842 = vmatprep.subr.mxu0 0.0
    %2843 = vmatpush1.msra.mxu0 0.0
    %2844 = vmatprep.mubr.f32.mxu0 0.0
    %2845 = vmatmul.mubr.f32.gmra.mrb[0].mxu0 %v2778
    %v2846 = vpop.f32.mrb[0].mxu0
    %v2847 = vadd.f32 0.0, %v2846
    %v2848 = vpop.f32.mrb[0].mxu0
    %2849 = vdwg.mxu0
    %2851 = vrot.lane.b32.xlu0 %v2272, 120
    %v2852 = vpop.permute.xlu0 %2851
    %v2855 = vsel %vm306, %v2772, 0
    %2857 = vmatprep.subr.mxu0 0.0
    %2858 = vmatpush1.msra.mxu0 %v2852
    %2859 = vmatprep.subr.mxu0 0.0
    %2860 = vmatpush1.msra.mxu0 0.0
    %2861 = vmatprep.subr.mxu0 0.0
    %2862 = vmatpush1.msra.mxu0 0.0
    %2863 = vmatprep.subr.mxu0 0.0
    %2864 = vmatpush1.msra.mxu0 0.0
    %2865 = vmatprep.subr.mxu0 0.0
    %2866 = vmatpush1.msra.mxu0 0.0
    %2867 = vmatprep.subr.mxu0 0.0
    %2868 = vmatpush1.msra.mxu0 0.0
    %2869 = vmatprep.subr.mxu0 0.0
    %2870 = vmatpush1.msra.mxu0 0.0
    %2871 = vmatprep.subr.mxu0 0.0
    %2872 = vmatpush1.msra.mxu0 0.0
    %2873 = vmatprep.subr.mxu0 0.0
    %2874 = vmatpush1.msra.mxu0 0.0
    %2875 = vmatprep.subr.mxu0 0.0
    %2876 = vmatpush1.msra.mxu0 0.0
    %2877 = vmatprep.subr.mxu0 0.0
    %2878 = vmatpush1.msra.mxu0 0.0
    %2879 = vmatprep.subr.mxu0 0.0
    %2880 = vmatpush1.msra.mxu0 0.0
    %2881 = vmatprep.subr.mxu0 0.0
    %2882 = vmatpush1.msra.mxu0 0.0
    %2883 = vmatprep.subr.mxu0 0.0
    %2884 = vmatpush1.msra.mxu0 0.0
    %2885 = vmatprep.subr.mxu0 0.0
    %2886 = vmatpush1.msra.mxu0 0.0
    %2887 = vmatprep.subr.mxu0 0.0
    %2888 = vmatpush1.msra.mxu0 0.0
    %2889 = vmatprep.subr.mxu0 0.0
    %2890 = vmatpush1.msra.mxu0 0.0
    %2891 = vmatprep.subr.mxu0 0.0
    %2892 = vmatpush1.msra.mxu0 0.0
    %2893 = vmatprep.subr.mxu0 0.0
    %2894 = vmatpush1.msra.mxu0 0.0
    %2895 = vmatprep.subr.mxu0 0.0
    %2896 = vmatpush1.msra.mxu0 0.0
    %2897 = vmatprep.subr.mxu0 0.0
    %2898 = vmatpush1.msra.mxu0 0.0
    %2899 = vmatprep.subr.mxu0 0.0
    %2900 = vmatpush1.msra.mxu0 0.0
    %2901 = vmatprep.subr.mxu0 0.0
    %2902 = vmatpush1.msra.mxu0 0.0
    %2903 = vmatprep.subr.mxu0 0.0
    %2904 = vmatpush1.msra.mxu0 0.0
    %2905 = vmatprep.subr.mxu0 0.0
    %2906 = vmatpush1.msra.mxu0 0.0
    %2907 = vmatprep.subr.mxu0 0.0
    %2908 = vmatpush1.msra.mxu0 0.0
    %2909 = vmatprep.subr.mxu0 0.0
    %2910 = vmatpush1.msra.mxu0 0.0
    %2911 = vmatprep.subr.mxu0 0.0
    %2912 = vmatpush1.msra.mxu0 0.0
    %2913 = vmatprep.subr.mxu0 0.0
    %2914 = vmatpush1.msra.mxu0 0.0
    %2915 = vmatprep.subr.mxu0 0.0
    %2916 = vmatpush1.msra.mxu0 0.0
    %2917 = vmatprep.subr.mxu0 0.0
    %2918 = vmatpush1.msra.mxu0 0.0
    %2919 = vmatprep.subr.mxu0 0.0
    %2920 = vmatpush1.msra.mxu0 0.0
    %2921 = vmatprep.mubr.f32.mxu0 0.0
    %2922 = vmatmul.mubr.f32.gmra.mrb[0].mxu0 %v2855
    %v2923 = vpop.f32.mrb[0].mxu0
    %v2924 = vadd.f32 0.0, %v2923
    %v2925 = vpop.f32.mrb[0].mxu0
    %2926 = vdwg.mxu0
    %2927 = vrot.lane.b32.xlu0 %v2097, 112
    %v2928 = vpop.permute.xlu0 %2927
    %2929 = vrot.lane.b32.xlu0 %v2182, 112
    %v2930 = vpop.permute.xlu0 %2929
    %v2931 = vsel %vm306, %v2928, 0
    %v2933 = vsel %vm306, %v2930, 0
    %2935 = vmatprep.subr.mxu0 0.0
    %2936 = vmatpush1.xpose.msra.mxu0 %v2933
    %2937 = vmatprep.subr.mxu0 0.0
    %2938 = vmatpush1.xpose.msra.mxu0 0.0
    %2939 = vmatprep.subr.mxu0 0.0
    %2940 = vmatpush1.xpose.msra.mxu0 0.0
    %2941 = vmatprep.subr.mxu0 0.0
    %2942 = vmatpush1.xpose.msra.mxu0 0.0
    %2943 = vmatprep.subr.mxu0 0.0
    %2944 = vmatpush1.xpose.msra.mxu0 0.0
    %2945 = vmatprep.subr.mxu0 0.0
    %2946 = vmatpush1.xpose.msra.mxu0 0.0
    %2947 = vmatprep.subr.mxu0 0.0
    %2948 = vmatpush1.xpose.msra.mxu0 0.0
    %2949 = vmatprep.subr.mxu0 0.0
    %2950 = vmatpush1.xpose.msra.mxu0 0.0
    %2951 = vmatprep.subr.mxu0 0.0
    %2952 = vmatpush1.xpose.msra.mxu0 0.0
    %2953 = vmatprep.subr.mxu0 0.0
    %2954 = vmatpush1.xpose.msra.mxu0 0.0
    %2955 = vmatprep.subr.mxu0 0.0
    %2956 = vmatpush1.xpose.msra.mxu0 0.0
    %2957 = vmatprep.subr.mxu0 0.0
    %2958 = vmatpush1.xpose.msra.mxu0 0.0
    %2959 = vmatprep.subr.mxu0 0.0
    %2960 = vmatpush1.xpose.msra.mxu0 0.0
    %2961 = vmatprep.subr.mxu0 0.0
    %2962 = vmatpush1.xpose.msra.mxu0 0.0
    %2963 = vmatprep.subr.mxu0 0.0
    %2964 = vmatpush1.xpose.msra.mxu0 0.0
    %2965 = vmatprep.subr.mxu0 0.0
    %2966 = vmatpush1.xpose.msra.mxu0 0.0
    %2967 = vmatprep.subr.mxu0 0.0
    %2968 = vmatpush1.xpose.msra.mxu0 0.0
    %2969 = vmatprep.subr.mxu0 0.0
    %2970 = vmatpush1.xpose.msra.mxu0 0.0
    %2971 = vmatprep.subr.mxu0 0.0
    %2972 = vmatpush1.xpose.msra.mxu0 0.0
    %2973 = vmatprep.subr.mxu0 0.0
    %2974 = vmatpush1.xpose.msra.mxu0 0.0
    %2975 = vmatprep.subr.mxu0 0.0
    %2976 = vmatpush1.xpose.msra.mxu0 0.0
    %2977 = vmatprep.subr.mxu0 0.0
    %2978 = vmatpush1.xpose.msra.mxu0 0.0
    %2979 = vmatprep.subr.mxu0 0.0
    %2980 = vmatpush1.xpose.msra.mxu0 0.0
    %2981 = vmatprep.subr.mxu0 0.0
    %2982 = vmatpush1.xpose.msra.mxu0 0.0
    %2983 = vmatprep.subr.mxu0 0.0
    %2984 = vmatpush1.xpose.msra.mxu0 0.0
    %2985 = vmatprep.subr.mxu0 0.0
    %2986 = vmatpush1.xpose.msra.mxu0 0.0
    %2987 = vmatprep.subr.mxu0 0.0
    %2988 = vmatpush1.xpose.msra.mxu0 0.0
    %2989 = vmatprep.subr.mxu0 0.0
    %2990 = vmatpush1.xpose.msra.mxu0 0.0
    %2991 = vmatprep.subr.mxu0 0.0
    %2992 = vmatpush1.xpose.msra.mxu0 0.0
    %2993 = vmatprep.subr.mxu0 0.0
    %2994 = vmatpush1.xpose.msra.mxu0 0.0
    %2995 = vmatprep.subr.mxu0 0.0
    %2996 = vmatpush1.xpose.msra.mxu0 0.0
    %2997 = vmatprep.subr.mxu0 0.0
    %2998 = vmatpush1.xpose.msra.mxu0 0.0
    %2999 = vmatprep.mubr.f32.mxu0 0.0
    %3000 = vmatmul.mubr.f32.gmra.mrb[0].mxu0 %v2931
    %v3001 = vpop.f32.mrb[0].mxu0
    %v3002 = vadd.f32 %v44, %v3001
    %v3003 = vpop.f32.mrb[0].mxu0
    %3004 = vdwg.mxu0
    %3005 = vrot.lane.b32.xlu0 %v2102, 112
    %v3006 = vpop.permute.xlu0 %3005
    %3007 = vrot.lane.b32.xlu0 %v2187, 112
    %v3008 = vpop.permute.xlu0 %3007
    %v3009 = vsel %vm306, %v3006, 0
    %v3011 = vsel %vm306, %v3008, 0
    %3013 = vmatprep.subr.mxu0 0.0
    %3014 = vmatpush1.xpose.msra.mxu0 %v3011
    %3015 = vmatprep.subr.mxu0 0.0
    %3016 = vmatpush1.xpose.msra.mxu0 0.0
    %3017 = vmatprep.subr.mxu0 0.0
    %3018 = vmatpush1.xpose.msra.mxu0 0.0
    %3019 = vmatprep.subr.mxu0 0.0
    %3020 = vmatpush1.xpose.msra.mxu0 0.0
    %3021 = vmatprep.subr.mxu0 0.0
    %3022 = vmatpush1.xpose.msra.mxu0 0.0
    %3023 = vmatprep.subr.mxu0 0.0
    %3024 = vmatpush1.xpose.msra.mxu0 0.0
    %3025 = vmatprep.subr.mxu0 0.0
    %3026 = vmatpush1.xpose.msra.mxu0 0.0
    %3027 = vmatprep.subr.mxu0 0.0
    %3028 = vmatpush1.xpose.msra.mxu0 0.0
    %3029 = vmatprep.subr.mxu0 0.0
    %3030 = vmatpush1.xpose.msra.mxu0 0.0
    %3031 = vmatprep.subr.mxu0 0.0
    %3032 = vmatpush1.xpose.msra.mxu0 0.0
    %3033 = vmatprep.subr.mxu0 0.0
    %3034 = vmatpush1.xpose.msra.mxu0 0.0
    %3035 = vmatprep.subr.mxu0 0.0
    %3036 = vmatpush1.xpose.msra.mxu0 0.0
    %3037 = vmatprep.subr.mxu0 0.0
    %3038 = vmatpush1.xpose.msra.mxu0 0.0
    %3039 = vmatprep.subr.mxu0 0.0
    %3040 = vmatpush1.xpose.msra.mxu0 0.0
    %3041 = vmatprep.subr.mxu0 0.0
    %3042 = vmatpush1.xpose.msra.mxu0 0.0
    %3043 = vmatprep.subr.mxu0 0.0
    %3044 = vmatpush1.xpose.msra.mxu0 0.0
    %3045 = vmatprep.subr.mxu0 0.0
    %3046 = vmatpush1.xpose.msra.mxu0 0.0
    %3047 = vmatprep.subr.mxu0 0.0
    %3048 = vmatpush1.xpose.msra.mxu0 0.0
    %3049 = vmatprep.subr.mxu0 0.0
    %3050 = vmatpush1.xpose.msra.mxu0 0.0
    %3051 = vmatprep.subr.mxu0 0.0
    %3052 = vmatpush1.xpose.msra.mxu0 0.0
    %3053 = vmatprep.subr.mxu0 0.0
    %3054 = vmatpush1.xpose.msra.mxu0 0.0
    %3055 = vmatprep.subr.mxu0 0.0
    %3056 = vmatpush1.xpose.msra.mxu0 0.0
    %3057 = vmatprep.subr.mxu0 0.0
    %3058 = vmatpush1.xpose.msra.mxu0 0.0
    %3059 = vmatprep.subr.mxu0 0.0
    %3060 = vmatpush1.xpose.msra.mxu0 0.0
    %3061 = vmatprep.subr.mxu0 0.0
    %3062 = vmatpush1.xpose.msra.mxu0 0.0
    %3063 = vmatprep.subr.mxu0 0.0
    %3064 = vmatpush1.xpose.msra.mxu0 0.0
    %3065 = vmatprep.subr.mxu0 0.0
    %3066 = vmatpush1.xpose.msra.mxu0 0.0
    %3067 = vmatprep.subr.mxu0 0.0
    %3068 = vmatpush1.xpose.msra.mxu0 0.0
    %3069 = vmatprep.subr.mxu0 0.0
    %3070 = vmatpush1.xpose.msra.mxu0 0.0
    %3071 = vmatprep.subr.mxu0 0.0
    %3072 = vmatpush1.xpose.msra.mxu0 0.0
    %3073 = vmatprep.subr.mxu0 0.0
    %3074 = vmatpush1.xpose.msra.mxu0 0.0
    %3075 = vmatprep.subr.mxu0 0.0
    %3076 = vmatpush1.xpose.msra.mxu0 0.0
    %3077 = vmatprep.mubr.f32.mxu0 0.0
    %3078 = vmatmul.mubr.f32.gmra.mrb[0].mxu0 %v3009
    %v3079 = vpop.f32.mrb[0].mxu0
    %v3080 = vadd.f32 %v44, %v3079
    %v3081 = vpop.f32.mrb[0].mxu0
    %3082 = vdwg.mxu0
    %v3083 = vsel %vm306, %v3002, -inf
    %3084 = vmax.xlane.f32.xlu0 %v3083
    %v3085 = vpop.xlane.xlu0 %3084
    %v3086 = vsel %vm306, %v3080, -inf
    %3087 = vmax.xlane.f32.xlu0 %v3086
    %v3088 = vpop.xlane.xlu0 %3087
    %v3089 = vsub.f32 %v3002, %v3085
    %v3090 = vsub.f32 %v3080, %v3088
    %v3091 = vmul.f32 %v3089, 1.442695
    %v3092 = vpow.pop %v3091
    %v3093 = vmul.f32 %v3090, 1.442695
    %v3094 = vpow.pop %v3093
    %v3095 = vsel %vm306, %v3092, 0.0
    %3096 = vadd.xlane.f32.xlu0 %v3095
    %v3097 = vpop.xlane.xlu0 %3096
    %v3098 = vsel %vm306, %v3094, 0.0
    %3099 = vadd.xlane.f32.xlu0 %v3098
    %v3100 = vpop.xlane.xlu0 %3099
    %v3101 = vrcp.pop %v3097
    %v3102 = vrcp.pop %v3100
    %v3103 = vmul.f32 %v3092, %v3101
    %v3104 = vmul.f32 %v3094, %v3102
    %3105 = vrot.lane.b32.xlu0 %v2267, 112
    %v3106 = vpop.permute.xlu0 %3105
    %v3109 = vsel %vm306, %v3103, 0
    %3111 = vmatprep.subr.mxu0 0.0
    %3112 = vmatpush1.msra.mxu0 %v3106
    %3113 = vmatprep.subr.mxu0 0.0
    %3114 = vmatpush1.msra.mxu0 0.0
    %3115 = vmatprep.subr.mxu0 0.0
    %3116 = vmatpush1.msra.mxu0 0.0
    %3117 = vmatprep.subr.mxu0 0.0
    %3118 = vmatpush1.msra.mxu0 0.0
    %3119 = vmatprep.subr.mxu0 0.0
    %3120 = vmatpush1.msra.mxu0 0.0
    %3121 = vmatprep.subr.mxu0 0.0
    %3122 = vmatpush1.msra.mxu0 0.0
    %3123 = vmatprep.subr.mxu0 0.0
    %3124 = vmatpush1.msra.mxu0 0.0
    %3125 = vmatprep.subr.mxu0 0.0
    %3126 = vmatpush1.msra.mxu0 0.0
    %3127 = vmatprep.subr.mxu0 0.0
    %3128 = vmatpush1.msra.mxu0 0.0
    %3129 = vmatprep.subr.mxu0 0.0
    %3130 = vmatpush1.msra.mxu0 0.0
    %3131 = vmatprep.subr.mxu0 0.0
    %3132 = vmatpush1.msra.mxu0 0.0
    %3133 = vmatprep.subr.mxu0 0.0
    %3134 = vmatpush1.msra.mxu0 0.0
    %3135 = vmatprep.subr.mxu0 0.0
    %3136 = vmatpush1.msra.mxu0 0.0
    %3137 = vmatprep.subr.mxu0 0.0
    %3138 = vmatpush1.msra.mxu0 0.0
    %3139 = vmatprep.subr.mxu0 0.0
    %3140 = vmatpush1.msra.mxu0 0.0
    %3141 = vmatprep.subr.mxu0 0.0
    %3142 = vmatpush1.msra.mxu0 0.0
    %3143 = vmatprep.subr.mxu0 0.0
    %3144 = vmatpush1.msra.mxu0 0.0
    %3145 = vmatprep.subr.mxu0 0.0
    %3146 = vmatpush1.msra.mxu0 0.0
    %3147 = vmatprep.subr.mxu0 0.0
    %3148 = vmatpush1.msra.mxu0 0.0
    %3149 = vmatprep.subr.mxu0 0.0
    %3150 = vmatpush1.msra.mxu0 0.0
    %3151 = vmatprep.subr.mxu0 0.0
    %3152 = vmatpush1.msra.mxu0 0.0
    %3153 = vmatprep.subr.mxu0 0.0
    %3154 = vmatpush1.msra.mxu0 0.0
    %3155 = vmatprep.subr.mxu0 0.0
    %3156 = vmatpush1.msra.mxu0 0.0
    %3157 = vmatprep.subr.mxu0 0.0
    %3158 = vmatpush1.msra.mxu0 0.0
    %3159 = vmatprep.subr.mxu0 0.0
    %3160 = vmatpush1.msra.mxu0 0.0
    %3161 = vmatprep.subr.mxu0 0.0
    %3162 = vmatpush1.msra.mxu0 0.0
    %3163 = vmatprep.subr.mxu0 0.0
    %3164 = vmatpush1.msra.mxu0 0.0
    %3165 = vmatprep.subr.mxu0 0.0
    %3166 = vmatpush1.msra.mxu0 0.0
    %3167 = vmatprep.subr.mxu0 0.0
    %3168 = vmatpush1.msra.mxu0 0.0
    %3169 = vmatprep.subr.mxu0 0.0
    %3170 = vmatpush1.msra.mxu0 0.0
    %3171 = vmatprep.subr.mxu0 0.0
    %3172 = vmatpush1.msra.mxu0 0.0
    %3173 = vmatprep.subr.mxu0 0.0
    %3174 = vmatpush1.msra.mxu0 0.0
    %3175 = vmatprep.mubr.f32.mxu0 0.0
    %3176 = vmatmul.mubr.f32.gmra.mrb[0].mxu0 %v3109
    %v3177 = vpop.f32.mrb[0].mxu0
    %v3178 = vadd.f32 0.0, %v3177
    %v3179 = vpop.f32.mrb[0].mxu0
    %3180 = vdwg.mxu0
    %3181 = vrot.lane.b32.xlu0 %v2272, 112
    %v3182 = vpop.permute.xlu0 %3181
    %v3185 = vsel %vm306, %v3104, 0
    %3187 = vmatprep.subr.mxu0 0.0
    %3188 = vmatpush1.msra.mxu0 %v3182
    %3189 = vmatprep.subr.mxu0 0.0
    %3190 = vmatpush1.msra.mxu0 0.0
    %3191 = vmatprep.subr.mxu0 0.0
    %3192 = vmatpush1.msra.mxu0 0.0
    %3193 = vmatprep.subr.mxu0 0.0
    %3194 = vmatpush1.msra.mxu0 0.0
    %3195 = vmatprep.subr.mxu0 0.0
    %3196 = vmatpush1.msra.mxu0 0.0
    %3197 = vmatprep.subr.mxu0 0.0
    %3198 = vmatpush1.msra.mxu0 0.0
    %3199 = vmatprep.subr.mxu0 0.0
    %3200 = vmatpush1.msra.mxu0 0.0
    %3201 = vmatprep.subr.mxu0 0.0
    %3202 = vmatpush1.msra.mxu0 0.0
    %3203 = vmatprep.subr.mxu0 0.0
    %3204 = vmatpush1.msra.mxu0 0.0
    %3205 = vmatprep.subr.mxu0 0.0
    %3206 = vmatpush1.msra.mxu0 0.0
    %3207 = vmatprep.subr.mxu0 0.0
    %3208 = vmatpush1.msra.mxu0 0.0
    %3209 = vmatprep.subr.mxu0 0.0
    %3210 = vmatpush1.msra.mxu0 0.0
    %3211 = vmatprep.subr.mxu0 0.0
    %3212 = vmatpush1.msra.mxu0 0.0
    %3213 = vmatprep.subr.mxu0 0.0
    %3214 = vmatpush1.msra.mxu0 0.0
    %3215 = vmatprep.subr.mxu0 0.0
    %3216 = vmatpush1.msra.mxu0 0.0
    %3217 = vmatprep.subr.mxu0 0.0
    %3218 = vmatpush1.msra.mxu0 0.0
    %3219 = vmatprep.subr.mxu0 0.0
    %3220 = vmatpush1.msra.mxu0 0.0
    %3221 = vmatprep.subr.mxu0 0.0
    %3222 = vmatpush1.msra.mxu0 0.0
    %3223 = vmatprep.subr.mxu0 0.0
    %3224 = vmatpush1.msra.mxu0 0.0
    %3225 = vmatprep.subr.mxu0 0.0
    %3226 = vmatpush1.msra.mxu0 0.0
    %3227 = vmatprep.subr.mxu0 0.0
    %3228 = vmatpush1.msra.mxu0 0.0
    %3229 = vmatprep.subr.mxu0 0.0
    %3230 = vmatpush1.msra.mxu0 0.0
    %3231 = vmatprep.subr.mxu0 0.0
    %3232 = vmatpush1.msra.mxu0 0.0
    %3233 = vmatprep.subr.mxu0 0.0
    %3234 = vmatpush1.msra.mxu0 0.0
    %3235 = vmatprep.subr.mxu0 0.0
    %3236 = vmatpush1.msra.mxu0 0.0
    %3237 = vmatprep.subr.mxu0 0.0
    %3238 = vmatpush1.msra.mxu0 0.0
    %3239 = vmatprep.subr.mxu0 0.0
    %3240 = vmatpush1.msra.mxu0 0.0
    %3241 = vmatprep.subr.mxu0 0.0
    %3242 = vmatpush1.msra.mxu0 0.0
    %3243 = vmatprep.subr.mxu0 0.0
    %3244 = vmatpush1.msra.mxu0 0.0
    %3245 = vmatprep.subr.mxu0 0.0
    %3246 = vmatpush1.msra.mxu0 0.0
    %3247 = vmatprep.subr.mxu0 0.0
    %3248 = vmatpush1.msra.mxu0 0.0
    %3249 = vmatprep.subr.mxu0 0.0
    %3250 = vmatpush1.msra.mxu0 0.0
    %3251 = vmatprep.mubr.f32.mxu0 0.0
    %3252 = vmatmul.mubr.f32.gmra.mrb[0].mxu0 %v3185
    %v3253 = vpop.f32.mrb[0].mxu0
    %v3254 = vadd.f32 0.0, %v3253
    %v3255 = vpop.f32.mrb[0].mxu0
    %3256 = vdwg.mxu0
    %3257 = vrot.lane.b32.xlu0 %v2097, 104
    %v3258 = vpop.permute.xlu0 %3257
    %3259 = vrot.lane.b32.xlu0 %v2182, 104
    %v3260 = vpop.permute.xlu0 %3259
    %v3261 = vsel %vm306, %v3258, 0
    %v3263 = vsel %vm306, %v3260, 0
    %3265 = vmatprep.subr.mxu0 0.0
    %3266 = vmatpush1.xpose.msra.mxu0 %v3263
    %3267 = vmatprep.subr.mxu0 0.0
    %3268 = vmatpush1.xpose.msra.mxu0 0.0
    %3269 = vmatprep.subr.mxu0 0.0
    %3270 = vmatpush1.xpose.msra.mxu0 0.0
    %3271 = vmatprep.subr.mxu0 0.0
    %3272 = vmatpush1.xpose.msra.mxu0 0.0
    %3273 = vmatprep.subr.mxu0 0.0
    %3274 = vmatpush1.xpose.msra.mxu0 0.0
    %3275 = vmatprep.subr.mxu0 0.0
    %3276 = vmatpush1.xpose.msra.mxu0 0.0
    %3277 = vmatprep.subr.mxu0 0.0
    %3278 = vmatpush1.xpose.msra.mxu0 0.0
    %3279 = vmatprep.subr.mxu0 0.0
    %3280 = vmatpush1.xpose.msra.mxu0 0.0
    %3281 = vmatprep.subr.mxu0 0.0
    %3282 = vmatpush1.xpose.msra.mxu0 0.0
    %3283 = vmatprep.subr.mxu0 0.0
    %3284 = vmatpush1.xpose.msra.mxu0 0.0
    %3285 = vmatprep.subr.mxu0 0.0
    %3286 = vmatpush1.xpose.msra.mxu0 0.0
    %3287 = vmatprep.subr.mxu0 0.0
    %3288 = vmatpush1.xpose.msra.mxu0 0.0
    %3289 = vmatprep.subr.mxu0 0.0
    %3290 = vmatpush1.xpose.msra.mxu0 0.0
    %3291 = vmatprep.subr.mxu0 0.0
    %3292 = vmatpush1.xpose.msra.mxu0 0.0
    %3293 = vmatprep.subr.mxu0 0.0
    %3294 = vmatpush1.xpose.msra.mxu0 0.0
    %3295 = vmatprep.subr.mxu0 0.0
    %3296 = vmatpush1.xpose.msra.mxu0 0.0
    %3297 = vmatprep.subr.mxu0 0.0
    %3298 = vmatpush1.xpose.msra.mxu0 0.0
    %3299 = vmatprep.subr.mxu0 0.0
    %3300 = vmatpush1.xpose.msra.mxu0 0.0
    %3301 = vmatprep.subr.mxu0 0.0
    %3302 = vmatpush1.xpose.msra.mxu0 0.0
    %3303 = vmatprep.subr.mxu0 0.0
    %3304 = vmatpush1.xpose.msra.mxu0 0.0
    %3305 = vmatprep.subr.mxu0 0.0
    %3306 = vmatpush1.xpose.msra.mxu0 0.0
    %3307 = vmatprep.subr.mxu0 0.0
    %3308 = vmatpush1.xpose.msra.mxu0 0.0
    %3309 = vmatprep.subr.mxu0 0.0
    %3310 = vmatpush1.xpose.msra.mxu0 0.0
    %3311 = vmatprep.subr.mxu0 0.0
    %3312 = vmatpush1.xpose.msra.mxu0 0.0
    %3313 = vmatprep.subr.mxu0 0.0
    %3314 = vmatpush1.xpose.msra.mxu0 0.0
    %3315 = vmatprep.subr.mxu0 0.0
    %3316 = vmatpush1.xpose.msra.mxu0 0.0
    %3317 = vmatprep.subr.mxu0 0.0
    %3318 = vmatpush1.xpose.msra.mxu0 0.0
    %3319 = vmatprep.subr.mxu0 0.0
    %3320 = vmatpush1.xpose.msra.mxu0 0.0
    %3321 = vmatprep.subr.mxu0 0.0
    %3322 = vmatpush1.xpose.msra.mxu0 0.0
    %3323 = vmatprep.subr.mxu0 0.0
    %3324 = vmatpush1.xpose.msra.mxu0 0.0
    %3325 = vmatprep.subr.mxu0 0.0
    %3326 = vmatpush1.xpose.msra.mxu0 0.0
    %3327 = vmatprep.subr.mxu0 0.0
    %3328 = vmatpush1.xpose.msra.mxu0 0.0
    %3329 = vmatprep.mubr.f32.mxu0 0.0
    %3330 = vmatmul.mubr.f32.gmra.mrb[0].mxu0 %v3261
    %v3331 = vpop.f32.mrb[0].mxu0
    %v3332 = vadd.f32 %v44, %v3331
    %v3333 = vpop.f32.mrb[0].mxu0
    %3334 = vdwg.mxu0
    %3335 = vrot.lane.b32.xlu0 %v2102, 104
    %v3336 = vpop.permute.xlu0 %3335
    %3337 = vrot.lane.b32.xlu0 %v2187, 104
    %v3338 = vpop.permute.xlu0 %3337
    %v3339 = vsel %vm306, %v3336, 0
    %v3341 = vsel %vm306, %v3338, 0
    %3343 = vmatprep.subr.mxu0 0.0
    %3344 = vmatpush1.xpose.msra.mxu0 %v3341
    %3345 = vmatprep.subr.mxu0 0.0
    %3346 = vmatpush1.xpose.msra.mxu0 0.0
    %3347 = vmatprep.subr.mxu0 0.0
    %3348 = vmatpush1.xpose.msra.mxu0 0.0
    %3349 = vmatprep.subr.mxu0 0.0
    %3350 = vmatpush1.xpose.msra.mxu0 0.0
    %3351 = vmatprep.subr.mxu0 0.0
    %3352 = vmatpush1.xpose.msra.mxu0 0.0
    %3353 = vmatprep.subr.mxu0 0.0
    %3354 = vmatpush1.xpose.msra.mxu0 0.0
    %3355 = vmatprep.subr.mxu0 0.0
    %3356 = vmatpush1.xpose.msra.mxu0 0.0
    %3357 = vmatprep.subr.mxu0 0.0
    %3358 = vmatpush1.xpose.msra.mxu0 0.0
    %3359 = vmatprep.subr.mxu0 0.0
    %3360 = vmatpush1.xpose.msra.mxu0 0.0
    %3361 = vmatprep.subr.mxu0 0.0
    %3362 = vmatpush1.xpose.msra.mxu0 0.0
    %3363 = vmatprep.subr.mxu0 0.0
    %3364 = vmatpush1.xpose.msra.mxu0 0.0
    %3365 = vmatprep.subr.mxu0 0.0
    %3366 = vmatpush1.xpose.msra.mxu0 0.0
    %3367 = vmatprep.subr.mxu0 0.0
    %3368 = vmatpush1.xpose.msra.mxu0 0.0
    %3369 = vmatprep.subr.mxu0 0.0
    %3370 = vmatpush1.xpose.msra.mxu0 0.0
    %3371 = vmatprep.subr.mxu0 0.0
    %3372 = vmatpush1.xpose.msra.mxu0 0.0
    %3373 = vmatprep.subr.mxu0 0.0
    %3374 = vmatpush1.xpose.msra.mxu0 0.0
    %3375 = vmatprep.subr.mxu0 0.0
    %3376 = vmatpush1.xpose.msra.mxu0 0.0
    %3377 = vmatprep.subr.mxu0 0.0
    %3378 = vmatpush1.xpose.msra.mxu0 0.0
    %3379 = vmatprep.subr.mxu0 0.0
    %3380 = vmatpush1.xpose.msra.mxu0 0.0
    %3381 = vmatprep.subr.mxu0 0.0
    %3382 = vmatpush1.xpose.msra.mxu0 0.0
    %3383 = vmatprep.subr.mxu0 0.0
    %3384 = vmatpush1.xpose.msra.mxu0 0.0
    %3385 = vmatprep.subr.mxu0 0.0
    %3386 = vmatpush1.xpose.msra.mxu0 0.0
    %3387 = vmatprep.subr.mxu0 0.0
    %3388 = vmatpush1.xpose.msra.mxu0 0.0
    %3389 = vmatprep.subr.mxu0 0.0
    %3390 = vmatpush1.xpose.msra.mxu0 0.0
    %3391 = vmatprep.subr.mxu0 0.0
    %3392 = vmatpush1.xpose.msra.mxu0 0.0
    %3393 = vmatprep.subr.mxu0 0.0
    %3394 = vmatpush1.xpose.msra.mxu0 0.0
    %3395 = vmatprep.subr.mxu0 0.0
    %3396 = vmatpush1.xpose.msra.mxu0 0.0
    %3397 = vmatprep.subr.mxu0 0.0
    %3398 = vmatpush1.xpose.msra.mxu0 0.0
    %3399 = vmatprep.subr.mxu0 0.0
    %3400 = vmatpush1.xpose.msra.mxu0 0.0
    %3401 = vmatprep.subr.mxu0 0.0
    %3402 = vmatpush1.xpose.msra.mxu0 0.0
    %3403 = vmatprep.subr.mxu0 0.0
    %3404 = vmatpush1.xpose.msra.mxu0 0.0
    %3405 = vmatprep.subr.mxu0 0.0
    %3406 = vmatpush1.xpose.msra.mxu0 0.0
    %3407 = vmatprep.mubr.f32.mxu0 0.0
    %3408 = vmatmul.mubr.f32.gmra.mrb[0].mxu0 %v3339
    %v3409 = vpop.f32.mrb[0].mxu0
    %v3410 = vadd.f32 %v44, %v3409
    %v3411 = vpop.f32.mrb[0].mxu0
    %3412 = vdwg.mxu0
    %v3413 = vsel %vm306, %v3332, -inf
    %3414 = vmax.xlane.f32.xlu0 %v3413
    %v3415 = vpop.xlane.xlu0 %3414
    %v3416 = vsel %vm306, %v3410, -inf
    %3417 = vmax.xlane.f32.xlu0 %v3416
    %v3418 = vpop.xlane.xlu0 %3417
    %v3419 = vsub.f32 %v3332, %v3415
    %v3420 = vsub.f32 %v3410, %v3418
    %v3421 = vmul.f32 %v3419, 1.442695
    %v3422 = vpow.pop %v3421
    %v3423 = vmul.f32 %v3420, 1.442695
    %v3424 = vpow.pop %v3423
    %v3425 = vsel %vm306, %v3422, 0.0
    %3426 = vadd.xlane.f32.xlu0 %v3425
    %v3427 = vpop.xlane.xlu0 %3426
    %v3428 = vsel %vm306, %v3424, 0.0
    %3429 = vadd.xlane.f32.xlu0 %v3428
    %v3430 = vpop.xlane.xlu0 %3429
    %v3431 = vrcp.pop %v3427
    %v3432 = vrcp.pop %v3430
    %v3433 = vmul.f32 %v3422, %v3431
    %v3434 = vmul.f32 %v3424, %v3432
    %3435 = vrot.lane.b32.xlu0 %v2267, 104
    %v3436 = vpop.permute.xlu0 %3435
    %v3439 = vsel %vm306, %v3433, 0
    %3441 = vmatprep.subr.mxu0 0.0
    %3442 = vmatpush1.msra.mxu0 %v3436
    %3443 = vmatprep.subr.mxu0 0.0
    %3444 = vmatpush1.msra.mxu0 0.0
    %3445 = vmatprep.subr.mxu0 0.0
    %3446 = vmatpush1.msra.mxu0 0.0
    %3447 = vmatprep.subr.mxu0 0.0
    %3448 = vmatpush1.msra.mxu0 0.0
    %3449 = vmatprep.subr.mxu0 0.0
    %3450 = vmatpush1.msra.mxu0 0.0
    %3451 = vmatprep.subr.mxu0 0.0
    %3452 = vmatpush1.msra.mxu0 0.0
    %3453 = vmatprep.subr.mxu0 0.0
    %3454 = vmatpush1.msra.mxu0 0.0
    %3455 = vmatprep.subr.mxu0 0.0
    %3456 = vmatpush1.msra.mxu0 0.0
    %3457 = vmatprep.subr.mxu0 0.0
    %3458 = vmatpush1.msra.mxu0 0.0
    %3459 = vmatprep.subr.mxu0 0.0
    %3460 = vmatpush1.msra.mxu0 0.0
    %3461 = vmatprep.subr.mxu0 0.0
    %3462 = vmatpush1.msra.mxu0 0.0
    %3463 = vmatprep.subr.mxu0 0.0
    %3464 = vmatpush1.msra.mxu0 0.0
    %3465 = vmatprep.subr.mxu0 0.0
    %3466 = vmatpush1.msra.mxu0 0.0
    %3467 = vmatprep.subr.mxu0 0.0
    %3468 = vmatpush1.msra.mxu0 0.0
    %3469 = vmatprep.subr.mxu0 0.0
    %3470 = vmatpush1.msra.mxu0 0.0
    %3471 = vmatprep.subr.mxu0 0.0
    %3472 = vmatpush1.msra.mxu0 0.0
    %3473 = vmatprep.subr.mxu0 0.0
    %3474 = vmatpush1.msra.mxu0 0.0
    %3475 = vmatprep.subr.mxu0 0.0
    %3476 = vmatpush1.msra.mxu0 0.0
    %3477 = vmatprep.subr.mxu0 0.0
    %3478 = vmatpush1.msra.mxu0 0.0
    %3479 = vmatprep.subr.mxu0 0.0
    %3480 = vmatpush1.msra.mxu0 0.0
    %3481 = vmatprep.subr.mxu0 0.0
    %3482 = vmatpush1.msra.mxu0 0.0
    %3483 = vmatprep.subr.mxu0 0.0
    %3484 = vmatpush1.msra.mxu0 0.0
    %3485 = vmatprep.subr.mxu0 0.0
    %3486 = vmatpush1.msra.mxu0 0.0
    %3487 = vmatprep.subr.mxu0 0.0
    %3488 = vmatpush1.msra.mxu0 0.0
    %3489 = vmatprep.subr.mxu0 0.0
    %3490 = vmatpush1.msra.mxu0 0.0
    %3491 = vmatprep.subr.mxu0 0.0
    %3492 = vmatpush1.msra.mxu0 0.0
    %3493 = vmatprep.subr.mxu0 0.0
    %3494 = vmatpush1.msra.mxu0 0.0
    %3495 = vmatprep.subr.mxu0 0.0
    %3496 = vmatpush1.msra.mxu0 0.0
    %3497 = vmatprep.subr.mxu0 0.0
    %3498 = vmatpush1.msra.mxu0 0.0
    %3499 = vmatprep.subr.mxu0 0.0
    %3500 = vmatpush1.msra.mxu0 0.0
    %3501 = vmatprep.subr.mxu0 0.0
    %3502 = vmatpush1.msra.mxu0 0.0
    %3503 = vmatprep.subr.mxu0 0.0
    %3504 = vmatpush1.msra.mxu0 0.0
    %3505 = vmatprep.mubr.f32.mxu0 0.0
    %3506 = vmatmul.mubr.f32.gmra.mrb[0].mxu0 %v3439
    %v3507 = vpop.f32.mrb[0].mxu0
    %v3508 = vadd.f32 0.0, %v3507
    %v3509 = vpop.f32.mrb[0].mxu0
    %3510 = vdwg.mxu0
    %3511 = vrot.lane.b32.xlu0 %v2272, 104
    %v3512 = vpop.permute.xlu0 %3511
    %v3515 = vsel %vm306, %v3434, 0
    %3517 = vmatprep.subr.mxu0 0.0
    %3518 = vmatpush1.msra.mxu0 %v3512
    %3519 = vmatprep.subr.mxu0 0.0
    %3520 = vmatpush1.msra.mxu0 0.0
    %3521 = vmatprep.subr.mxu0 0.0
    %3522 = vmatpush1.msra.mxu0 0.0
    %3523 = vmatprep.subr.mxu0 0.0
    %3524 = vmatpush1.msra.mxu0 0.0
    %3525 = vmatprep.subr.mxu0 0.0
    %3526 = vmatpush1.msra.mxu0 0.0
    %3527 = vmatprep.subr.mxu0 0.0
    %3528 = vmatpush1.msra.mxu0 0.0
    %3529 = vmatprep.subr.mxu0 0.0
    %3530 = vmatpush1.msra.mxu0 0.0
    %3531 = vmatprep.subr.mxu0 0.0
    %3532 = vmatpush1.msra.mxu0 0.0
    %3533 = vmatprep.subr.mxu0 0.0
    %3534 = vmatpush1.msra.mxu0 0.0
    %3535 = vmatprep.subr.mxu0 0.0
    %3536 = vmatpush1.msra.mxu0 0.0
    %3537 = vmatprep.subr.mxu0 0.0
    %3538 = vmatpush1.msra.mxu0 0.0
    %3539 = vmatprep.subr.mxu0 0.0
    %3540 = vmatpush1.msra.mxu0 0.0
    %3541 = vmatprep.subr.mxu0 0.0
    %3542 = vmatpush1.msra.mxu0 0.0
    %3543 = vmatprep.subr.mxu0 0.0
    %3544 = vmatpush1.msra.mxu0 0.0
    %3545 = vmatprep.subr.mxu0 0.0
    %3546 = vmatpush1.msra.mxu0 0.0
    %3547 = vmatprep.subr.mxu0 0.0
    %3548 = vmatpush1.msra.mxu0 0.0
    %3549 = vmatprep.subr.mxu0 0.0
    %3550 = vmatpush1.msra.mxu0 0.0
    %3551 = vmatprep.subr.mxu0 0.0
    %3552 = vmatpush1.msra.mxu0 0.0
    %3553 = vmatprep.subr.mxu0 0.0
    %3554 = vmatpush1.msra.mxu0 0.0
    %3555 = vmatprep.subr.mxu0 0.0
    %3556 = vmatpush1.msra.mxu0 0.0
    %3557 = vmatprep.subr.mxu0 0.0
    %3558 = vmatpush1.msra.mxu0 0.0
    %3559 = vmatprep.subr.mxu0 0.0
    %3560 = vmatpush1.msra.mxu0 0.0
    %3561 = vmatprep.subr.mxu0 0.0
    %3562 = vmatpush1.msra.mxu0 0.0
    %3563 = vmatprep.subr.mxu0 0.0
    %3564 = vmatpush1.msra.mxu0 0.0
    %3565 = vmatprep.subr.mxu0 0.0
    %3566 = vmatpush1.msra.mxu0 0.0
    %3567 = vmatprep.subr.mxu0 0.0
    %3568 = vmatpush1.msra.mxu0 0.0
    %3569 = vmatprep.subr.mxu0 0.0
    %3570 = vmatpush1.msra.mxu0 0.0
    %3571 = vmatprep.subr.mxu0 0.0
    %3572 = vmatpush1.msra.mxu0 0.0
    %3573 = vmatprep.subr.mxu0 0.0
    %3574 = vmatpush1.msra.mxu0 0.0
    %3575 = vmatprep.subr.mxu0 0.0
    %3576 = vmatpush1.msra.mxu0 0.0
    %3577 = vmatprep.subr.mxu0 0.0
    %3578 = vmatpush1.msra.mxu0 0.0
    %3579 = vmatprep.subr.mxu0 0.0
    %3580 = vmatpush1.msra.mxu0 0.0
    %3581 = vmatprep.mubr.f32.mxu0 0.0
    %3582 = vmatmul.mubr.f32.gmra.mrb[0].mxu0 %v3515
    %v3583 = vpop.f32.mrb[0].mxu0
    %v3584 = vadd.f32 0.0, %v3583
    %v3585 = vpop.f32.mrb[0].mxu0
    %3586 = vdwg.mxu0
    %3589 = vrot.lane.b32.xlu0 %v2847, 8
    %v3590 = vpop.permute.xlu0 %3589
    %3591 = vrot.lane.b32.xlu0 %v2924, 8
    %v3592 = vpop.permute.xlu0 %3591
    %3597 = vrot.lane.b32.xlu0 %v3178, 16
    %v3598 = vpop.permute.xlu0 %3597
    %3599 = vrot.lane.b32.xlu0 %v3254, 16
    %v3600 = vpop.permute.xlu0 %3599
    %3605 = vrot.lane.b32.xlu0 %v3508, 24
    %v3606 = vpop.permute.xlu0 %3605
    %3607 = vrot.lane.b32.xlu0 %v3584, 24
    %v3608 = vpop.permute.xlu0 %3607
    %v3611 = vsel %vm306, %v2519, %v3590
    %v3612 = vsel %vm306, %v2592, %v3592
    %v3613 = vsel %vm1645, %v3611, %v3598
    %v3614 = vsel %vm1645, %v3612, %v3600
    %v3615 = vsel %vm1648, %v3613, %v3606
    %v3616 = vsel %vm1648, %v3614, %v3608
    %s3617 = scalar_lea.vmem %s3, 224
    %v3618 = vld [vmem:[%s3617] sm:$0xff]
    %v3619 = vld [vmem:[%s3617 + $0x8] sm:$0xff]
    %v3620 = vld [vmem:[%s3617 + $0x10] sm:$0xff]
    %v3621 = vld [vmem:[%s3617 + $0x18] sm:$0xff]
    %v3622 = vld [vmem:[%s5 + $0xd] sm:$0x1]
    %v3623 = vlaneseq
    %v3624 = vshrl.u32 %v3623, 7
    %v3625 = vsub.s32 0, %v3624
    %v3626 = vrot.slane %v3622, %v3625
    %v3628 = vsel %vm54, %v3615, 0
    %v3631 = vsel %vm54, %v3616, 0
    %3633 = vmatprep.subr.mxu0 0.0
    %3634 = vmatpush1.msra.mxu0 %v3618
    %3635 = vmatprep.subr.mxu0 0.0
    %3636 = vmatpush1.msra.mxu0 %v3619
    %3637 = vmatprep.subr.mxu0 0.0
    %3638 = vmatpush1.msra.mxu0 %v3620
    %3639 = vmatprep.subr.mxu0 0.0
    %3640 = vmatpush1.msra.mxu0 %v3621
    %3641 = vmatprep.subr.mxu0 0.0
    %3642 = vmatpush1.msra.mxu0 0.0
    %3643 = vmatprep.subr.mxu0 0.0
    %3644 = vmatpush1.msra.mxu0 0.0
    %3645 = vmatprep.subr.mxu0 0.0
    %3646 = vmatpush1.msra.mxu0 0.0
    %3647 = vmatprep.subr.mxu0 0.0
    %3648 = vmatpush1.msra.mxu0 0.0
    %3649 = vmatprep.subr.mxu0 0.0
    %3650 = vmatpush1.msra.mxu0 0.0
    %3651 = vmatprep.subr.mxu0 0.0
    %3652 = vmatpush1.msra.mxu0 0.0
    %3653 = vmatprep.subr.mxu0 0.0
    %3654 = vmatpush1.msra.mxu0 0.0
    %3655 = vmatprep.subr.mxu0 0.0
    %3656 = vmatpush1.msra.mxu0 0.0
    %3657 = vmatprep.subr.mxu0 0.0
    %3658 = vmatpush1.msra.mxu0 0.0
    %3659 = vmatprep.subr.mxu0 0.0
    %3660 = vmatpush1.msra.mxu0 0.0
    %3661 = vmatprep.subr.mxu0 0.0
    %3662 = vmatpush1.msra.mxu0 0.0
    %3663 = vmatprep.subr.mxu0 0.0
    %3664 = vmatpush1.msra.mxu0 0.0
    %3665 = vmatprep.subr.mxu0 0.0
    %3666 = vmatpush1.msra.mxu0 0.0
    %3667 = vmatprep.subr.mxu0 0.0
    %3668 = vmatpush1.msra.mxu0 0.0
    %3669 = vmatprep.subr.mxu0 0.0
    %3670 = vmatpush1.msra.mxu0 0.0
    %3671 = vmatprep.subr.mxu0 0.0
    %3672 = vmatpush1.msra.mxu0 0.0
    %3673 = vmatprep.subr.mxu0 0.0
    %3674 = vmatpush1.msra.mxu0 0.0
    %3675 = vmatprep.subr.mxu0 0.0
    %3676 = vmatpush1.msra.mxu0 0.0
    %3677 = vmatprep.subr.mxu0 0.0
    %3678 = vmatpush1.msra.mxu0 0.0
    %3679 = vmatprep.subr.mxu0 0.0
    %3680 = vmatpush1.msra.mxu0 0.0
    %3681 = vmatprep.subr.mxu0 0.0
    %3682 = vmatpush1.msra.mxu0 0.0
    %3683 = vmatprep.subr.mxu0 0.0
    %3684 = vmatpush1.msra.mxu0 0.0
    %3685 = vmatprep.subr.mxu0 0.0
    %3686 = vmatpush1.msra.mxu0 0.0
    %3687 = vmatprep.subr.mxu0 0.0
    %3688 = vmatpush1.msra.mxu0 0.0
    %3689 = vmatprep.subr.mxu0 0.0
    %3690 = vmatpush1.msra.mxu0 0.0
    %3691 = vmatprep.subr.mxu0 0.0
    %3692 = vmatpush1.msra.mxu0 0.0
    %3693 = vmatprep.subr.mxu0 0.0
    %3694 = vmatpush1.msra.mxu0 0.0
    %3695 = vmatprep.subr.mxu0 0.0
    %3696 = vmatpush1.msra.mxu0 0.0
    %3697 = vmatprep.mubr.f32.mxu0 0.0
    %3698 = vmatmul.mubr.f32.gmra.mrb[0].mxu0 %v3628
    %v3699 = vpop.f32.mrb[0].mxu0
    %v3700 = vadd.f32 %v3626, %v3699
    %v3701 = vpop.f32.mrb[0].mxu0
    %3702 = vmatprep.mubr.f32.mxu0 0.0
    %3703 = vmatmul.mubr.f32.gmra.mrb[0].mxu0 %v3631
    %v3704 = vpop.f32.mrb[0].mxu0
    %v3705 = vadd.f32 %v3626, %v3704
    %v3706 = vpop.f32.mrb[0].mxu0
    %3707 = vdwg.mxu0
    %v3708 = vadd.f32 %v2012, %v3700
    %v3709 = vadd.f32 %v2013, %v3705
    %v3710 = vld [vmem:[%s5 + $0xe] sm:$0x1]
    %v3711 = vld [vmem:[%s5 + $0xf] sm:$0x1]
    %v3712 = vsel %vm54, %v3708, 0.0
    %3713 = vadd.xlane.f32.xlu0 %v3712
    %v3714 = vpop.xlane.xlu0 %3713
    %v3715 = vsel %vm54, %v3709, 0.0
    %3716 = vadd.xlane.f32.xlu0 %v3715
    %v3717 = vpop.xlane.xlu0 %3716
    %v3718 = vmul.f32 %v3714, %v1752
    %v3719 = vmul.f32 %v3717, %v1752
    %v3720 = vsub.f32 %v3708, %v3718
    %v3721 = vsub.f32 %v3709, %v3719
    %v3722 = vmul.f32 %v3720, %v3720
    %v3723 = vmul.f32 %v3721, %v3721
    %v3724 = vsel %vm54, %v3722, 0.0
    %3725 = vadd.xlane.f32.xlu0 %v3724
    %v3726 = vpop.xlane.xlu0 %3725
    %v3727 = vsel %vm54, %v3723, 0.0
    %3728 = vadd.xlane.f32.xlu0 %v3727
    %v3729 = vpop.xlane.xlu0 %3728
    %v3730 = vmul.f32 %v3726, %v1752
    %v3731 = vmul.f32 %v3729, %v1752
    %v3732 = vadd.f32 %v3730, 1e-05
    %v3733 = vadd.f32 %v3731, 1e-05
    %v3734 = vrsqrt.pop %v3732
    %v3735 = vrsqrt.pop %v3733
    %v3736 = vmul.f32 %v3720, %v3734
    %v3737 = vmul.f32 %v3721, %v3735
    %v3738 = vlaneseq
    %v3739 = vshrl.u32 %v3738, 7
    %v3740 = vsub.s32 0, %v3739
    %v3741 = vrot.slane %v3710, %v3740
    %v3742 = vmul.f32 %v3736, %v3741
    %v3743 = vmul.f32 %v3737, %v3741
    %v3744 = vlaneseq
    %v3745 = vshrl.u32 %v3744, 7
    %v3746 = vsub.s32 0, %v3745
    %v3747 = vrot.slane %v3711, %v3746
    %v3748 = vadd.f32 %v3742, %v3747
    %v3749 = vadd.f32 %v3743, %v3747
    %v3750 = vld [vmem:[%s4 + $0x60] sm:$0xff]
    %v3751 = vld [vmem:[%s4 + $0x68] sm:$0xff]
    %v3752 = vld [vmem:[%s4 + $0x70] sm:$0xff]
    %v3753 = vld [vmem:[%s4 + $0x78] sm:$0xff]
    %v3754 = vld [vmem:[%s4 + $0x80] sm:$0xff]
    %v3755 = vld [vmem:[%s4 + $0x88] sm:$0xff]
    %v3756 = vld [vmem:[%s4 + $0x90] sm:$0xff]
    %v3757 = vld [vmem:[%s4 + $0x98] sm:$0xff]
    %v3758 = vld [vmem:[%s4 + $0xa0] sm:$0xff]
    %v3759 = vld [vmem:[%s4 + $0xa8] sm:$0xff]
    %v3760 = vld [vmem:[%s4 + $0xb0] sm:$0xff]
    %v3761 = vld [vmem:[%s4 + $0xb8] sm:$0xff]
    %v3762 = vld [vmem:[%s5 + $0x12] sm:$0x1]
    %v3763 = vlaneseq
    %v3764 = vshrl.u32 %v3763, 7
    %v3765 = vsub.s32 0, %v3764
    %v3766 = vrot.slane %v3762, %v3765
    %v3768 = vsel %vm54, %v3748, 0
    %v3771 = vsel %vm54, %v3749, 0
    %3773 = vmatprep.subr.mxu0 0.0
    %3774 = vmatpush1.msra.mxu0 %v3750
    %3775 = vmatprep.subr.mxu0 0.0
    %3776 = vmatpush1.msra.mxu0 %v3751
    %3777 = vmatprep.subr.mxu0 0.0
    %3778 = vmatpush1.msra.mxu0 %v3752
    %3779 = vmatprep.subr.mxu0 0.0
    %3780 = vmatpush1.msra.mxu0 %v3753
    %3781 = vmatprep.subr.mxu0 0.0
    %3782 = vmatpush1.msra.mxu0 0.0
    %3783 = vmatprep.subr.mxu0 0.0
    %3784 = vmatpush1.msra.mxu0 0.0
    %3785 = vmatprep.subr.mxu0 0.0
    %3786 = vmatpush1.msra.mxu0 0.0
    %3787 = vmatprep.subr.mxu0 0.0
    %3788 = vmatpush1.msra.mxu0 0.0
    %3789 = vmatprep.subr.mxu0 0.0
    %3790 = vmatpush1.msra.mxu0 0.0
    %3791 = vmatprep.subr.mxu0 0.0
    %3792 = vmatpush1.msra.mxu0 0.0
    %3793 = vmatprep.subr.mxu0 0.0
    %3794 = vmatpush1.msra.mxu0 0.0
    %3795 = vmatprep.subr.mxu0 0.0
    %3796 = vmatpush1.msra.mxu0 0.0
    %3797 = vmatprep.subr.mxu0 0.0
    %3798 = vmatpush1.msra.mxu0 0.0
    %3799 = vmatprep.subr.mxu0 0.0
    %3800 = vmatpush1.msra.mxu0 0.0
    %3801 = vmatprep.subr.mxu0 0.0
    %3802 = vmatpush1.msra.mxu0 0.0
    %3803 = vmatprep.subr.mxu0 0.0
    %3804 = vmatpush1.msra.mxu0 0.0
    %3805 = vmatprep.subr.mxu0 0.0
    %3806 = vmatpush1.msra.mxu0 0.0
    %3807 = vmatprep.subr.mxu0 0.0
    %3808 = vmatpush1.msra.mxu0 0.0
    %3809 = vmatprep.subr.mxu0 0.0
    %3810 = vmatpush1.msra.mxu0 0.0
    %3811 = vmatprep.subr.mxu0 0.0
    %3812 = vmatpush1.msra.mxu0 0.0
    %3813 = vmatprep.subr.mxu0 0.0
    %3814 = vmatpush1.msra.mxu0 0.0
    %3815 = vmatprep.subr.mxu0 0.0
    %3816 = vmatpush1.msra.mxu0 0.0
    %3817 = vmatprep.subr.mxu0 0.0
    %3818 = vmatpush1.msra.mxu0 0.0
    %3819 = vmatprep.subr.mxu0 0.0
    %3820 = vmatpush1.msra.mxu0 0.0
    %3821 = vmatprep.subr.mxu0 0.0
    %3822 = vmatpush1.msra.mxu0 0.0
    %3823 = vmatprep.subr.mxu0 0.0
    %3824 = vmatpush1.msra.mxu0 0.0
    %3825 = vmatprep.subr.mxu0 0.0
    %3826 = vmatpush1.msra.mxu0 0.0
    %3827 = vmatprep.subr.mxu0 0.0
    %3828 = vmatpush1.msra.mxu0 0.0
    %3829 = vmatprep.subr.mxu0 0.0
    %3830 = vmatpush1.msra.mxu0 0.0
    %3831 = vmatprep.subr.mxu0 0.0
    %3832 = vmatpush1.msra.mxu0 0.0
    %3833 = vmatprep.subr.mxu0 0.0
    %3834 = vmatpush1.msra.mxu0 0.0
    %3835 = vmatprep.subr.mxu0 0.0
    %3836 = vmatpush1.msra.mxu0 0.0
    %3837 = vmatprep.mubr.f32.mxu0 0.0
    %3838 = vmatmul.mubr.f32.gmra.mrb[0].mxu0 %v3768
    %v3839 = vpop.f32.mrb[0].mxu0
    %v3840 = vadd.f32 %v3766, %v3839
    %v3841 = vpop.f32.mrb[0].mxu0
    %3842 = vmatprep.mubr.f32.mxu0 0.0
    %3843 = vmatmul.mubr.f32.gmra.mrb[0].mxu0 %v3771
    %v3844 = vpop.f32.mrb[0].mxu0
    %v3845 = vadd.f32 %v3766, %v3844
    %v3846 = vpop.f32.mrb[0].mxu0
    %3847 = vdwg.mxu0
    %v3848 = vmax.f32 %v3840, 0.0
    %v3849 = vmax.f32 %v3845, 0.0
    %v3850 = vld [vmem:[%s5 + $0x13] sm:$0x1]
    %v3851 = vlaneseq
    %v3852 = vshrl.u32 %v3851, 7
    %v3853 = vsub.s32 0, %v3852
    %v3854 = vrot.slane %v3850, %v3853
    %v3856 = vsel %vm1890, %v3848, 0
    %v3859 = vsel %vm1890, %v3849, 0
    %3861 = vmatprep.subr.mxu0 0.0
    %3862 = vmatpush1.msra.mxu0 %v3754
    %3863 = vmatprep.subr.mxu0 0.0
    %3864 = vmatpush1.msra.mxu0 %v3755
    %3865 = vmatprep.subr.mxu0 0.0
    %3866 = vmatpush1.msra.mxu0 %v3756
    %3867 = vmatprep.subr.mxu0 0.0
    %3868 = vmatpush1.msra.mxu0 %v3757
    %3869 = vmatprep.subr.mxu0 0.0
    %3870 = vmatpush1.msra.mxu0 %v3758
    %3871 = vmatprep.subr.mxu0 0.0
    %3872 = vmatpush1.msra.mxu0 %v3759
    %3873 = vmatprep.subr.mxu0 0.0
    %3874 = vmatpush1.msra.mxu0 %v3760
    %3875 = vmatprep.subr.mxu0 0.0
    %3876 = vmatpush1.msra.mxu0 %v3761
    %3877 = vmatprep.subr.mxu0 0.0
    %3878 = vmatpush1.msra.mxu0 0.0
    %3879 = vmatprep.subr.mxu0 0.0
    %3880 = vmatpush1.msra.mxu0 0.0
    %3881 = vmatprep.subr.mxu0 0.0
    %3882 = vmatpush1.msra.mxu0 0.0
    %3883 = vmatprep.subr.mxu0 0.0
    %3884 = vmatpush1.msra.mxu0 0.0
    %3885 = vmatprep.subr.mxu0 0.0
    %3886 = vmatpush1.msra.mxu0 0.0
    %3887 = vmatprep.subr.mxu0 0.0
    %3888 = vmatpush1.msra.mxu0 0.0
    %3889 = vmatprep.subr.mxu0 0.0
    %3890 = vmatpush1.msra.mxu0 0.0
    %3891 = vmatprep.subr.mxu0 0.0
    %3892 = vmatpush1.msra.mxu0 0.0
    %3893 = vmatprep.subr.mxu0 0.0
    %3894 = vmatpush1.msra.mxu0 0.0
    %3895 = vmatprep.subr.mxu0 0.0
    %3896 = vmatpush1.msra.mxu0 0.0
    %3897 = vmatprep.subr.mxu0 0.0
    %3898 = vmatpush1.msra.mxu0 0.0
    %3899 = vmatprep.subr.mxu0 0.0
    %3900 = vmatpush1.msra.mxu0 0.0
    %3901 = vmatprep.subr.mxu0 0.0
    %3902 = vmatpush1.msra.mxu0 0.0
    %3903 = vmatprep.subr.mxu0 0.0
    %3904 = vmatpush1.msra.mxu0 0.0
    %3905 = vmatprep.subr.mxu0 0.0
    %3906 = vmatpush1.msra.mxu0 0.0
    %3907 = vmatprep.subr.mxu0 0.0
    %3908 = vmatpush1.msra.mxu0 0.0
    %3909 = vmatprep.subr.mxu0 0.0
    %3910 = vmatpush1.msra.mxu0 0.0
    %3911 = vmatprep.subr.mxu0 0.0
    %3912 = vmatpush1.msra.mxu0 0.0
    %3913 = vmatprep.subr.mxu0 0.0
    %3914 = vmatpush1.msra.mxu0 0.0
    %3915 = vmatprep.subr.mxu0 0.0
    %3916 = vmatpush1.msra.mxu0 0.0
    %3917 = vmatprep.subr.mxu0 0.0
    %3918 = vmatpush1.msra.mxu0 0.0
    %3919 = vmatprep.subr.mxu0 0.0
    %3920 = vmatpush1.msra.mxu0 0.0
    %3921 = vmatprep.subr.mxu0 0.0
    %3922 = vmatpush1.msra.mxu0 0.0
    %3923 = vmatprep.subr.mxu0 0.0
    %3924 = vmatpush1.msra.mxu0 0.0
    %3925 = vmatprep.mubr.f32.mxu0 0.0
    %3926 = vmatmul.mubr.f32.gmra.mrb[0].mxu0 %v3856
    %v3927 = vpop.f32.mrb[0].mxu0
    %v3928 = vadd.f32 %v3854, %v3927
    %v3929 = vpop.f32.mrb[0].mxu0
    %3930 = vmatprep.mubr.f32.mxu0 0.0
    %3931 = vmatmul.mubr.f32.gmra.mrb[0].mxu0 %v3859
    %v3932 = vpop.f32.mrb[0].mxu0
    %v3933 = vadd.f32 %v3854, %v3932
    %v3934 = vpop.f32.mrb[0].mxu0
    %3935 = vdwg.mxu0
    %v3936 = vadd.f32 %v3748, %v3928
    %v3937 = vadd.f32 %v3749, %v3933
    %v3938 = vld [vmem:[%s5 + $0x10] sm:$0x1]
    %v3939 = vld [vmem:[%s5 + $0x11] sm:$0x1]
    %v3940 = vsel %vm54, %v3936, 0.0
    %3941 = vadd.xlane.f32.xlu0 %v3940
    %v3942 = vpop.xlane.xlu0 %3941
    %v3943 = vsel %vm54, %v3937, 0.0
    %3944 = vadd.xlane.f32.xlu0 %v3943
    %v3945 = vpop.xlane.xlu0 %3944
    %v3946 = vmul.f32 %v3942, %v1752
    %v3947 = vmul.f32 %v3945, %v1752
    %v3948 = vsub.f32 %v3936, %v3946
    %v3949 = vsub.f32 %v3937, %v3947
    %v3950 = vmul.f32 %v3948, %v3948
    %v3951 = vmul.f32 %v3949, %v3949
    %v3952 = vsel %vm54, %v3950, 0.0
    %3953 = vadd.xlane.f32.xlu0 %v3952
    %v3954 = vpop.xlane.xlu0 %3953
    %v3955 = vsel %vm54, %v3951, 0.0
    %3956 = vadd.xlane.f32.xlu0 %v3955
    %v3957 = vpop.xlane.xlu0 %3956
    %v3958 = vmul.f32 %v3954, %v1752
    %v3959 = vmul.f32 %v3957, %v1752
    %v3960 = vadd.f32 %v3958, 1e-05
    %v3961 = vadd.f32 %v3959, 1e-05
    %v3962 = vrsqrt.pop %v3960
    %v3963 = vrsqrt.pop %v3961
    %v3964 = vmul.f32 %v3948, %v3962
    %v3965 = vmul.f32 %v3949, %v3963
    %v3966 = vlaneseq
    %v3967 = vshrl.u32 %v3966, 7
    %v3968 = vsub.s32 0, %v3967
    %v3969 = vrot.slane %v3938, %v3968
    %v3970 = vmul.f32 %v3964, %v3969
    %v3971 = vmul.f32 %v3965, %v3969
    %v3972 = vlaneseq
    %v3973 = vshrl.u32 %v3972, 7
    %v3974 = vsub.s32 0, %v3973
    %v3975 = vrot.slane %v3939, %v3974
    %v3976 = vadd.f32 %v3970, %v3975
    %v3977 = vadd.f32 %v3971, %v3975
    %v3978 = vld [vmem:[%s4 + $0xc0] sm:$0xff]
    %v3979 = vld [vmem:[%s4 + $0xc8] sm:$0xff]
    %v3980 = vld [vmem:[%s4 + $0xd0] sm:$0xff]
    %v3981 = vld [vmem:[%s4 + $0xd8] sm:$0xff]
    %v3982 = vld [vmem:[%s5 + $0x14] sm:$0x1]
    %v3983 = vlaneseq
    %v3984 = vshrl.u32 %v3983, 7
    %v3985 = vsub.s32 0, %v3984
    %v3986 = vrot.slane %v3982, %v3985
    %v3988 = vsel %vm54, %v3976, 0
    %v3991 = vsel %vm54, %v3977, 0
    %3993 = vmatprep.subr.mxu0 0.0
    %3994 = vmatpush1.msra.mxu0 %v3978
    %3995 = vmatprep.subr.mxu0 0.0
    %3996 = vmatpush1.msra.mxu0 %v3979
    %3997 = vmatprep.subr.mxu0 0.0
    %3998 = vmatpush1.msra.mxu0 %v3980
    %3999 = vmatprep.subr.mxu0 0.0
    %4000 = vmatpush1.msra.mxu0 %v3981
    %4001 = vmatprep.subr.mxu0 0.0
    %4002 = vmatpush1.msra.mxu0 0.0
    %4003 = vmatprep.subr.mxu0 0.0
    %4004 = vmatpush1.msra.mxu0 0.0
    %4005 = vmatprep.subr.mxu0 0.0
    %4006 = vmatpush1.msra.mxu0 0.0
    %4007 = vmatprep.subr.mxu0 0.0
    %4008 = vmatpush1.msra.mxu0 0.0
    %4009 = vmatprep.subr.mxu0 0.0
    %4010 = vmatpush1.msra.mxu0 0.0
    %4011 = vmatprep.subr.mxu0 0.0
    %4012 = vmatpush1.msra.mxu0 0.0
    %4013 = vmatprep.subr.mxu0 0.0
    %4014 = vmatpush1.msra.mxu0 0.0
    %4015 = vmatprep.subr.mxu0 0.0
    %4016 = vmatpush1.msra.mxu0 0.0
    %4017 = vmatprep.subr.mxu0 0.0
    %4018 = vmatpush1.msra.mxu0 0.0
    %4019 = vmatprep.subr.mxu0 0.0
    %4020 = vmatpush1.msra.mxu0 0.0
    %4021 = vmatprep.subr.mxu0 0.0
    %4022 = vmatpush1.msra.mxu0 0.0
    %4023 = vmatprep.subr.mxu0 0.0
    %4024 = vmatpush1.msra.mxu0 0.0
    %4025 = vmatprep.subr.mxu0 0.0
    %4026 = vmatpush1.msra.mxu0 0.0
    %4027 = vmatprep.subr.mxu0 0.0
    %4028 = vmatpush1.msra.mxu0 0.0
    %4029 = vmatprep.subr.mxu0 0.0
    %4030 = vmatpush1.msra.mxu0 0.0
    %4031 = vmatprep.subr.mxu0 0.0
    %4032 = vmatpush1.msra.mxu0 0.0
    %4033 = vmatprep.subr.mxu0 0.0
    %4034 = vmatpush1.msra.mxu0 0.0
    %4035 = vmatprep.subr.mxu0 0.0
    %4036 = vmatpush1.msra.mxu0 0.0
    %4037 = vmatprep.subr.mxu0 0.0
    %4038 = vmatpush1.msra.mxu0 0.0
    %4039 = vmatprep.subr.mxu0 0.0
    %4040 = vmatpush1.msra.mxu0 0.0
    %4041 = vmatprep.subr.mxu0 0.0
    %4042 = vmatpush1.msra.mxu0 0.0
    %4043 = vmatprep.subr.mxu0 0.0
    %4044 = vmatpush1.msra.mxu0 0.0
    %4045 = vmatprep.subr.mxu0 0.0
    %4046 = vmatpush1.msra.mxu0 0.0
    %4047 = vmatprep.subr.mxu0 0.0
    %4048 = vmatpush1.msra.mxu0 0.0
    %4049 = vmatprep.subr.mxu0 0.0
    %4050 = vmatpush1.msra.mxu0 0.0
    %4051 = vmatprep.subr.mxu0 0.0
    %4052 = vmatpush1.msra.mxu0 0.0
    %4053 = vmatprep.subr.mxu0 0.0
    %4054 = vmatpush1.msra.mxu0 0.0
    %4055 = vmatprep.subr.mxu0 0.0
    %4056 = vmatpush1.msra.mxu0 0.0
    %4057 = vmatprep.mubr.f32.mxu0 0.0
    %4058 = vmatmul.mubr.f32.gmra.mrb[0].mxu0 %v3988
    %v4059 = vpop.f32.mrb[0].mxu0
    %v4060 = vadd.f32 %v3986, %v4059
    %v4061 = vpop.f32.mrb[0].mxu0
    %4062 = vmatprep.mubr.f32.mxu0 0.0
    %4063 = vmatmul.mubr.f32.gmra.mrb[0].mxu0 %v3991
    %v4064 = vpop.f32.mrb[0].mxu0
    %v4065 = vadd.f32 %v3986, %v4064
    %v4066 = vpop.f32.mrb[0].mxu0
    %4067 = vdwg.mxu0
    %vm4068 = vcmask 269312
    %4069 = vst.msk [vmem:[#allocation2] sm:$0xff] %vm4068, %v4060
    %4070 = vst.msk [vmem:[#allocation2 + $0x8] sm:$0xff] %vm4068, %v4065
    // Predicated region
    $region26: #{tpu_custom_call.1} parent=1 // pred_check
      _
    $region27: #{tpu_custom_call.1} parent=1 // pred_check_branch
      %4072 = sbr.rel (0) target = $region29
    $region28: #{tpu_custom_call.1} parent=1 // pred_region
      %s4074 = ssub.s32 256, 256
      %4075 = vsyncadd [#allocation3], %s4074
      %s4076 = sshll.u32 [#allocation2], 4
      %s4077 = int_to_ptr.vmem [resolvable:$true] %s4076
      %4082 = dma.vmem_to_hbm [thread:$0]  %s4077, 256, %s6, [#allocation3], 128, 128, 8
    $region29: #{tpu_custom_call.1} parent=1 // pred_fallthru
      _
    // Predicated region
    $region30: #{tpu_custom_call.1} parent=1 // pred_check
      _
    $region31: #{tpu_custom_call.1} parent=1 // pred_check_branch
      %4084 = sbr.rel (0) target = $region33
    $region32: #{tpu_custom_call.1} parent=1 // pred_region
      %4085 = dma.done [#allocation3], 256
    $region33: #{tpu_custom_call.1} parent=1 // pred_fallthru
      _
    %4086 = vsyncpa [#allocation3], 1

</llo_original>
